<compile_context>
chip_gen: v7x
topology: tpu7x:2x2x1
jax: 0.10.0
libtpu: 0.0.40
codegen_flags: <defaults>
</compile_context>

<pallas_src>
import functools

import jax
import jax.numpy as jnp
from jax.experimental import pallas as pl
from jax.experimental.pallas import tpu as pltpu

LN_EPS = 1e-5                     # PyTorch nn.LayerNorm default
VMEM_LIMIT = 32 * 1024 * 1024     # explicit scoped-VMEM budget (safe on v5e/v6e/v7x)


def _layernorm_f32(x, w, b):
    """LayerNorm with stats in f32 regardless of input dtype."""
    x = x.astype(jnp.float32)
    mu = jnp.mean(x, axis=-1, keepdims=True)
    xc = x - mu
    var = jnp.mean(xc * xc, axis=-1, keepdims=True)
    inv = jax.lax.rsqrt(var + LN_EPS)
    return xc * inv * w + b


def _tile(n, target):
    """Largest tile <= target that divides n, else the full extent (always legal)."""
    if n >= target and n % target == 0:
        return target
    return n  # full extent always satisfies the (8,128)/full-dim BlockSpec rule


# ---------------------------------------------------------------------------
# Kernel 1: fused LayerNorm + QKV projection (token-tiled).
#   Output qkv (B, N, 3D) bf16; the 1/sqrt(Dh) scale is folded into the q
#   columns of W_qkv / b_qkv by the wrapper.
# ---------------------------------------------------------------------------
def qkv_kernel(x_ref, lnw_ref, lnb_ref, wqkv_ref, bqkv_ref, qkv_ref):
    x = x_ref[0]                                            # (tn, D)
    xn = _layernorm_f32(x, lnw_ref[0], lnb_ref[0]).astype(jnp.bfloat16)
    qkv = jnp.dot(xn, wqkv_ref[...],
                  preferred_element_type=jnp.float32) + bqkv_ref[0]   # (tn, 3D) f32
    qkv_ref[0] = qkv.astype(qkv_ref.dtype)


# ---------------------------------------------------------------------------
# Kernel 2: flash attention (online softmax over kv tiles), heads batched on a
#   leading axis.  q is pre-scaled; output is per-head (B, H, N, Dh) bf16.
# ---------------------------------------------------------------------------
def flash_attn_kernel(q_ref, k_ref, v_ref, o_ref, m_sc, l_sc, acc_sc):
    ki = pl.program_id(2)

    @pl.when(ki == 0)
    def _():
        m_sc[...] = jnp.full(m_sc.shape, -jnp.inf, m_sc.dtype)
        l_sc[...] = jnp.zeros(l_sc.shape, l_sc.dtype)
        acc_sc[...] = jnp.zeros(acc_sc.shape, acc_sc.dtype)

    q = q_ref[0]                                            # (H, tq, Dh) bf16, scaled
    k = k_ref[0]                                            # (H, tk, Dh) bf16
    v = v_ref[0]                                            # (H, tk, Dh) bf16

    # leading-batch matmuls on the MXU, f32 accumulation
    s = jnp.einsum('hqd,hkd->hqk', q, k,
                   preferred_element_type=jnp.float32)      # (H, tq, tk)

    m_prev = m_sc[...]                                      # (H, tq, 1)
    m_new = jnp.maximum(m_prev, jnp.max(s, axis=-1, keepdims=True))
    alpha = jnp.exp(m_prev - m_new)
    p = jnp.exp(s - m_new)                                  # f32
    l_sc[...] = alpha * l_sc[...] + jnp.sum(p, axis=-1, keepdims=True)

    pv = jnp.einsum('hqk,hkd->hqd', p.astype(jnp.bfloat16), v,
                    preferred_element_type=jnp.float32)     # (H, tq, Dh)
    acc_sc[...] = alpha * acc_sc[...] + pv
    m_sc[...] = m_new

    @pl.when(ki == pl.num_programs(2) - 1)
    def _():
        inv_l = pl.reciprocal(l_sc[...], approx=True)
        o_ref[0] = (acc_sc[...] * inv_l).astype(o_ref.dtype)


# ---------------------------------------------------------------------------
# Kernel 3: attention out-projection + residual-1, then LayerNorm-2 + SwiGLU
#   MLP + residual-2, all fused.  The MLP hidden dim is tiled (grid axis 2)
#   with an f32 accumulator; the post-attention activations live in VMEM
#   scratch so they are computed exactly once per token tile.
# ---------------------------------------------------------------------------
def mlp_kernel(x_ref, o_ref, wproj_ref, bproj_ref, g1_ref, lnw_ref, lnb_ref,
               w1a_ref, b1a_ref, w1b_ref, b1b_ref, w2_ref, b2_ref, g2_ref,
               out_ref, x1_sc, xn_sc, acc_sc, *, num_heads):
    hk = pl.program_id(2)

    @pl.when(hk == 0)
    def _():
        x = x_ref[0].astype(jnp.float32)                    # (tn, D)
        # attention output projection as a sum of per-head (tn,Dh)@(Dh,D) dots
        proj = jnp.zeros(x.shape, jnp.float32)
        for h in range(num_heads):
            proj = proj + jnp.dot(o_ref[0, h], wproj_ref[h],
                                  preferred_element_type=jnp.float32)
        proj = proj + bproj_ref[0]
        x1 = x + g1_ref[0] * proj                           # residual 1
        x1_sc[...] = x1
        xn_sc[...] = _layernorm_f32(x1, lnw_ref[0], lnb_ref[0]).astype(jnp.bfloat16)
        acc_sc[...] = jnp.zeros(acc_sc.shape, acc_sc.dtype)

    xn = xn_sc[...]                                         # (tn, D) bf16
    h1 = jnp.dot(xn, w1a_ref[...], preferred_element_type=jnp.float32) + b1a_ref[0]
    h2 = jnp.dot(xn, w1b_ref[...], preferred_element_type=jnp.float32) + b1b_ref[0]
    sw = (jax.nn.silu(h1) * h2).astype(jnp.bfloat16)        # SwiGLU, f32 elementwise
    acc_sc[...] += jnp.dot(sw, w2_ref[...], preferred_element_type=jnp.float32)

    @pl.when(hk == pl.num_programs(2) - 1)
    def _():
        mlp = acc_sc[...] + b2_ref[0]
        out_ref[0] = (x1_sc[...] + g2_ref[0] * mlp).astype(out_ref.dtype)


# ---------------------------------------------------------------------------
# Wrapper
# ---------------------------------------------------------------------------
def tomer_layer(x, coords, params, num_heads):
    """Pallas implementation of TomerLayer.forward (full attention, tome_r=0)."""
    del coords  # full-attention path ignores coords
    B, N, D = x.shape
    H = num_heads
    assert D % H == 0
    Dh = D // H
    Hd = params["w1"].shape[1]
    Hh = Hd // 2
    scale = Dh ** -0.5
    bf16 = jnp.bfloat16

    # fold 1/sqrt(Dh) into the q columns; pre-cast matmul weights to bf16
    wqkv = jnp.concatenate(
        [params["w_qkv"][:, :D] * scale, params["w_qkv"][:, D:]], axis=1).astype(bf16)
    bqkv = jnp.concatenate(
        [params["b_qkv"][:, :D] * scale, params["b_qkv"][:, D:]], axis=1)
    wproj = params["w_proj"].astype(bf16).reshape(H, Dh, D)  # per-head slabs
    w1a = params["w1"][:, :Hh].astype(bf16)   # gate branch
    w1b = params["w1"][:, Hh:].astype(bf16)   # value branch
    b1a = params["b1"][:, :Hh]
    b1b = params["b1"][:, Hh:]
    w2 = params["w2"].astype(bf16)

    tn = _tile(N, 256)     # token tile (qkv / mlp)
    tq = _tile(N, 256)     # query tile
    tk = _tile(N, 256)     # key/value tile
    th = _tile(Hh, 512)    # hidden-dim tile (over Hd/2)

    # ---- kernel 1: qkv = LN1(x) @ Wqkv + b (q pre-scaled) ----
    qkv = pl.pallas_call(
        qkv_kernel,
        out_shape=jax.ShapeDtypeStruct((B, N, 3 * D), bf16),
        grid=(B, N // tn),
        in_specs=[
            pl.BlockSpec((1, tn, D), lambda b, t: (b, t, 0)),
            pl.BlockSpec((1, D), lambda b, t: (0, 0)),
            pl.BlockSpec((1, D), lambda b, t: (0, 0)),
            pl.BlockSpec((D, 3 * D), lambda b, t: (0, 0)),
            pl.BlockSpec((1, 3 * D), lambda b, t: (0, 0)),
        ],
        out_specs=pl.BlockSpec((1, tn, 3 * D), lambda b, t: (b, t, 0)),
        compiler_params=pltpu.CompilerParams(
            dimension_semantics=("parallel", "parallel"),
            vmem_limit_bytes=VMEM_LIMIT),
    )(x, params["ln1_w"], params["ln1_b"], wqkv, bqkv)

    # head split / transpose done by XLA between kernels (cheap, layout-friendly)
    qkv = qkv.reshape(B, N, 3, H, Dh)
    q = jnp.transpose(qkv[:, :, 0], (0, 2, 1, 3))   # (B, H, N, Dh)
    k = jnp.transpose(qkv[:, :, 1], (0, 2, 1, 3))
    v = jnp.transpose(qkv[:, :, 2], (0, 2, 1, 3))

    # ---- kernel 2: per-head flash attention -> o (B, H, N, Dh) ----
    o = pl.pallas_call(
        flash_attn_kernel,
        out_shape=jax.ShapeDtypeStruct((B, H, N, Dh), bf16),
        grid=(B, N // tq, N // tk),
        in_specs=[
            pl.BlockSpec((1, H, tq, Dh), lambda b, qi, ki: (b, 0, qi, 0)),  # q
            pl.BlockSpec((1, H, tk, Dh), lambda b, qi, ki: (b, 0, ki, 0)),  # k
            pl.BlockSpec((1, H, tk, Dh), lambda b, qi, ki: (b, 0, ki, 0)),  # v
        ],
        out_specs=pl.BlockSpec((1, H, tq, Dh), lambda b, qi, ki: (b, 0, qi, 0)),
        scratch_shapes=[
            pltpu.VMEM((H, tq, 1), jnp.float32),    # running max
            pltpu.VMEM((H, tq, 1), jnp.float32),    # running denom
            pltpu.VMEM((H, tq, Dh), jnp.float32),   # running numerator
        ],
        compiler_params=pltpu.CompilerParams(
            dimension_semantics=("parallel", "parallel", "arbitrary"),
            vmem_limit_bytes=VMEM_LIMIT),
    )(q, k, v)

    # TokenMerging with r=0 is identity (metric unused).

    # ---- kernel 3: x = x + g1*Proj(o); x = x + g2*fc2(SwiGLU(fc1(LN2(x)))) ----
    x = pl.pallas_call(
        functools.partial(mlp_kernel, num_heads=H),
        out_shape=jax.ShapeDtypeStruct((B, N, D), x.dtype),
        grid=(B, N // tn, Hh // th),
        in_specs=[
            pl.BlockSpec((1, tn, D), lambda b, t, h: (b, t, 0)),            # x
            pl.BlockSpec((1, H, tn, Dh), lambda b, t, h: (b, 0, t, 0)),     # o
            pl.BlockSpec((H, Dh, D), lambda b, t, h: (0, 0, 0)),            # w_proj
            pl.BlockSpec((1, D), lambda b, t, h: (0, 0)),                   # b_proj
            pl.BlockSpec((1, D), lambda b, t, h: (0, 0)),                   # gamma1
            pl.BlockSpec((1, D), lambda b, t, h: (0, 0)),                   # ln2_w
            pl.BlockSpec((1, D), lambda b, t, h: (0, 0)),                   # ln2_b
            pl.BlockSpec((D, th), lambda b, t, h: (0, h)),                  # w1 gate
            pl.BlockSpec((1, th), lambda b, t, h: (0, h)),
            pl.BlockSpec((D, th), lambda b, t, h: (0, h)),                  # w1 value
            pl.BlockSpec((1, th), lambda b, t, h: (0, h)),
            pl.BlockSpec((th, D), lambda b, t, h: (h, 0)),                  # w2 slab
            pl.BlockSpec((1, D), lambda b, t, h: (0, 0)),                   # b2
            pl.BlockSpec((1, D), lambda b, t, h: (0, 0)),                   # gamma2
        ],
        out_specs=pl.BlockSpec((1, tn, D), lambda b, t, h: (b, t, 0)),
        scratch_shapes=[
            pltpu.VMEM((tn, D), jnp.float32),       # x after attn residual
            pltpu.VMEM((tn, D), jnp.bfloat16),      # LN2(x) in bf16
            pltpu.VMEM((tn, D), jnp.float32),       # MLP accumulator
        ],
        compiler_params=pltpu.CompilerParams(
            dimension_semantics=("parallel", "parallel", "arbitrary"),
            vmem_limit_bytes=VMEM_LIMIT),
    )(x, o, wproj, params["b_proj"], params["gamma1"],
      params["ln2_w"], params["ln2_b"], w1a, b1a, w1b, b1b, w2,
      params["b2"], params["gamma2"])
    return x


# ---------------------------------------------------------------------------
# Parameters / reference / test
# ---------------------------------------------------------------------------
def init_params(key, dim, mlp_ratio=4.0, layer_scale_init_value=1e-6):
    mlp_hidden = int(dim * mlp_ratio * 2)          # fc1 out features
    ks = jax.random.split(key, 8)
    std = 0.02
    return {
        "ln1_w": jnp.ones((1, dim), jnp.float32),
        "ln1_b": jnp.zeros((1, dim), jnp.float32),
        "ln2_w": jnp.ones((1, dim), jnp.float32),
        "ln2_b": jnp.zeros((1, dim), jnp.float32),
        "w_qkv": std * jax.random.normal(ks[0], (dim, 3 * dim), jnp.float32),
        "b_qkv": std * jax.random.normal(ks[1], (1, 3 * dim), jnp.float32),
        "w_proj": std * jax.random.normal(ks[2], (dim, dim), jnp.float32),
        "b_proj": std * jax.random.normal(ks[3], (1, dim), jnp.float32),
        "w1": std * jax.random.normal(ks[4], (dim, mlp_hidden), jnp.float32),
        "b1": std * jax.random.normal(ks[5], (1, mlp_hidden), jnp.float32),
        "w2": std * jax.random.normal(ks[6], (mlp_hidden // 2, dim), jnp.float32),
        "b2": std * jax.random.normal(ks[7], (1, dim), jnp.float32),
        "gamma1": layer_scale_init_value * jnp.ones((1, dim), jnp.float32),
        "gamma2": layer_scale_init_value * jnp.ones((1, dim), jnp.float32),
    }


def reference(x, params, num_heads):
    """Pure-JAX f32 reference of the full-attention / tome_r=0 forward pass."""
    B, N, D = x.shape
    Dh = D // num_heads

    def ln(y, w, b):
        mu = y.mean(-1, keepdims=True)
        var = ((y - mu) ** 2).mean(-1, keepdims=True)
        return (y - mu) * jax.lax.rsqrt(var + LN_EPS) * w + b

    xn = ln(x, params["ln1_w"][0], params["ln1_b"][0])
    qkv = xn @ params["w_qkv"] + params["b_qkv"][0]
    q, k, v = jnp.split(qkv, 3, axis=-1)
    q = q.reshape(B, N, num_heads, Dh).transpose(0, 2, 1, 3)
    k = k.reshape(B, N, num_heads, Dh).transpose(0, 2, 1, 3)
    v = v.reshape(B, N, num_heads, Dh).transpose(0, 2, 1, 3)
    s = (q @ jnp.swapaxes(k, -1, -2)) * (Dh ** -0.5)
    p = jax.nn.softmax(s, axis=-1)
    o = (p @ v).transpose(0, 2, 1, 3).reshape(B, N, D)
    attn = o @ params["w_proj"] + params["b_proj"][0]
    x = x + params["gamma1"][0] * attn

    xn2 = ln(x, params["ln2_w"][0], params["ln2_b"][0])
    h = xn2 @ params["w1"] + params["b1"][0]
    h1, h2 = jnp.split(h, 2, axis=-1)
    m = (jax.nn.silu(h1) * h2) @ params["w2"] + params["b2"][0]
    return x + params["gamma2"][0] * m


if __name__ == "__main__":
    B, N, dim, num_heads = 2, 8, 32, 4

    key = jax.random.PRNGKey(0)
    kx, kc, kp = jax.random.split(key, 3)
    x = jax.random.normal(kx, (B, N, dim), jnp.float32)
    coords = jax.random.normal(kc, (B, N, 3), jnp.float32)
    # layer_scale=1.0 so the attn/MLP branches are numerically significant in the check
    params = init_params(kp, dim, layer_scale_init_value=1.0)

    fwd = jax.jit(functools.partial(tomer_layer, num_heads=num_heads))
    out = fwd(x, coords, params)
    jax.block_until_ready(out)

    assert out.shape == (B, N, dim) and out.dtype == jnp.float32
    ref = reference(x, params, num_heads)
    max_err = float(jnp.max(jnp.abs(out - ref)))
    assert max_err < 2e-2, f"max abs error {max_err}"
    print("KERNEL_OK")
</pallas_src>

<mosaic_0001>
module attributes {stable_mosaic.version = 11 : i64} {
  func.func @flash_attn_kernel(%arg0: i32, %arg1: i32, %arg2: i32, %arg3: memref<1x4x8x8xbf16, #tpu.memory_space<vmem>>, %arg4: memref<1x4x8x8xbf16, #tpu.memory_space<vmem>>, %arg5: memref<1x4x8x8xbf16, #tpu.memory_space<vmem>>, %arg6: memref<1x4x8x8xbf16, #tpu.memory_space<vmem>>, %arg7: memref<4x8x1xf32, #tpu.memory_space<vmem>>, %arg8: memref<4x8x1xf32, #tpu.memory_space<vmem>>, %arg9: memref<4x8x8xf32, #tpu.memory_space<vmem>>) attributes {dimension_semantics = [#tpu.dimension_semantics<parallel>, #tpu.dimension_semantics<parallel>, #tpu.dimension_semantics<arbitrary>], iteration_bounds = array<i64: 2, 1, 1>, scalar_prefetch = 0 : i64, scratch_operands = 3 : i64, tpu.core_type = #tpu.core_type<tc>, window_params = [{transform_indices = @transform_0, window_bounds = array<i64: 1, 4, 8, 8>}, {transform_indices = @transform_1, window_bounds = array<i64: 1, 4, 8, 8>}, {transform_indices = @transform_2, window_bounds = array<i64: 1, 4, 8, 8>}, {transform_indices = @transform_3, window_bounds = array<i64: 1, 4, 8, 8>}]} {
    %c0_i32 = arith.constant 0 : i32
    %0 = arith.cmpi eq, %arg2, %c0_i32 : i32
    %1 = arith.extui %0 : i1 to i32
    %c0_i32_0 = arith.constant 0 : i32
    %2 = arith.cmpi ne, %1, %c0_i32_0 : i32
    scf.if %2 {
      %cst_35 = arith.constant 0xFF800000 : f32
      %36 = vector.broadcast %cst_35 : f32 to vector<4x8x1xf32>
      %c0_36 = arith.constant 0 : index
      %c0_37 = arith.constant 0 : index
      %c0_38 = arith.constant 0 : index
      %37 = vector.load %arg7[%c0_36, %c0_37, %c0_38] : memref<4x8x1xf32, #tpu.memory_space<vmem>>, vector<4x8x1xf32>
      tpu.vector_store %arg7[%c0_36, %c0_37, %c0_38], %36 {strides = array<i32>} : memref<4x8x1xf32, #tpu.memory_space<vmem>>, vector<4x8x1xf32>,
      %cst_39 = arith.constant 0.000000e+00 : f32
      %38 = vector.broadcast %cst_39 : f32 to vector<4x8x1xf32>
      %c0_40 = arith.constant 0 : index
      %c0_41 = arith.constant 0 : index
      %c0_42 = arith.constant 0 : index
      %39 = vector.load %arg8[%c0_40, %c0_41, %c0_42] : memref<4x8x1xf32, #tpu.memory_space<vmem>>, vector<4x8x1xf32>
      tpu.vector_store %arg8[%c0_40, %c0_41, %c0_42], %38 {strides = array<i32>} : memref<4x8x1xf32, #tpu.memory_space<vmem>>, vector<4x8x1xf32>,
      %cst_43 = arith.constant 0.000000e+00 : f32
      %40 = vector.broadcast %cst_43 : f32 to vector<4x8x8xf32>
      %c0_44 = arith.constant 0 : index
      %c0_45 = arith.constant 0 : index
      %c0_46 = arith.constant 0 : index
      %41 = vector.load %arg9[%c0_44, %c0_45, %c0_46] : memref<4x8x8xf32, #tpu.memory_space<vmem>>, vector<4x8x8xf32>
      tpu.vector_store %arg9[%c0_44, %c0_45, %c0_46], %40 {strides = array<i32>} : memref<4x8x8xf32, #tpu.memory_space<vmem>>, vector<4x8x8xf32>,
    } else {
    }
    %c0 = arith.constant 0 : index
    %c0_1 = arith.constant 0 : index
    %c0_2 = arith.constant 0 : index
    %c0_3 = arith.constant 0 : index
    %3 = vector.load %arg3[%c0, %c0_1, %c0_2, %c0_3] : memref<1x4x8x8xbf16, #tpu.memory_space<vmem>>, vector<1x4x8x8xbf16>
    %4 = vector.shape_cast %3 : vector<1x4x8x8xbf16> to vector<4x8x8xbf16>
    %c0_4 = arith.constant 0 : index
    %c0_5 = arith.constant 0 : index
    %c0_6 = arith.constant 0 : index
    %c0_7 = arith.constant 0 : index
    %5 = vector.load %arg4[%c0_4, %c0_5, %c0_6, %c0_7] : memref<1x4x8x8xbf16, #tpu.memory_space<vmem>>, vector<1x4x8x8xbf16>
    %6 = vector.shape_cast %5 : vector<1x4x8x8xbf16> to vector<4x8x8xbf16>
    %c0_8 = arith.constant 0 : index
    %c0_9 = arith.constant 0 : index
    %c0_10 = arith.constant 0 : index
    %c0_11 = arith.constant 0 : index
    %7 = vector.load %arg5[%c0_8, %c0_9, %c0_10, %c0_11] : memref<1x4x8x8xbf16, #tpu.memory_space<vmem>>, vector<1x4x8x8xbf16>
    %8 = vector.shape_cast %7 : vector<1x4x8x8xbf16> to vector<4x8x8xbf16>
    "tpu.trace_start"() <{level = 10 : i32, message = "hqd,hkd->hqk"}> : () -> ()
    %cst = arith.constant dense<0.000000e+00> : vector<4x8x8xf32>
    %9 = tpu.matmul %4, %6, %cst {dimension_numbers = #tpu.dot_dimension_numbers<[2], [2], [1], [1], [0, 0, 0, 1, 1, 1], [0], [0]>} : vector<4x8x8xbf16>, vector<4x8x8xbf16>, vector<4x8x8xf32> -> vector<4x8x8xf32>
    "tpu.trace_stop"() : () -> ()
    %c0_12 = arith.constant 0 : index
    %c0_13 = arith.constant 0 : index
    %c0_14 = arith.constant 0 : index
    %10 = vector.load %arg7[%c0_12, %c0_13, %c0_14] : memref<4x8x1xf32, #tpu.memory_space<vmem>>, vector<4x8x1xf32>
    %cst_15 = arith.constant dense<0xFF800000> : vector<4x8xf32>
    %11 = vector.multi_reduction <maximumf>, %9, %cst_15 [2] : vector<4x8x8xf32> to vector<4x8xf32>
    %12 = vector.shape_cast %11 : vector<4x8xf32> to vector<4x8x1xf32>
    %13 = arith.maximumf %10, %12 : vector<4x8x1xf32>
    %14 = arith.subf %10, %13 : vector<4x8x1xf32>
    %15 = math.exp %14 : vector<4x8x1xf32>
    %16 = vector.broadcast %13 : vector<4x8x1xf32> to vector<4x8x8xf32>
    %17 = arith.subf %9, %16 : vector<4x8x8xf32>
    %18 = math.exp %17 : vector<4x8x8xf32>
    %c0_16 = arith.constant 0 : index
    %c0_17 = arith.constant 0 : index
    %c0_18 = arith.constant 0 : index
    %19 = vector.load %arg8[%c0_16, %c0_17, %c0_18] : memref<4x8x1xf32, #tpu.memory_space<vmem>>, vector<4x8x1xf32>
    %20 = arith.mulf %15, %19 : vector<4x8x1xf32>
    %cst_19 = arith.constant dense<0.000000e+00> : vector<4x8xf32>
    %21 = vector.multi_reduction <add>, %18, %cst_19 [2] : vector<4x8x8xf32> to vector<4x8xf32>
    %22 = vector.shape_cast %21 : vector<4x8xf32> to vector<4x8x1xf32>
    %23 = arith.addf %20, %22 : vector<4x8x1xf32>
    %c0_20 = arith.constant 0 : index
    %c0_21 = arith.constant 0 : index
    %c0_22 = arith.constant 0 : index
    %24 = vector.load %arg8[%c0_20, %c0_21, %c0_22] : memref<4x8x1xf32, #tpu.memory_space<vmem>>, vector<4x8x1xf32>
    tpu.vector_store %arg8[%c0_20, %c0_21, %c0_22], %23 {strides = array<i32>} : memref<4x8x1xf32, #tpu.memory_space<vmem>>, vector<4x8x1xf32>,
    %25 = arith.truncf %18 : vector<4x8x8xf32> to vector<4x8x8xbf16>
    "tpu.trace_start"() <{level = 10 : i32, message = "hqk,hkd->hqd"}> : () -> ()
    %cst_23 = arith.constant dense<0.000000e+00> : vector<4x8x8xf32>
    %26 = tpu.matmul %25, %8, %cst_23 {dimension_numbers = #tpu.dot_dimension_numbers<[2], [1], [1], [2], [0, 0, 0, 1, 1, 2], [0], [0]>} : vector<4x8x8xbf16>, vector<4x8x8xbf16>, vector<4x8x8xf32> -> vector<4x8x8xf32>
    "tpu.trace_stop"() : () -> ()
    %c0_24 = arith.constant 0 : index
    %c0_25 = arith.constant 0 : index
    %c0_26 = arith.constant 0 : index
    %27 = vector.load %arg9[%c0_24, %c0_25, %c0_26] : memref<4x8x8xf32, #tpu.memory_space<vmem>>, vector<4x8x8xf32>
    %28 = vector.broadcast %15 : vector<4x8x1xf32> to vector<4x8x8xf32>
    %29 = arith.mulf %28, %27 : vector<4x8x8xf32>
    %30 = arith.addf %29, %26 : vector<4x8x8xf32>
    %c0_27 = arith.constant 0 : index
    %c0_28 = arith.constant 0 : index
    %c0_29 = arith.constant 0 : index
    %31 = vector.load %arg9[%c0_27, %c0_28, %c0_29] : memref<4x8x8xf32, #tpu.memory_space<vmem>>, vector<4x8x8xf32>
    tpu.vector_store %arg9[%c0_27, %c0_28, %c0_29], %30 {strides = array<i32>} : memref<4x8x8xf32, #tpu.memory_space<vmem>>, vector<4x8x8xf32>,
    %c0_30 = arith.constant 0 : index
    %c0_31 = arith.constant 0 : index
    %c0_32 = arith.constant 0 : index
    %32 = vector.load %arg7[%c0_30, %c0_31, %c0_32] : memref<4x8x1xf32, #tpu.memory_space<vmem>>, vector<4x8x1xf32>
    tpu.vector_store %arg7[%c0_30, %c0_31, %c0_32], %13 {strides = array<i32>} : memref<4x8x1xf32, #tpu.memory_space<vmem>>, vector<4x8x1xf32>,
    %c0_i32_33 = arith.constant 0 : i32
    %33 = arith.cmpi eq, %arg2, %c0_i32_33 : i32
    %34 = arith.extui %33 : i1 to i32
    %c0_i32_34 = arith.constant 0 : i32
    %35 = arith.cmpi ne, %34, %c0_i32_34 : i32
    scf.if %35 {
      %c0_35 = arith.constant 0 : index
      %c0_36 = arith.constant 0 : index
      %c0_37 = arith.constant 0 : index
      %36 = vector.load %arg8[%c0_35, %c0_36, %c0_37] : memref<4x8x1xf32, #tpu.memory_space<vmem>>, vector<4x8x1xf32>
      %37 = tpu.reciprocal %36 {approx = true} : vector<4x8x1xf32> -> vector<4x8x1xf32>
      %c0_38 = arith.constant 0 : index
      %c0_39 = arith.constant 0 : index
      %c0_40 = arith.constant 0 : index
      %38 = vector.load %arg9[%c0_38, %c0_39, %c0_40] : memref<4x8x8xf32, #tpu.memory_space<vmem>>, vector<4x8x8xf32>
      %39 = vector.broadcast %37 : vector<4x8x1xf32> to vector<4x8x8xf32>
      %40 = arith.mulf %38, %39 : vector<4x8x8xf32>
      %41 = arith.truncf %40 : vector<4x8x8xf32> to vector<4x8x8xbf16>
      %c0_41 = arith.constant 0 : index
      %c0_42 = arith.constant 0 : index
      %c0_43 = arith.constant 0 : index
      %c0_44 = arith.constant 0 : index
      %42 = vector.load %arg6[%c0_41, %c0_42, %c0_43, %c0_44] : memref<1x4x8x8xbf16, #tpu.memory_space<vmem>>, vector<1x4x8x8xbf16>
      %43 = vector.shape_cast %42 : vector<1x4x8x8xbf16> to vector<4x8x8xbf16>
      %44 = vector.shape_cast %41 : vector<4x8x8xbf16> to vector<1x4x8x8xbf16>
      tpu.vector_store %arg6[%c0_41, %c0_42, %c0_43, %c0_44], %44 {strides = array<i32>} : memref<1x4x8x8xbf16, #tpu.memory_space<vmem>>, vector<1x4x8x8xbf16>,
    } else {
    }
    return
  }
  func.func @transform_0(%arg0: i32, %arg1: i32, %arg2: i32) -> (i32, i32, i32, i32) {
    %c0_i32 = arith.constant 0 : i32
    %c0_i32_0 = arith.constant 0 : i32
    %c0_i32_1 = arith.constant 0 : i32
    return %arg0, %c0_i32, %arg1, %c0_i32_0 : i32, i32, i32, i32
  }
  func.func @transform_1(%arg0: i32, %arg1: i32, %arg2: i32) -> (i32, i32, i32, i32) {
    %c0_i32 = arith.constant 0 : i32
    %c0_i32_0 = arith.constant 0 : i32
    %c0_i32_1 = arith.constant 0 : i32
    return %arg0, %c0_i32, %arg2, %c0_i32_0 : i32, i32, i32, i32
  }
  func.func @transform_2(%arg0: i32, %arg1: i32, %arg2: i32) -> (i32, i32, i32, i32) {
    %c0_i32 = arith.constant 0 : i32
    %c0_i32_0 = arith.constant 0 : i32
    %c0_i32_1 = arith.constant 0 : i32
    return %arg0, %c0_i32, %arg2, %c0_i32_0 : i32, i32, i32, i32
  }
  func.func @transform_3(%arg0: i32, %arg1: i32, %arg2: i32) -> (i32, i32, i32, i32) {
    %c0_i32 = arith.constant 0 : i32
    %c0_i32_0 = arith.constant 0 : i32
    %c0_i32_1 = arith.constant 0 : i32
    return %arg0, %c0_i32, %arg1, %c0_i32_0 : i32, i32, i32, i32
  }
}

module attributes {stable_mosaic.version = 11 : i64} {
  func.func @qkv_kernel(%arg0: i32, %arg1: i32, %arg2: memref<1x8x32xf32, #tpu.memory_space<vmem>>, %arg3: memref<1x32xf32, #tpu.memory_space<vmem>>, %arg4: memref<1x32xf32, #tpu.memory_space<vmem>>, %arg5: memref<32x96xbf16, #tpu.memory_space<vmem>>, %arg6: memref<1x96xf32, #tpu.memory_space<vmem>>, %arg7: memref<1x8x96xbf16, #tpu.memory_space<vmem>>) attributes {dimension_semantics = [#tpu.dimension_semantics<parallel>, #tpu.dimension_semantics<parallel>], iteration_bounds = array<i64: 2, 1>, scalar_prefetch = 0 : i64, scratch_operands = 0 : i64, tpu.core_type = #tpu.core_type<tc>, window_params = [{transform_indices = @transform_0, window_bounds = array<i64: 1, 8, 32>}, {pipeline_mode = #tpu.pipeline_mode<synchronous>, transform_indices = @transform_1, window_bounds = array<i64: 1, 32>}, {pipeline_mode = #tpu.pipeline_mode<synchronous>, transform_indices = @transform_2, window_bounds = array<i64: 1, 32>}, {pipeline_mode = #tpu.pipeline_mode<synchronous>, transform_indices = @transform_3, window_bounds = array<i64: 32, 96>}, {pipeline_mode = #tpu.pipeline_mode<synchronous>, transform_indices = @transform_4, window_bounds = array<i64: 1, 96>}, {transform_indices = @transform_5, window_bounds = array<i64: 1, 8, 96>}]} {
    %c0 = arith.constant 0 : index
    %c0_0 = arith.constant 0 : index
    %c0_1 = arith.constant 0 : index
    %0 = vector.load %arg2[%c0, %c0_0, %c0_1] : memref<1x8x32xf32, #tpu.memory_space<vmem>>, vector<1x8x32xf32>
    %1 = vector.shape_cast %0 : vector<1x8x32xf32> to vector<8x32xf32>
    %c0_2 = arith.constant 0 : index
    %c0_3 = arith.constant 0 : index
    %2 = vector.load %arg3[%c0_2, %c0_3] : memref<1x32xf32, #tpu.memory_space<vmem>>, vector<1x32xf32>
    %3 = vector.shape_cast %2 : vector<1x32xf32> to vector<32xf32>
    %c0_4 = arith.constant 0 : index
    %c0_5 = arith.constant 0 : index
    %4 = vector.load %arg4[%c0_4, %c0_5] : memref<1x32xf32, #tpu.memory_space<vmem>>, vector<1x32xf32>
    %5 = vector.shape_cast %4 : vector<1x32xf32> to vector<32xf32>
    %cst = arith.constant dense<0.000000e+00> : vector<8xf32>
    %6 = vector.multi_reduction <add>, %1, %cst [1] : vector<8x32xf32> to vector<8xf32>
    %7 = vector.shape_cast %6 : vector<8xf32> to vector<8x1xf32>
    %cst_6 = arith.constant 3.200000e+01 : f32
    %8 = vector.broadcast %cst_6 : f32 to vector<8x1xf32>
    %9 = arith.divf %7, %8 : vector<8x1xf32>
    %10 = vector.broadcast %9 : vector<8x1xf32> to vector<8x32xf32>
    %11 = arith.subf %1, %10 : vector<8x32xf32>
    %12 = arith.mulf %11, %11 : vector<8x32xf32>
    %cst_7 = arith.constant dense<0.000000e+00> : vector<8xf32>
    %13 = vector.multi_reduction <add>, %12, %cst_7 [1] : vector<8x32xf32> to vector<8xf32>
    %14 = vector.shape_cast %13 : vector<8xf32> to vector<8x1xf32>
    %cst_8 = arith.constant 3.200000e+01 : f32
    %15 = vector.broadcast %cst_8 : f32 to vector<8x1xf32>
    %16 = arith.divf %14, %15 : vector<8x1xf32>
    %cst_9 = arith.constant 9.99999974E-6 : f32
    %17 = vector.broadcast %cst_9 : f32 to vector<8x1xf32>
    %18 = arith.addf %16, %17 : vector<8x1xf32>
    %19 = math.rsqrt %18 : vector<8x1xf32>
    %20 = vector.broadcast %19 : vector<8x1xf32> to vector<8x32xf32>
    %21 = arith.mulf %11, %20 : vector<8x32xf32>
    %22 = vector.shape_cast %3 : vector<32xf32> to vector<1x32xf32>
    %23 = vector.broadcast %22 : vector<1x32xf32> to vector<8x32xf32>
    %24 = arith.mulf %21, %23 : vector<8x32xf32>
    %25 = vector.shape_cast %5 : vector<32xf32> to vector<1x32xf32>
    %26 = vector.broadcast %25 : vector<1x32xf32> to vector<8x32xf32>
    %27 = arith.addf %24, %26 : vector<8x32xf32>
    %28 = arith.truncf %27 : vector<8x32xf32> to vector<8x32xbf16>
    %c0_10 = arith.constant 0 : index
    %c0_11 = arith.constant 0 : index
    %29 = vector.load %arg5[%c0_10, %c0_11] : memref<32x96xbf16, #tpu.memory_space<vmem>>, vector<32x96xbf16>
    %cst_12 = arith.constant dense<0.000000e+00> : vector<8x96xf32>
    %30 = tpu.matmul %28, %29, %cst_12 {dimension_numbers = #tpu.dot_dimension_numbers<[1], [0], [0], [1], [0, 0, 1, 1], [], []>} : vector<8x32xbf16>, vector<32x96xbf16>, vector<8x96xf32> -> vector<8x96xf32>
    %c0_13 = arith.constant 0 : index
    %c0_14 = arith.constant 0 : index
    %31 = vector.load %arg6[%c0_13, %c0_14] : memref<1x96xf32, #tpu.memory_space<vmem>>, vector<1x96xf32>
    %32 = vector.shape_cast %31 : vector<1x96xf32> to vector<96xf32>
    %33 = vector.shape_cast %32 : vector<96xf32> to vector<1x96xf32>
    %34 = vector.broadcast %33 : vector<1x96xf32> to vector<8x96xf32>
    %35 = arith.addf %30, %34 : vector<8x96xf32>
    %36 = arith.truncf %35 : vector<8x96xf32> to vector<8x96xbf16>
    %c0_15 = arith.constant 0 : index
    %c0_16 = arith.constant 0 : index
    %c0_17 = arith.constant 0 : index
    %37 = vector.load %arg7[%c0_15, %c0_16, %c0_17] : memref<1x8x96xbf16, #tpu.memory_space<vmem>>, vector<1x8x96xbf16>
    %38 = vector.shape_cast %37 : vector<1x8x96xbf16> to vector<8x96xbf16>
    %39 = vector.shape_cast %36 : vector<8x96xbf16> to vector<1x8x96xbf16>
    tpu.vector_store %arg7[%c0_15, %c0_16, %c0_17], %39 {strides = array<i32>} : memref<1x8x96xbf16, #tpu.memory_space<vmem>>, vector<1x8x96xbf16>,
    return
  }
  func.func @transform_0(%arg0: i32, %arg1: i32) -> (i32, i32, i32) {
    %c0_i32 = arith.constant 0 : i32
    %c0_i32_0 = arith.constant 0 : i32
    return %arg0, %arg1, %c0_i32 : i32, i32, i32
  }
  func.func @transform_1(%arg0: i32, %arg1: i32) -> (i32, i32) {
    %c0_i32 = arith.constant 0 : i32
    %c0_i32_0 = arith.constant 0 : i32
    %c0_i32_1 = arith.constant 0 : i32
    return %c0_i32, %c0_i32_0 : i32, i32
  }
  func.func @transform_2(%arg0: i32, %arg1: i32) -> (i32, i32) {
    %c0_i32 = arith.constant 0 : i32
    %c0_i32_0 = arith.constant 0 : i32
    %c0_i32_1 = arith.constant 0 : i32
    return %c0_i32, %c0_i32_0 : i32, i32
  }
  func.func @transform_3(%arg0: i32, %arg1: i32) -> (i32, i32) {
    %c0_i32 = arith.constant 0 : i32
    %c0_i32_0 = arith.constant 0 : i32
    %c0_i32_1 = arith.constant 0 : i32
    return %c0_i32, %c0_i32_0 : i32, i32
  }
  func.func @transform_4(%arg0: i32, %arg1: i32) -> (i32, i32) {
    %c0_i32 = arith.constant 0 : i32
    %c0_i32_0 = arith.constant 0 : i32
    %c0_i32_1 = arith.constant 0 : i32
    return %c0_i32, %c0_i32_0 : i32, i32
  }
  func.func @transform_5(%arg0: i32, %arg1: i32) -> (i32, i32, i32) {
    %c0_i32 = arith.constant 0 : i32
    %c0_i32_0 = arith.constant 0 : i32
    return %arg0, %arg1, %c0_i32 : i32, i32, i32
  }
}

module attributes {stable_mosaic.version = 11 : i64} {
  func.func @mlp_kernel(%arg0: i32, %arg1: i32, %arg2: i32, %arg3: memref<1x8x32xf32, #tpu.memory_space<vmem>>, %arg4: memref<1x4x8x8xbf16, #tpu.memory_space<vmem>>, %arg5: memref<4x8x32xbf16, #tpu.memory_space<vmem>>, %arg6: memref<1x32xf32, #tpu.memory_space<vmem>>, %arg7: memref<1x32xf32, #tpu.memory_space<vmem>>, %arg8: memref<1x32xf32, #tpu.memory_space<vmem>>, %arg9: memref<1x32xf32, #tpu.memory_space<vmem>>, %arg10: memref<32x128xbf16, #tpu.memory_space<vmem>>, %arg11: memref<1x128xf32, #tpu.memory_space<vmem>>, %arg12: memref<32x128xbf16, #tpu.memory_space<vmem>>, %arg13: memref<1x128xf32, #tpu.memory_space<vmem>>, %arg14: memref<128x32xbf16, #tpu.memory_space<vmem>>, %arg15: memref<1x32xf32, #tpu.memory_space<vmem>>, %arg16: memref<1x32xf32, #tpu.memory_space<vmem>>, %arg17: memref<1x8x32xf32, #tpu.memory_space<vmem>>, %arg18: memref<8x32xf32, #tpu.memory_space<vmem>>, %arg19: memref<8x32xbf16, #tpu.memory_space<vmem>>, %arg20: memref<8x32xf32, #tpu.memory_space<vmem>>) attributes {dimension_semantics = [#tpu.dimension_semantics<parallel>, #tpu.dimension_semantics<parallel>, #tpu.dimension_semantics<arbitrary>], iteration_bounds = array<i64: 2, 1, 1>, scalar_prefetch = 0 : i64, scratch_operands = 3 : i64, tpu.core_type = #tpu.core_type<tc>, window_params = [{transform_indices = @transform_0, window_bounds = array<i64: 1, 8, 32>}, {transform_indices = @transform_1, window_bounds = array<i64: 1, 4, 8, 8>}, {pipeline_mode = #tpu.pipeline_mode<synchronous>, transform_indices = @transform_2, window_bounds = array<i64: 4, 8, 32>}, {pipeline_mode = #tpu.pipeline_mode<synchronous>, transform_indices = @transform_3, window_bounds = array<i64: 1, 32>}, {pipeline_mode = #tpu.pipeline_mode<synchronous>, transform_indices = @transform_4, window_bounds = array<i64: 1, 32>}, {pipeline_mode = #tpu.pipeline_mode<synchronous>, transform_indices = @transform_5, window_bounds = array<i64: 1, 32>}, {pipeline_mode = #tpu.pipeline_mode<synchronous>, transform_indices = @transform_6, window_bounds = array<i64: 1, 32>}, {transform_indices = @transform_7, window_bounds = array<i64: 32, 128>}, {transform_indices = @transform_8, window_bounds = array<i64: 1, 128>}, {transform_indices = @transform_9, window_bounds = array<i64: 32, 128>}, {transform_indices = @transform_10, window_bounds = array<i64: 1, 128>}, {transform_indices = @transform_11, window_bounds = array<i64: 128, 32>}, {pipeline_mode = #tpu.pipeline_mode<synchronous>, transform_indices = @transform_12, window_bounds = array<i64: 1, 32>}, {pipeline_mode = #tpu.pipeline_mode<synchronous>, transform_indices = @transform_13, window_bounds = array<i64: 1, 32>}, {transform_indices = @transform_14, window_bounds = array<i64: 1, 8, 32>}]} {
    %c0_i32 = arith.constant 0 : i32
    %0 = arith.cmpi eq, %arg2, %c0_i32 : i32
    %1 = arith.extui %0 : i1 to i32
    %c0_i32_0 = arith.constant 0 : i32
    %2 = arith.cmpi ne, %1, %c0_i32_0 : i32
    scf.if %2 {
      %c0_21 = arith.constant 0 : index
      %c0_22 = arith.constant 0 : index
      %c0_23 = arith.constant 0 : index
      %34 = vector.load %arg3[%c0_21, %c0_22, %c0_23] : memref<1x8x32xf32, #tpu.memory_space<vmem>>, vector<1x8x32xf32>
      %35 = vector.shape_cast %34 : vector<1x8x32xf32> to vector<8x32xf32>
      %cst_24 = arith.constant 0.000000e+00 : f32
      %36 = vector.broadcast %cst_24 : f32 to vector<8x32xf32>
      %c0_25 = arith.constant 0 : index
      %c0_26 = arith.constant 0 : index
      %c0_27 = arith.constant 0 : index
      %c0_28 = arith.constant 0 : index
      %37 = vector.load %arg4[%c0_25, %c0_26, %c0_27, %c0_28] : memref<1x4x8x8xbf16, #tpu.memory_space<vmem>>, vector<1x1x8x8xbf16>
      %38 = vector.shape_cast %37 : vector<1x1x8x8xbf16> to vector<8x8xbf16>
      %c0_29 = arith.constant 0 : index
      %c0_30 = arith.constant 0 : index
      %c0_31 = arith.constant 0 : index
      %39 = vector.load %arg5[%c0_29, %c0_30, %c0_31] : memref<4x8x32xbf16, #tpu.memory_space<vmem>>, vector<1x8x32xbf16>
      %40 = vector.shape_cast %39 : vector<1x8x32xbf16> to vector<8x32xbf16>
      %cst_32 = arith.constant dense<0.000000e+00> : vector<8x32xf32>
      %41 = tpu.matmul %38, %40, %cst_32 {dimension_numbers = #tpu.dot_dimension_numbers<[1], [0], [0], [1], [0, 0, 1, 1], [], []>} : vector<8x8xbf16>, vector<8x32xbf16>, vector<8x32xf32> -> vector<8x32xf32>
      %42 = arith.addf %36, %41 : vector<8x32xf32>
      %c0_33 = arith.constant 0 : index
      %c1 = arith.constant 1 : index
      %c0_34 = arith.constant 0 : index
      %c0_35 = arith.constant 0 : index
      %43 = vector.load %arg4[%c0_33, %c1, %c0_34, %c0_35] : memref<1x4x8x8xbf16, #tpu.memory_space<vmem>>, vector<1x1x8x8xbf16>
      %44 = vector.shape_cast %43 : vector<1x1x8x8xbf16> to vector<8x8xbf16>
      %c1_36 = arith.constant 1 : index
      %c0_37 = arith.constant 0 : index
      %c0_38 = arith.constant 0 : index
      %45 = vector.load %arg5[%c1_36, %c0_37, %c0_38] : memref<4x8x32xbf16, #tpu.memory_space<vmem>>, vector<1x8x32xbf16>
      %46 = vector.shape_cast %45 : vector<1x8x32xbf16> to vector<8x32xbf16>
      %cst_39 = arith.constant dense<0.000000e+00> : vector<8x32xf32>
      %47 = tpu.matmul %44, %46, %cst_39 {dimension_numbers = #tpu.dot_dimension_numbers<[1], [0], [0], [1], [0, 0, 1, 1], [], []>} : vector<8x8xbf16>, vector<8x32xbf16>, vector<8x32xf32> -> vector<8x32xf32>
      %48 = arith.addf %42, %47 : vector<8x32xf32>
      %c0_40 = arith.constant 0 : index
      %c2 = arith.constant 2 : index
      %c0_41 = arith.constant 0 : index
      %c0_42 = arith.constant 0 : index
      %49 = vector.load %arg4[%c0_40, %c2, %c0_41, %c0_42] : memref<1x4x8x8xbf16, #tpu.memory_space<vmem>>, vector<1x1x8x8xbf16>
      %50 = vector.shape_cast %49 : vector<1x1x8x8xbf16> to vector<8x8xbf16>
      %c2_43 = arith.constant 2 : index
      %c0_44 = arith.constant 0 : index
      %c0_45 = arith.constant 0 : index
      %51 = vector.load %arg5[%c2_43, %c0_44, %c0_45] : memref<4x8x32xbf16, #tpu.memory_space<vmem>>, vector<1x8x32xbf16>
      %52 = vector.shape_cast %51 : vector<1x8x32xbf16> to vector<8x32xbf16>
      %cst_46 = arith.constant dense<0.000000e+00> : vector<8x32xf32>
      %53 = tpu.matmul %50, %52, %cst_46 {dimension_numbers = #tpu.dot_dimension_numbers<[1], [0], [0], [1], [0, 0, 1, 1], [], []>} : vector<8x8xbf16>, vector<8x32xbf16>, vector<8x32xf32> -> vector<8x32xf32>
      %54 = arith.addf %48, %53 : vector<8x32xf32>
      %c0_47 = arith.constant 0 : index
      %c3 = arith.constant 3 : index
      %c0_48 = arith.constant 0 : index
      %c0_49 = arith.constant 0 : index
      %55 = vector.load %arg4[%c0_47, %c3, %c0_48, %c0_49] : memref<1x4x8x8xbf16, #tpu.memory_space<vmem>>, vector<1x1x8x8xbf16>
      %56 = vector.shape_cast %55 : vector<1x1x8x8xbf16> to vector<8x8xbf16>
      %c3_50 = arith.constant 3 : index
      %c0_51 = arith.constant 0 : index
      %c0_52 = arith.constant 0 : index
      %57 = vector.load %arg5[%c3_50, %c0_51, %c0_52] : memref<4x8x32xbf16, #tpu.memory_space<vmem>>, vector<1x8x32xbf16>
      %58 = vector.shape_cast %57 : vector<1x8x32xbf16> to vector<8x32xbf16>
      %cst_53 = arith.constant dense<0.000000e+00> : vector<8x32xf32>
      %59 = tpu.matmul %56, %58, %cst_53 {dimension_numbers = #tpu.dot_dimension_numbers<[1], [0], [0], [1], [0, 0, 1, 1], [], []>} : vector<8x8xbf16>, vector<8x32xbf16>, vector<8x32xf32> -> vector<8x32xf32>
      %60 = arith.addf %54, %59 : vector<8x32xf32>
      %c0_54 = arith.constant 0 : index
      %c0_55 = arith.constant 0 : index
      %61 = vector.load %arg6[%c0_54, %c0_55] : memref<1x32xf32, #tpu.memory_space<vmem>>, vector<1x32xf32>
      %62 = vector.shape_cast %61 : vector<1x32xf32> to vector<32xf32>
      %63 = vector.shape_cast %62 : vector<32xf32> to vector<1x32xf32>
      %64 = vector.broadcast %63 : vector<1x32xf32> to vector<8x32xf32>
      %65 = arith.addf %60, %64 : vector<8x32xf32>
      %c0_56 = arith.constant 0 : index
      %c0_57 = arith.constant 0 : index
      %66 = vector.load %arg7[%c0_56, %c0_57] : memref<1x32xf32, #tpu.memory_space<vmem>>, vector<1x32xf32>
      %67 = vector.shape_cast %66 : vector<1x32xf32> to vector<32xf32>
      %68 = vector.shape_cast %67 : vector<32xf32> to vector<1x32xf32>
      %69 = vector.broadcast %68 : vector<1x32xf32> to vector<8x32xf32>
      %70 = arith.mulf %69, %65 : vector<8x32xf32>
      %71 = arith.addf %35, %70 : vector<8x32xf32>
      %c0_58 = arith.constant 0 : index
      %c0_59 = arith.constant 0 : index
      %72 = vector.load %arg18[%c0_58, %c0_59] : memref<8x32xf32, #tpu.memory_space<vmem>>, vector<8x32xf32>
      tpu.vector_store %arg18[%c0_58, %c0_59], %71 {strides = array<i32>} : memref<8x32xf32, #tpu.memory_space<vmem>>, vector<8x32xf32>,
      %c0_60 = arith.constant 0 : index
      %c0_61 = arith.constant 0 : index
      %73 = vector.load %arg8[%c0_60, %c0_61] : memref<1x32xf32, #tpu.memory_space<vmem>>, vector<1x32xf32>
      %74 = vector.shape_cast %73 : vector<1x32xf32> to vector<32xf32>
      %c0_62 = arith.constant 0 : index
      %c0_63 = arith.constant 0 : index
      %75 = vector.load %arg9[%c0_62, %c0_63] : memref<1x32xf32, #tpu.memory_space<vmem>>, vector<1x32xf32>
      %76 = vector.shape_cast %75 : vector<1x32xf32> to vector<32xf32>
      %cst_64 = arith.constant dense<0.000000e+00> : vector<8xf32>
      %77 = vector.multi_reduction <add>, %71, %cst_64 [1] : vector<8x32xf32> to vector<8xf32>
      %78 = vector.shape_cast %77 : vector<8xf32> to vector<8x1xf32>
      %cst_65 = arith.constant 3.200000e+01 : f32
      %79 = vector.broadcast %cst_65 : f32 to vector<8x1xf32>
      %80 = arith.divf %78, %79 : vector<8x1xf32>
      %81 = vector.broadcast %80 : vector<8x1xf32> to vector<8x32xf32>
      %82 = arith.subf %71, %81 : vector<8x32xf32>
      %83 = arith.mulf %82, %82 : vector<8x32xf32>
      %cst_66 = arith.constant dense<0.000000e+00> : vector<8xf32>
      %84 = vector.multi_reduction <add>, %83, %cst_66 [1] : vector<8x32xf32> to vector<8xf32>
      %85 = vector.shape_cast %84 : vector<8xf32> to vector<8x1xf32>
      %cst_67 = arith.constant 3.200000e+01 : f32
      %86 = vector.broadcast %cst_67 : f32 to vector<8x1xf32>
      %87 = arith.divf %85, %86 : vector<8x1xf32>
      %cst_68 = arith.constant 9.99999974E-6 : f32
      %88 = vector.broadcast %cst_68 : f32 to vector<8x1xf32>
      %89 = arith.addf %87, %88 : vector<8x1xf32>
      %90 = math.rsqrt %89 : vector<8x1xf32>
      %91 = vector.broadcast %90 : vector<8x1xf32> to vector<8x32xf32>
      %92 = arith.mulf %82, %91 : vector<8x32xf32>
      %93 = vector.shape_cast %74 : vector<32xf32> to vector<1x32xf32>
      %94 = vector.broadcast %93 : vector<1x32xf32> to vector<8x32xf32>
      %95 = arith.mulf %92, %94 : vector<8x32xf32>
      %96 = vector.shape_cast %76 : vector<32xf32> to vector<1x32xf32>
      %97 = vector.broadcast %96 : vector<1x32xf32> to vector<8x32xf32>
      %98 = arith.addf %95, %97 : vector<8x32xf32>
      %99 = arith.truncf %98 : vector<8x32xf32> to vector<8x32xbf16>
      %c0_69 = arith.constant 0 : index
      %c0_70 = arith.constant 0 : index
      %100 = vector.load %arg19[%c0_69, %c0_70] : memref<8x32xbf16, #tpu.memory_space<vmem>>, vector<8x32xbf16>
      tpu.vector_store %arg19[%c0_69, %c0_70], %99 {strides = array<i32>} : memref<8x32xbf16, #tpu.memory_space<vmem>>, vector<8x32xbf16>,
      %cst_71 = arith.constant 0.000000e+00 : f32
      %101 = vector.broadcast %cst_71 : f32 to vector<8x32xf32>
      %c0_72 = arith.constant 0 : index
      %c0_73 = arith.constant 0 : index
      %102 = vector.load %arg20[%c0_72, %c0_73] : memref<8x32xf32, #tpu.memory_space<vmem>>, vector<8x32xf32>
      tpu.vector_store %arg20[%c0_72, %c0_73], %101 {strides = array<i32>} : memref<8x32xf32, #tpu.memory_space<vmem>>, vector<8x32xf32>,
    } else {
    }
    %c0 = arith.constant 0 : index
    %c0_1 = arith.constant 0 : index
    %3 = vector.load %arg19[%c0, %c0_1] : memref<8x32xbf16, #tpu.memory_space<vmem>>, vector<8x32xbf16>
    %c0_2 = arith.constant 0 : index
    %c0_3 = arith.constant 0 : index
    %4 = vector.load %arg10[%c0_2, %c0_3] : memref<32x128xbf16, #tpu.memory_space<vmem>>, vector<32x128xbf16>
    %cst = arith.constant dense<0.000000e+00> : vector<8x128xf32>
    %5 = tpu.matmul %3, %4, %cst {dimension_numbers = #tpu.dot_dimension_numbers<[1], [0], [0], [1], [0, 0, 1, 1], [], []>} : vector<8x32xbf16>, vector<32x128xbf16>, vector<8x128xf32> -> vector<8x128xf32>
    %c0_4 = arith.constant 0 : index
    %c0_5 = arith.constant 0 : index
    %6 = vector.load %arg11[%c0_4, %c0_5] : memref<1x128xf32, #tpu.memory_space<vmem>>, vector<1x128xf32>
    %7 = vector.shape_cast %6 : vector<1x128xf32> to vector<128xf32>
    %8 = vector.shape_cast %7 : vector<128xf32> to vector<1x128xf32>
    %9 = vector.broadcast %8 : vector<1x128xf32> to vector<8x128xf32>
    %10 = arith.addf %5, %9 : vector<8x128xf32>
    %c0_6 = arith.constant 0 : index
    %c0_7 = arith.constant 0 : index
    %11 = vector.load %arg12[%c0_6, %c0_7] : memref<32x128xbf16, #tpu.memory_space<vmem>>, vector<32x128xbf16>
    %cst_8 = arith.constant dense<0.000000e+00> : vector<8x128xf32>
    %12 = tpu.matmul %3, %11, %cst_8 {dimension_numbers = #tpu.dot_dimension_numbers<[1], [0], [0], [1], [0, 0, 1, 1], [], []>} : vector<8x32xbf16>, vector<32x128xbf16>, vector<8x128xf32> -> vector<8x128xf32>
    %c0_9 = arith.constant 0 : index
    %c0_10 = arith.constant 0 : index
    %13 = vector.load %arg13[%c0_9, %c0_10] : memref<1x128xf32, #tpu.memory_space<vmem>>, vector<1x128xf32>
    %14 = vector.shape_cast %13 : vector<1x128xf32> to vector<128xf32>
    %15 = vector.shape_cast %14 : vector<128xf32> to vector<1x128xf32>
    %16 = vector.broadcast %15 : vector<1x128xf32> to vector<8x128xf32>
    %17 = arith.addf %12, %16 : vector<8x128xf32>
    %18 = arith.negf %10 : vector<8x128xf32>
    %19 = math.exp %18 : vector<8x128xf32>
    %cst_11 = arith.constant 1.000000e+00 : f32
    %20 = vector.broadcast %cst_11 : f32 to vector<8x128xf32>
    %21 = arith.addf %20, %19 : vector<8x128xf32>
    %22 = arith.divf %20, %21 : vector<8x128xf32>
    %23 = arith.mulf %10, %22 : vector<8x128xf32>
    %24 = arith.mulf %23, %17 : vector<8x128xf32>
    %25 = arith.truncf %24 : vector<8x128xf32> to vector<8x128xbf16>
    %c0_12 = arith.constant 0 : index
    %c0_13 = arith.constant 0 : index
    %26 = vector.load %arg20[%c0_12, %c0_13] : memref<8x32xf32, #tpu.memory_space<vmem>>, vector<8x32xf32>
    %c0_14 = arith.constant 0 : index
    %c0_15 = arith.constant 0 : index
    %27 = vector.load %arg14[%c0_14, %c0_15] : memref<128x32xbf16, #tpu.memory_space<vmem>>, vector<128x32xbf16>
    %cst_16 = arith.constant dense<0.000000e+00> : vector<8x32xf32>
    %28 = tpu.matmul %25, %27, %cst_16 {dimension_numbers = #tpu.dot_dimension_numbers<[1], [0], [0], [1], [0, 0, 1, 1], [], []>} : vector<8x128xbf16>, vector<128x32xbf16>, vector<8x32xf32> -> vector<8x32xf32>
    %29 = arith.addf %26, %28 : vector<8x32xf32>
    %c0_17 = arith.constant 0 : index
    %c0_18 = arith.constant 0 : index
    %30 = vector.load %arg20[%c0_17, %c0_18] : memref<8x32xf32, #tpu.memory_space<vmem>>, vector<8x32xf32>
    tpu.vector_store %arg20[%c0_17, %c0_18], %29 {strides = array<i32>} : memref<8x32xf32, #tpu.memory_space<vmem>>, vector<8x32xf32>,
    %c0_i32_19 = arith.constant 0 : i32
    %31 = arith.cmpi eq, %arg2, %c0_i32_19 : i32
    %32 = arith.extui %31 : i1 to i32
    %c0_i32_20 = arith.constant 0 : i32
    %33 = arith.cmpi ne, %32, %c0_i32_20 : i32
    scf.if %33 {
      %c0_21 = arith.constant 0 : index
      %c0_22 = arith.constant 0 : index
      %34 = vector.load %arg20[%c0_21, %c0_22] : memref<8x32xf32, #tpu.memory_space<vmem>>, vector<8x32xf32>
      %c0_23 = arith.constant 0 : index
      %c0_24 = arith.constant 0 : index
      %35 = vector.load %arg15[%c0_23, %c0_24] : memref<1x32xf32, #tpu.memory_space<vmem>>, vector<1x32xf32>
      %36 = vector.shape_cast %35 : vector<1x32xf32> to vector<32xf32>
      %37 = vector.shape_cast %36 : vector<32xf32> to vector<1x32xf32>
      %38 = vector.broadcast %37 : vector<1x32xf32> to vector<8x32xf32>
      %39 = arith.addf %34, %38 : vector<8x32xf32>
      %c0_25 = arith.constant 0 : index
      %c0_26 = arith.constant 0 : index
      %40 = vector.load %arg18[%c0_25, %c0_26] : memref<8x32xf32, #tpu.memory_space<vmem>>, vector<8x32xf32>
      %c0_27 = arith.constant 0 : index
      %c0_28 = arith.constant 0 : index
      %41 = vector.load %arg16[%c0_27, %c0_28] : memref<1x32xf32, #tpu.memory_space<vmem>>, vector<1x32xf32>
      %42 = vector.shape_cast %41 : vector<1x32xf32> to vector<32xf32>
      %43 = vector.shape_cast %42 : vector<32xf32> to vector<1x32xf32>
      %44 = vector.broadcast %43 : vector<1x32xf32> to vector<8x32xf32>
      %45 = arith.mulf %44, %39 : vector<8x32xf32>
      %46 = arith.addf %40, %45 : vector<8x32xf32>
      %c0_29 = arith.constant 0 : index
      %c0_30 = arith.constant 0 : index
      %c0_31 = arith.constant 0 : index
      %47 = vector.load %arg17[%c0_29, %c0_30, %c0_31] : memref<1x8x32xf32, #tpu.memory_space<vmem>>, vector<1x8x32xf32>
      %48 = vector.shape_cast %47 : vector<1x8x32xf32> to vector<8x32xf32>
      %49 = vector.shape_cast %46 : vector<8x32xf32> to vector<1x8x32xf32>
      tpu.vector_store %arg17[%c0_29, %c0_30, %c0_31], %49 {strides = array<i32>} : memref<1x8x32xf32, #tpu.memory_space<vmem>>, vector<1x8x32xf32>,
    } else {
    }
    return
  }
  func.func @transform_0(%arg0: i32, %arg1: i32, %arg2: i32) -> (i32, i32, i32) {
    %c0_i32 = arith.constant 0 : i32
    %c0_i32_0 = arith.constant 0 : i32
    return %arg0, %arg1, %c0_i32 : i32, i32, i32
  }
  func.func @transform_1(%arg0: i32, %arg1: i32, %arg2: i32) -> (i32, i32, i32, i32) {
    %c0_i32 = arith.constant 0 : i32
    %c0_i32_0 = arith.constant 0 : i32
    %c0_i32_1 = arith.constant 0 : i32
    return %arg0, %c0_i32, %arg1, %c0_i32_0 : i32, i32, i32, i32
  }
  func.func @transform_2(%arg0: i32, %arg1: i32, %arg2: i32) -> (i32, i32, i32) {
    %c0_i32 = arith.constant 0 : i32
    %c0_i32_0 = arith.constant 0 : i32
    %c0_i32_1 = arith.constant 0 : i32
    %c0_i32_2 = arith.constant 0 : i32
    return %c0_i32, %c0_i32_0, %c0_i32_1 : i32, i32, i32
  }
  func.func @transform_3(%arg0: i32, %arg1: i32, %arg2: i32) -> (i32, i32) {
    %c0_i32 = arith.constant 0 : i32
    %c0_i32_0 = arith.constant 0 : i32
    %c0_i32_1 = arith.constant 0 : i32
    return %c0_i32, %c0_i32_0 : i32, i32
  }
  func.func @transform_4(%arg0: i32, %arg1: i32, %arg2: i32) -> (i32, i32) {
    %c0_i32 = arith.constant 0 : i32
    %c0_i32_0 = arith.constant 0 : i32
    %c0_i32_1 = arith.constant 0 : i32
    return %c0_i32, %c0_i32_0 : i32, i32
  }
  func.func @transform_5(%arg0: i32, %arg1: i32, %arg2: i32) -> (i32, i32) {
    %c0_i32 = arith.constant 0 : i32
    %c0_i32_0 = arith.constant 0 : i32
    %c0_i32_1 = arith.constant 0 : i32
    return %c0_i32, %c0_i32_0 : i32, i32
  }
  func.func @transform_6(%arg0: i32, %arg1: i32, %arg2: i32) -> (i32, i32) {
    %c0_i32 = arith.constant 0 : i32
    %c0_i32_0 = arith.constant 0 : i32
    %c0_i32_1 = arith.constant 0 : i32
    return %c0_i32, %c0_i32_0 : i32, i32
  }
  func.func @transform_7(%arg0: i32, %arg1: i32, %arg2: i32) -> (i32, i32) {
    %c0_i32 = arith.constant 0 : i32
    %c0_i32_0 = arith.constant 0 : i32
    return %c0_i32, %arg2 : i32, i32
  }
  func.func @transform_8(%arg0: i32, %arg1: i32, %arg2: i32) -> (i32, i32) {
    %c0_i32 = arith.constant 0 : i32
    %c0_i32_0 = arith.constant 0 : i32
    return %c0_i32, %arg2 : i32, i32
  }
  func.func @transform_9(%arg0: i32, %arg1: i32, %arg2: i32) -> (i32, i32) {
    %c0_i32 = arith.constant 0 : i32
    %c0_i32_0 = arith.constant 0 : i32
    return %c0_i32, %arg2 : i32, i32
  }
  func.func @transform_10(%arg0: i32, %arg1: i32, %arg2: i32) -> (i32, i32) {
    %c0_i32 = arith.constant 0 : i32
    %c0_i32_0 = arith.constant 0 : i32
    return %c0_i32, %arg2 : i32, i32
  }
  func.func @transform_11(%arg0: i32, %arg1: i32, %arg2: i32) -> (i32, i32) {
    %c0_i32 = arith.constant 0 : i32
    %c0_i32_0 = arith.constant 0 : i32
    return %arg2, %c0_i32 : i32, i32
  }
  func.func @transform_12(%arg0: i32, %arg1: i32, %arg2: i32) -> (i32, i32) {
    %c0_i32 = arith.constant 0 : i32
    %c0_i32_0 = arith.constant 0 : i32
    %c0_i32_1 = arith.constant 0 : i32
    return %c0_i32, %c0_i32_0 : i32, i32
  }
  func.func @transform_13(%arg0: i32, %arg1: i32, %arg2: i32) -> (i32, i32) {
    %c0_i32 = arith.constant 0 : i32
    %c0_i32_0 = arith.constant 0 : i32
    %c0_i32_1 = arith.constant 0 : i32
    return %c0_i32, %c0_i32_0 : i32, i32
  }
  func.func @transform_14(%arg0: i32, %arg1: i32, %arg2: i32) -> (i32, i32, i32) {
    %c0_i32 = arith.constant 0 : i32
    %c0_i32_0 = arith.constant 0 : i32
    return %arg0, %arg1, %c0_i32 : i32, i32, i32
  }
}

</mosaic_0001>

<llo_original>
// kernel: tomer_layer.3
$region0: #{tomer_layer.3}
  #allocation0 [shape = 'u32[]', space=smem, size = 0x4, offset = 0x4, fixed_abs, tag = 'smem constant byte address 0x4 - core index']
  #allocation1 [shape = 'u32[144,128]{1,0:T(1,128)}', space=vmem, size = 0x12000, scoped, tag = 'internal scratch']
  %s0 = inlined_call_operand.vmem [shape: f32[2,8,32], index: 0, kind: input, shape index: {}]
  %s1 = inlined_call_operand.vmem [shape: f32[1,32], index: 1, kind: input, shape index: {}]
  %s2 = inlined_call_operand.vmem [shape: f32[1,32], index: 2, kind: input, shape index: {}]
  %s3 = inlined_call_operand.vmem [shape: bf16[32,96], index: 3, kind: input, shape index: {}]
  %s4 = inlined_call_operand.vmem [shape: f32[1,96], index: 4, kind: input, shape index: {}]
  %s5 = inlined_call_operand.vmem [shape: bf16[2,8,96], index: 5, kind: output, shape index: {}]
  %s6 = sld [smem:[#allocation0]]
  $region53: #{tomer_layer.3} parent=0
    _
  %s8 = ssub.s32 1, %s6
  %s9 = scalar_select 0, %s8, %s6
  loop: start=0, step=1, limit=4
  $region2: #{tomer_layer.3} parent=0 // loop_pre_header
    _
  $region3: #{tomer_layer.3} parent=0 // loop_header
    %s11 = sphi 0, %s15
    %p12 = scmp.ge.s32.totalorder %s11, 4
    %s18 = sphi 0, %s30
    %s19 = sphi 0, %s26
    %s20 = sphi 0, %s18
    %s21 = sphi 0, %s19
    %s22 = sphi 0, %s20
    %s23 = sphi 0, %s21
    %s35 = sphi 0, %s37
    %s38 = sphi 0, %s35
    %s39 = sphi 0, %s38
    %s55 = sphi 0, %s39
    %s59 = sphi 0, %s59
    %s61 = sphi 0, %s59
    %s62 = sphi 0, %s61
    %s76 = sphi 0, %s62
    %s80 = sphi 0, %s80
    %s82 = sphi 0, %s80
    %s83 = sphi 0, %s82
    %s97 = sphi 0, %s83
    %s101 = sphi 0, %s101
    %s103 = sphi 0, %s101
    %s104 = sphi 0, %s103
    %s118 = sphi 0, %s104
    %s122 = sphi 0, %s122
    %s124 = sphi 0, %s122
    %s125 = sphi 0, %s124
    %s139 = sphi 0, %s125
    %s147 = sphi 0, %s149
    %s150 = sphi 0, %s147
    %s151 = sphi 0, %s150
    %s167 = sphi 0, %s151
  $region4: #{tomer_layer.3} parent=0 // loop_header_branch
    %14 = sbr.rel (%p12) target = $region8
  $region5: #{tomer_layer.3} parent=0 // loop_body
    %s16 = ssub.s32 %s11, 1
    %s17 = ssub.s32 %s11, 2
    %s24 = sadd.s32 1, %s19
    %p25 = scmp.ge.s32.totalorder %s24, 1
    %s26 = scalar_select %p25, 0, %s24
    %s27 = sadd.s32 1, %s18
    %s28 = scalar_select %p25, %s27, %s18
    %p29 = scmp.ge.s32.totalorder %s28, 2
    %s30 = scalar_select %p29, 0, %s28
    %s31 = ssub.s32 %s18, %s30
    %s32 = ssub.s32 %s19, %s26
    %s33 = sor.u32 %s31, %s32
    %p34 = scmp.eq.s32.totalorder %s33, 0
    %s36 = sadd.s32 %s35, 1
    %s37 = scalar_select %p34, %s35, %s36
    %p40 = pneg %p34
    %p41 = scmp.eq.s32.totalorder %s11, 1
    %p42 = por %p40, %p41
    %p43 = scmp.ne.s32.totalorder %s35, %s38
    %p44 = scmp.eq.s32.totalorder %s11, 0
    %p45 = por %p43, %p44
    %p46 = scmp.ne.s32.totalorder %s35, %s38
    %p47 = scmp.eq.s32.totalorder %s16, 1
    %p48 = por %p46, %p47
    %p49 = scmp.ne.s32.totalorder %s38, %s39
    %p50 = scmp.eq.s32.totalorder %s16, 0
    %p51 = por %p49, %p50
    %p52 = scmp.ne.s32.totalorder %s38, %s39
    %p53 = scmp.eq.s32.totalorder %s17, 1
    %p54 = por %p52, %p53
    %p56 = scmp.ne.s32.totalorder %s39, %s55
    %p57 = scmp.eq.s32.totalorder %s17, 0
    %p58 = por %p56, %p57
    %s60 = sadd.s32 %s59, 1
    %p63 = scmp.eq.s32.totalorder %s11, 1
    %p64 = scmp.ne.s32.totalorder %s59, %s61
    %p65 = scmp.eq.s32.totalorder %s11, 0
    %p66 = por %p64, %p65
    %p67 = scmp.ne.s32.totalorder %s59, %s61
    %p68 = scmp.eq.s32.totalorder %s16, 1
    %p69 = por %p67, %p68
    %p70 = scmp.ne.s32.totalorder %s61, %s62
    %p71 = scmp.eq.s32.totalorder %s16, 0
    %p72 = por %p70, %p71
    %p73 = scmp.ne.s32.totalorder %s61, %s62
    %p74 = scmp.eq.s32.totalorder %s17, 1
    %p75 = por %p73, %p74
    %p77 = scmp.ne.s32.totalorder %s62, %s76
    %p78 = scmp.eq.s32.totalorder %s17, 0
    %p79 = por %p77, %p78
    %s81 = sadd.s32 %s80, 1
    %p84 = scmp.eq.s32.totalorder %s11, 1
    %p85 = scmp.ne.s32.totalorder %s80, %s82
    %p86 = scmp.eq.s32.totalorder %s11, 0
    %p87 = por %p85, %p86
    %p88 = scmp.ne.s32.totalorder %s80, %s82
    %p89 = scmp.eq.s32.totalorder %s16, 1
    %p90 = por %p88, %p89
    %p91 = scmp.ne.s32.totalorder %s82, %s83
    %p92 = scmp.eq.s32.totalorder %s16, 0
    %p93 = por %p91, %p92
    %p94 = scmp.ne.s32.totalorder %s82, %s83
    %p95 = scmp.eq.s32.totalorder %s17, 1
    %p96 = por %p94, %p95
    %p98 = scmp.ne.s32.totalorder %s83, %s97
    %p99 = scmp.eq.s32.totalorder %s17, 0
    %p100 = por %p98, %p99
    %s102 = sadd.s32 %s101, 1
    %p105 = scmp.eq.s32.totalorder %s11, 1
    %p106 = scmp.ne.s32.totalorder %s101, %s103
    %p107 = scmp.eq.s32.totalorder %s11, 0
    %p108 = por %p106, %p107
    %p109 = scmp.ne.s32.totalorder %s101, %s103
    %p110 = scmp.eq.s32.totalorder %s16, 1
    %p111 = por %p109, %p110
    %p112 = scmp.ne.s32.totalorder %s103, %s104
    %p113 = scmp.eq.s32.totalorder %s16, 0
    %p114 = por %p112, %p113
    %p115 = scmp.ne.s32.totalorder %s103, %s104
    %p116 = scmp.eq.s32.totalorder %s17, 1
    %p117 = por %p115, %p116
    %p119 = scmp.ne.s32.totalorder %s104, %s118
    %p120 = scmp.eq.s32.totalorder %s17, 0
    %p121 = por %p119, %p120
    %s123 = sadd.s32 %s122, 1
    %p126 = scmp.eq.s32.totalorder %s11, 1
    %p127 = scmp.ne.s32.totalorder %s122, %s124
    %p128 = scmp.eq.s32.totalorder %s11, 0
    %p129 = por %p127, %p128
    %p130 = scmp.ne.s32.totalorder %s122, %s124
    %p131 = scmp.eq.s32.totalorder %s16, 1
    %p132 = por %p130, %p131
    %p133 = scmp.ne.s32.totalorder %s124, %s125
    %p134 = scmp.eq.s32.totalorder %s16, 0
    %p135 = por %p133, %p134
    %p136 = scmp.ne.s32.totalorder %s124, %s125
    %p137 = scmp.eq.s32.totalorder %s17, 1
    %p138 = por %p136, %p137
    %p140 = scmp.ne.s32.totalorder %s125, %s139
    %p141 = scmp.eq.s32.totalorder %s17, 0
    %p142 = por %p140, %p141
    %s143 = ssub.s32 %s18, %s30
    %s144 = ssub.s32 %s19, %s26
    %s145 = sor.u32 %s143, %s144
    %p146 = scmp.eq.s32.totalorder %s145, 0
    %s148 = sadd.s32 %s147, 1
    %s149 = scalar_select %p146, %s147, %s148
    %p152 = pneg %p146
    %p153 = scmp.eq.s32.totalorder %s11, 1
    %p154 = por %p152, %p153
    %p155 = scmp.ne.s32.totalorder %s147, %s150
    %p156 = scmp.eq.s32.totalorder %s11, 0
    %p157 = por %p155, %p156
    %p158 = scmp.ne.s32.totalorder %s147, %s150
    %p159 = scmp.eq.s32.totalorder %s16, 1
    %p160 = por %p158, %p159
    %p161 = scmp.ne.s32.totalorder %s150, %s151
    %p162 = scmp.eq.s32.totalorder %s16, 0
    %p163 = por %p161, %p162
    %p164 = scmp.ne.s32.totalorder %s150, %s151
    %p165 = scmp.eq.s32.totalorder %s17, 1
    %p166 = por %p164, %p165
    %p168 = scmp.ne.s32.totalorder %s151, %s167
    %p169 = scmp.eq.s32.totalorder %s17, 0
    %p170 = por %p168, %p169
    %p171 = scmp.le.s32.totalorder 1, %s11
    %p172 = scmp.lt.s32.totalorder %s11, 3
    %p173 = pnand %p171, %p172
    %p174 = pneg %p173
    // Predicated region
    $region9: #{tomer_layer.3} parent=5 // pred_check
      _
    $region10: #{tomer_layer.3} parent=5 // pred_check_branch
      %176 = sbr.rel (%p173) target = $region12
    $region11: #{tomer_layer.3} parent=5 // pred_region
      %s177 = ssub.s32 %s11, 1
      // Predicated region
      $region13: #{tomer_layer.3} parent=11 // pred_check
        %p178 = pneg %p72
      $region14: #{tomer_layer.3} parent=11 // pred_check_branch
        %180 = sbr.rel (%p178) target = $region16
      $region15: #{tomer_layer.3} parent=11 // pred_region
        _
      $region16: #{tomer_layer.3} parent=11 // pred_fallthru
        _
      // Predicated region
      $region17: #{tomer_layer.3} parent=11 // pred_check
        %p181 = pneg %p93
      $region18: #{tomer_layer.3} parent=11 // pred_check_branch
        %183 = sbr.rel (%p181) target = $region20
      $region19: #{tomer_layer.3} parent=11 // pred_region
        _
      $region20: #{tomer_layer.3} parent=11 // pred_fallthru
        _
      // Predicated region
      $region21: #{tomer_layer.3} parent=11 // pred_check
        %p184 = pneg %p114
      $region22: #{tomer_layer.3} parent=11 // pred_check_branch
        %186 = sbr.rel (%p184) target = $region24
      $region23: #{tomer_layer.3} parent=11 // pred_region
        _
      $region24: #{tomer_layer.3} parent=11 // pred_fallthru
        _
      // Predicated region
      $region25: #{tomer_layer.3} parent=11 // pred_check
        %p187 = pneg %p135
      $region26: #{tomer_layer.3} parent=11 // pred_check_branch
        %189 = sbr.rel (%p187) target = $region28
      $region27: #{tomer_layer.3} parent=11 // pred_region
        _
      $region28: #{tomer_layer.3} parent=11 // pred_fallthru
        _
    $region12: #{tomer_layer.3} parent=5 // pred_fallthru
      _
    %p190 = scmp.lt.s32.totalorder %s11, 2
    // Predicated region
    $region29: #{tomer_layer.3} parent=5 // pred_check
      %p191 = pneg %p190
    $region30: #{tomer_layer.3} parent=5 // pred_check_branch
      %193 = sbr.rel (%p191) target = $region32
    $region31: #{tomer_layer.3} parent=5 // pred_region
      // Predicated region
      $region33: #{tomer_layer.3} parent=31 // pred_check
        %p194 = pneg %p45
      $region34: #{tomer_layer.3} parent=31 // pred_check_branch
        %196 = sbr.rel (%p194) target = $region36
      $region35: #{tomer_layer.3} parent=31 // pred_region
        %p197 = scmp.lt.s32.totalorder %s18, 1
        %s198 = scalar_select %p197, %s18, 1
        %p199 = scmp.lt.s32.totalorder %s19, 0
        %s200 = scalar_select %p199, %s19, 0
        %s201 = sadd.s32 %s200, %s198
        %s202 = smul.addr %s201, 8
        %s203 = scalar_lea.vmem %s0, %s202
      $region36: #{tomer_layer.3} parent=31 // pred_fallthru
        _
    $region32: #{tomer_layer.3} parent=5 // pred_fallthru
      _
    %p204 = scmp.le.s32.totalorder 1, %s11
    %p205 = scmp.lt.s32.totalorder %s11, 3
    %p206 = pnand %p204, %p205
    %p207 = pneg %p206
    // Predicated region
    $region37: #{tomer_layer.3} parent=5 // pred_check
      _
    $region38: #{tomer_layer.3} parent=5 // pred_check_branch
      %209 = sbr.rel (%p206) target = $region40
    $region39: #{tomer_layer.3} parent=5 // pred_region
      %s210 = ssub.s32 %s11, 1
      %p211 = scmp.lt.s32.totalorder %s20, 1
      %s212 = scalar_select %p211, %s20, 1
      %p213 = scmp.lt.s32.totalorder %s21, 0
      %s214 = scalar_select %p213, %s21, 0
      %s215 = sadd.s32 %s214, %s212
      %s216 = smul.addr %s215, 8
      %s217 = scalar_lea.vmem %s0, %s216
      %p218 = pneg %p51
      %p219 = pneg %p48
      %p220 = pneg %p72
      %p221 = pneg %p69
      %p222 = pneg %p93
      %p223 = pneg %p90
      %p224 = pneg %p114
      %p225 = pneg %p111
      %p226 = pneg %p135
      %p227 = pneg %p132
      %p228 = pneg %p163
      %p229 = pneg %p160
      %p230 = scmp.lt.s32.totalorder %s20, 1
      %s231 = scalar_select %p230, %s20, 1
      %p232 = scmp.lt.s32.totalorder %s21, 0
      %s233 = scalar_select %p232, %s21, 0
      %s234 = sadd.s32 %s233, %s231
      %s235 = smul.addr %s234, 4
      %s236 = scalar_lea.vmem %s5, %s235
      %p237 = scmp.lt.s32.totalorder %s20, 1
      %s238 = scalar_select %p237, %s20, 1
      %p239 = scmp.lt.s32.totalorder %s21, 0
      %s240 = scalar_select %p239, %s21, 0
      %s241 = sadd.s32 %s240, %s238
      %s242 = smul.addr %s241, 8
      %s243 = scalar_lea.vmem %s0, %s242
      %p244 = scmp.lt.s32.totalorder %s20, 1
      %s245 = scalar_select %p244, %s20, 1
      %p246 = scmp.lt.s32.totalorder %s21, 0
      %s247 = scalar_select %p246, %s21, 0
      %s248 = sadd.s32 %s247, %s245
      %s249 = smul.addr %s248, 4
      %s250 = scalar_lea.vmem %s5, %s249
      %v252 = vld [vmem:[%s243] sm:$0xff]
      %v253 = vld [vmem:[%s1] sm:$0x1]
      %v254 = vld [vmem:[%s2] sm:$0x1]
      %vm255 = vcmask 261120
      %v256 = vsel %vm255, %v252, 0.0
      %257 = vadd.xlane.f32.xlu0 %v256
      %v258 = vpop.xlane.xlu0 %257
      %v259 = vrcp.pop 32.0
      %v260 = vmul.f32 %v258, %v259
      %v261 = vsub.f32 %v252, %v260
      %v262 = vmul.f32 %v261, %v261
      %v263 = vsel %vm255, %v262, 0.0
      %264 = vadd.xlane.f32.xlu0 %v263
      %v265 = vpop.xlane.xlu0 %264
      %v266 = vmul.f32 %v265, %v259
      %v267 = vadd.f32 %v266, 1e-05
      %v268 = vrsqrt.pop %v267
      %v269 = vmul.f32 %v261, %v268
      %v271 = vlaneseq
      %v272 = vshrl.u32 %v271, 7
      %v273 = vsub.s32 0, %v272
      %v274 = vrot.slane %v253, %v273
      %v276 = vmul.f32 %v269, %v274
      %v278 = vlaneseq
      %v279 = vshrl.u32 %v278, 7
      %v280 = vsub.s32 0, %v279
      %v281 = vrot.slane %v254, %v280
      %v283 = vadd.f32 %v276, %v281
      %v284 = vpack.c.bf16 %v283, %v283
      %v285 = vld [vmem:[%s3] sm:$0xf]
      %v286 = vld [vmem:[%s3 + $0x4] sm:$0xf]
      %v287 = vld [vmem:[%s3 + $0x8] sm:$0xf]
      %v288 = vld [vmem:[%s3 + $0xc] sm:$0xf]
      %v289 = vld [vmem:[%s4] sm:$0x1]
      %v291 = vlaneseq
      %v292 = vshrl.u32 %v291, 7
      %v293 = vsub.s32 0, %v292
      %v294 = vrot.slane %v289, %v293
      %v300 = vunpack.c.l.b16 %v285
      %v301 = vunpack.c.l.b16 %v286
      %v302 = vunpack.c.l.b16 %v287
      %v303 = vunpack.c.l.b16 %v288
      %v304 = vpack.c.b16 %v301, %v300
      %v305 = vpack.c.b16 %v303, %v302
      %v309 = vsel %vm255, %v284, 0
      %311 = vmatprep.subr.bf16.mxu0 0
      %312 = vmatpush1.bf16.msra.mxu0 %v304
      %313 = vmatprep.subr.bf16.mxu0 0
      %314 = vmatpush1.bf16.msra.mxu0 %v305
      %315 = vmatprep.subr.bf16.mxu0 0
      %316 = vmatpush1.bf16.msra.mxu0 0
      %317 = vmatprep.subr.bf16.mxu0 0
      %318 = vmatpush1.bf16.msra.mxu0 0
      %319 = vmatprep.subr.bf16.mxu0 0
      %320 = vmatpush1.bf16.msra.mxu0 0
      %321 = vmatprep.subr.bf16.mxu0 0
      %322 = vmatpush1.bf16.msra.mxu0 0
      %323 = vmatprep.subr.bf16.mxu0 0
      %324 = vmatpush1.bf16.msra.mxu0 0
      %325 = vmatprep.subr.bf16.mxu0 0
      %326 = vmatpush1.bf16.msra.mxu0 0
      %327 = vmatprep.subr.bf16.mxu0 0
      %328 = vmatpush1.bf16.msra.mxu0 0
      %329 = vmatprep.subr.bf16.mxu0 0
      %330 = vmatpush1.bf16.msra.mxu0 0
      %331 = vmatprep.subr.bf16.mxu0 0
      %332 = vmatpush1.bf16.msra.mxu0 0
      %333 = vmatprep.subr.bf16.mxu0 0
      %334 = vmatpush1.bf16.msra.mxu0 0
      %335 = vmatprep.subr.bf16.mxu0 0
      %336 = vmatpush1.bf16.msra.mxu0 0
      %337 = vmatprep.subr.bf16.mxu0 0
      %338 = vmatpush1.bf16.msra.mxu0 0
      %339 = vmatprep.subr.bf16.mxu0 0
      %340 = vmatpush1.bf16.msra.mxu0 0
      %341 = vmatprep.subr.bf16.mxu0 0
      %342 = vmatpush1.bf16.msra.mxu0 0
      %343 = vmatprep.mubr.bf16.mxu0 0
      %344 = vmatmul.mubr.bf16.gmra.mrb[0].mxu0 %v309
      %v345 = vpop.f32.mrb[0].mxu0
      %v346 = vadd.f32 %v294, %v345
      %v347 = vpop.f32.mrb[0].mxu0
      %v348 = vpop.f32.mrb[0].mxu0
      %v349 = vpop.f32.mrb[0].mxu0
      %350 = vdwg.mxu0
      %v351 = vpack.c.bf16 %v346, %v346
      %vm352 = vcmask 781312
      %353 = vst.msk [vmem:[%s250] sm:$0xf] %vm352, %v351
      %p354 = scmp.lt.s32.totalorder %s20, 1
      %s355 = scalar_select %p354, %s20, 1
      %p356 = scmp.lt.s32.totalorder %s21, 0
      %s357 = scalar_select %p356, %s21, 0
      %s358 = sadd.s32 %s357, %s355
      %s359 = smul.addr %s358, 4
      %s360 = scalar_lea.vmem %s5, %s359
      // Predicated region
      $region41: #{tomer_layer.3} parent=39 // pred_check
        %p361 = pneg %p160
      $region42: #{tomer_layer.3} parent=39 // pred_check_branch
        %363 = sbr.rel (%p361) target = $region44
      $region43: #{tomer_layer.3} parent=39 // pred_region
        _
      $region44: #{tomer_layer.3} parent=39 // pred_fallthru
        _
    $region40: #{tomer_layer.3} parent=5 // pred_fallthru
      _
    %p364 = scmp.le.s32.totalorder 2, %s11
    // Predicated region
    $region45: #{tomer_layer.3} parent=5 // pred_check
      %p365 = pneg %p364
    $region46: #{tomer_layer.3} parent=5 // pred_check_branch
      %367 = sbr.rel (%p365) target = $region48
    $region47: #{tomer_layer.3} parent=5 // pred_region
      %s368 = ssub.s32 %s11, 2
      // Predicated region
      $region49: #{tomer_layer.3} parent=47 // pred_check
        %p369 = pneg %p166
      $region50: #{tomer_layer.3} parent=47 // pred_check_branch
        %371 = sbr.rel (%p369) target = $region52
      $region51: #{tomer_layer.3} parent=47 // pred_region
        %p372 = scmp.lt.s32.totalorder %s22, 1
        %s373 = scalar_select %p372, %s22, 1
        %p374 = scmp.lt.s32.totalorder %s23, 0
        %s375 = scalar_select %p374, %s23, 0
        %s376 = sadd.s32 %s375, %s373
        %s377 = smul.addr %s376, 4
        %s378 = scalar_lea.vmem %s5, %s377
      $region52: #{tomer_layer.3} parent=47 // pred_fallthru
        _
    $region48: #{tomer_layer.3} parent=5 // pred_fallthru
      _
  $region6: #{tomer_layer.3} parent=0 // loop_footer
    %s15 = sadd.s32 1, %s11
  $region7: #{tomer_layer.3} parent=0 // loop_footer_branch
    %10 = sbr.rel target = $region3
  $region8: #{tomer_layer.3} parent=0 // loop_exit
    _

// kernel: tomer_layer.4
$region0: #{tomer_layer.4}
  #allocation0 [shape = 'u32[]', space=smem, size = 0x4, offset = 0x4, fixed_abs, tag = 'smem constant byte address 0x4 - core index']
  #allocation1 [shape = 'u32[144,128]{1,0:T(1,128)}', space=vmem, size = 0x12000, scoped, tag = 'internal scratch']
  #allocation2 [shape = 'f32[4,8,1]{2,1,0:T(8,128)}', space=vmem, size = 0x4000, scoped, tag = 'scratch operand']
  #allocation3 [shape = 'f32[4,8,1]{2,1,0:T(8,128)}', space=vmem, size = 0x4000, scoped, tag = 'scratch operand']
  #allocation4 [shape = 'f32[4,8,8]{2,1,0:T(8,128)}', space=vmem, size = 0x4000, scoped, tag = 'scratch operand']
  %s0 = inlined_call_operand.vmem [shape: bf16[2,4,8,8], index: 0, kind: input, shape index: {}]
  %s1 = inlined_call_operand.vmem [shape: bf16[2,4,8,8], index: 1, kind: input, shape index: {}]
  %s2 = inlined_call_operand.vmem [shape: bf16[2,4,8,8], index: 2, kind: input, shape index: {}]
  %s3 = inlined_call_operand.vmem [shape: bf16[2,4,8,8], index: 3, kind: output, shape index: {}]
  %s4 = sld [smem:[#allocation0]]
  $region53: #{tomer_layer.4} parent=0
    _
  %s6 = ssub.s32 1, %s4
  %s7 = scalar_select 0, %s6, %s4
  loop: start=0, step=1, limit=4
  $region2: #{tomer_layer.4} parent=0 // loop_pre_header
    _
  $region3: #{tomer_layer.4} parent=0 // loop_header
    %s9 = sphi 0, %s13
    %p10 = scmp.ge.s32.totalorder %s9, 4
    %s16 = sphi 0, %s35
    %s17 = sphi 0, %s31
    %s18 = sphi 0, %s27
    %s19 = sphi 0, %s16
    %s20 = sphi 0, %s17
    %s21 = sphi 0, %s18
    %s22 = sphi 0, %s19
    %s23 = sphi 0, %s20
    %s24 = sphi 0, %s21
    %s40 = sphi 0, %s42
    %s43 = sphi 0, %s40
    %s44 = sphi 0, %s43
    %s60 = sphi 0, %s44
    %s68 = sphi 0, %s70
    %s71 = sphi 0, %s68
    %s72 = sphi 0, %s71
    %s88 = sphi 0, %s72
    %s96 = sphi 0, %s98
    %s99 = sphi 0, %s96
    %s100 = sphi 0, %s99
    %s116 = sphi 0, %s100
    %s124 = sphi 0, %s126
    %s127 = sphi 0, %s124
    %s128 = sphi 0, %s127
    %s144 = sphi 0, %s128
  $region4: #{tomer_layer.4} parent=0 // loop_header_branch
    %12 = sbr.rel (%p10) target = $region8
  $region5: #{tomer_layer.4} parent=0 // loop_body
    %s14 = ssub.s32 %s9, 1
    %s15 = ssub.s32 %s9, 2
    %s25 = sadd.s32 1, %s18
    %p26 = scmp.ge.s32.totalorder %s25, 1
    %s27 = scalar_select %p26, 0, %s25
    %s28 = sadd.s32 1, %s17
    %s29 = scalar_select %p26, %s28, %s17
    %p30 = scmp.ge.s32.totalorder %s29, 1
    %s31 = scalar_select %p30, 0, %s29
    %s32 = sadd.s32 1, %s16
    %s33 = scalar_select %p30, %s32, %s16
    %p34 = scmp.ge.s32.totalorder %s33, 2
    %s35 = scalar_select %p34, 0, %s33
    %s36 = ssub.s32 %s16, %s35
    %s37 = ssub.s32 %s17, %s31
    %s38 = sor.u32 %s36, %s37
    %p39 = scmp.eq.s32.totalorder %s38, 0
    %s41 = sadd.s32 %s40, 1
    %s42 = scalar_select %p39, %s40, %s41
    %p45 = pneg %p39
    %p46 = scmp.eq.s32.totalorder %s9, 1
    %p47 = por %p45, %p46
    %p48 = scmp.ne.s32.totalorder %s40, %s43
    %p49 = scmp.eq.s32.totalorder %s9, 0
    %p50 = por %p48, %p49
    %p51 = scmp.ne.s32.totalorder %s40, %s43
    %p52 = scmp.eq.s32.totalorder %s14, 1
    %p53 = por %p51, %p52
    %p54 = scmp.ne.s32.totalorder %s43, %s44
    %p55 = scmp.eq.s32.totalorder %s14, 0
    %p56 = por %p54, %p55
    %p57 = scmp.ne.s32.totalorder %s43, %s44
    %p58 = scmp.eq.s32.totalorder %s15, 1
    %p59 = por %p57, %p58
    %p61 = scmp.ne.s32.totalorder %s44, %s60
    %p62 = scmp.eq.s32.totalorder %s15, 0
    %p63 = por %p61, %p62
    %s64 = ssub.s32 %s16, %s35
    %s65 = ssub.s32 %s18, %s27
    %s66 = sor.u32 %s64, %s65
    %p67 = scmp.eq.s32.totalorder %s66, 0
    %s69 = sadd.s32 %s68, 1
    %s70 = scalar_select %p67, %s68, %s69
    %p73 = pneg %p67
    %p74 = scmp.eq.s32.totalorder %s9, 1
    %p75 = por %p73, %p74
    %p76 = scmp.ne.s32.totalorder %s68, %s71
    %p77 = scmp.eq.s32.totalorder %s9, 0
    %p78 = por %p76, %p77
    %p79 = scmp.ne.s32.totalorder %s68, %s71
    %p80 = scmp.eq.s32.totalorder %s14, 1
    %p81 = por %p79, %p80
    %p82 = scmp.ne.s32.totalorder %s71, %s72
    %p83 = scmp.eq.s32.totalorder %s14, 0
    %p84 = por %p82, %p83
    %p85 = scmp.ne.s32.totalorder %s71, %s72
    %p86 = scmp.eq.s32.totalorder %s15, 1
    %p87 = por %p85, %p86
    %p89 = scmp.ne.s32.totalorder %s72, %s88
    %p90 = scmp.eq.s32.totalorder %s15, 0
    %p91 = por %p89, %p90
    %s92 = ssub.s32 %s16, %s35
    %s93 = ssub.s32 %s18, %s27
    %s94 = sor.u32 %s92, %s93
    %p95 = scmp.eq.s32.totalorder %s94, 0
    %s97 = sadd.s32 %s96, 1
    %s98 = scalar_select %p95, %s96, %s97
    %p101 = pneg %p95
    %p102 = scmp.eq.s32.totalorder %s9, 1
    %p103 = por %p101, %p102
    %p104 = scmp.ne.s32.totalorder %s96, %s99
    %p105 = scmp.eq.s32.totalorder %s9, 0
    %p106 = por %p104, %p105
    %p107 = scmp.ne.s32.totalorder %s96, %s99
    %p108 = scmp.eq.s32.totalorder %s14, 1
    %p109 = por %p107, %p108
    %p110 = scmp.ne.s32.totalorder %s99, %s100
    %p111 = scmp.eq.s32.totalorder %s14, 0
    %p112 = por %p110, %p111
    %p113 = scmp.ne.s32.totalorder %s99, %s100
    %p114 = scmp.eq.s32.totalorder %s15, 1
    %p115 = por %p113, %p114
    %p117 = scmp.ne.s32.totalorder %s100, %s116
    %p118 = scmp.eq.s32.totalorder %s15, 0
    %p119 = por %p117, %p118
    %s120 = ssub.s32 %s16, %s35
    %s121 = ssub.s32 %s17, %s31
    %s122 = sor.u32 %s120, %s121
    %p123 = scmp.eq.s32.totalorder %s122, 0
    %s125 = sadd.s32 %s124, 1
    %s126 = scalar_select %p123, %s124, %s125
    %p129 = pneg %p123
    %p130 = scmp.eq.s32.totalorder %s9, 1
    %p131 = por %p129, %p130
    %p132 = scmp.ne.s32.totalorder %s124, %s127
    %p133 = scmp.eq.s32.totalorder %s9, 0
    %p134 = por %p132, %p133
    %p135 = scmp.ne.s32.totalorder %s124, %s127
    %p136 = scmp.eq.s32.totalorder %s14, 1
    %p137 = por %p135, %p136
    %p138 = scmp.ne.s32.totalorder %s127, %s128
    %p139 = scmp.eq.s32.totalorder %s14, 0
    %p140 = por %p138, %p139
    %p141 = scmp.ne.s32.totalorder %s127, %s128
    %p142 = scmp.eq.s32.totalorder %s15, 1
    %p143 = por %p141, %p142
    %p145 = scmp.ne.s32.totalorder %s128, %s144
    %p146 = scmp.eq.s32.totalorder %s15, 0
    %p147 = por %p145, %p146
    %p148 = scmp.le.s32.totalorder 1, %s9
    %p149 = scmp.lt.s32.totalorder %s9, 3
    %p150 = pnand %p148, %p149
    %p151 = pneg %p150
    // Predicated region
    $region9: #{tomer_layer.4} parent=5 // pred_check
      _
    $region10: #{tomer_layer.4} parent=5 // pred_check_branch
      %153 = sbr.rel (%p150) target = $region12
    $region11: #{tomer_layer.4} parent=5 // pred_region
      %s154 = ssub.s32 %s9, 1
    $region12: #{tomer_layer.4} parent=5 // pred_fallthru
      _
    %p155 = scmp.lt.s32.totalorder %s9, 2
    // Predicated region
    $region13: #{tomer_layer.4} parent=5 // pred_check
      %p156 = pneg %p155
    $region14: #{tomer_layer.4} parent=5 // pred_check_branch
      %158 = sbr.rel (%p156) target = $region16
    $region15: #{tomer_layer.4} parent=5 // pred_region
      // Predicated region
      $region17: #{tomer_layer.4} parent=15 // pred_check
        %p159 = pneg %p50
      $region18: #{tomer_layer.4} parent=15 // pred_check_branch
        %161 = sbr.rel (%p159) target = $region20
      $region19: #{tomer_layer.4} parent=15 // pred_region
        %p162 = scmp.lt.s32.totalorder %s16, 1
        %s163 = scalar_select %p162, %s16, 1
        %p164 = scmp.lt.s32.totalorder %s17, 0
        %s165 = scalar_select %p164, %s17, 0
        %s166 = smul.addr %s163, 4
        %s167 = sadd.s32 %s165, %s166
        %s168 = smul.addr %s167, 4
        %s169 = scalar_lea.vmem %s0, %s168
      $region20: #{tomer_layer.4} parent=15 // pred_fallthru
        _
      // Predicated region
      $region21: #{tomer_layer.4} parent=15 // pred_check
        %p170 = pneg %p78
      $region22: #{tomer_layer.4} parent=15 // pred_check_branch
        %172 = sbr.rel (%p170) target = $region24
      $region23: #{tomer_layer.4} parent=15 // pred_region
        %p173 = scmp.lt.s32.totalorder %s16, 1
        %s174 = scalar_select %p173, %s16, 1
        %p175 = scmp.lt.s32.totalorder %s18, 0
        %s176 = scalar_select %p175, %s18, 0
        %s177 = smul.addr %s174, 4
        %s178 = sadd.s32 %s176, %s177
        %s179 = smul.addr %s178, 4
        %s180 = scalar_lea.vmem %s1, %s179
      $region24: #{tomer_layer.4} parent=15 // pred_fallthru
        _
      // Predicated region
      $region25: #{tomer_layer.4} parent=15 // pred_check
        %p181 = pneg %p106
      $region26: #{tomer_layer.4} parent=15 // pred_check_branch
        %183 = sbr.rel (%p181) target = $region28
      $region27: #{tomer_layer.4} parent=15 // pred_region
        %p184 = scmp.lt.s32.totalorder %s16, 1
        %s185 = scalar_select %p184, %s16, 1
        %p186 = scmp.lt.s32.totalorder %s18, 0
        %s187 = scalar_select %p186, %s18, 0
        %s188 = smul.addr %s185, 4
        %s189 = sadd.s32 %s187, %s188
        %s190 = smul.addr %s189, 4
        %s191 = scalar_lea.vmem %s2, %s190
      $region28: #{tomer_layer.4} parent=15 // pred_fallthru
        _
    $region16: #{tomer_layer.4} parent=5 // pred_fallthru
      _
    %p192 = scmp.le.s32.totalorder 1, %s9
    %p193 = scmp.lt.s32.totalorder %s9, 3
    %p194 = pnand %p192, %p193
    %p195 = pneg %p194
    // Predicated region
    $region29: #{tomer_layer.4} parent=5 // pred_check
      _
    $region30: #{tomer_layer.4} parent=5 // pred_check_branch
      %197 = sbr.rel (%p194) target = $region32
    $region31: #{tomer_layer.4} parent=5 // pred_region
      %s198 = ssub.s32 %s9, 1
      %p199 = scmp.lt.s32.totalorder %s19, 1
      %s200 = scalar_select %p199, %s19, 1
      %p201 = scmp.lt.s32.totalorder %s20, 0
      %s202 = scalar_select %p201, %s20, 0
      %s203 = smul.addr %s200, 4
      %s204 = sadd.s32 %s202, %s203
      %s205 = smul.addr %s204, 4
      %s206 = scalar_lea.vmem %s0, %s205
      %p207 = pneg %p56
      %p208 = pneg %p53
      %p209 = scmp.lt.s32.totalorder %s19, 1
      %s210 = scalar_select %p209, %s19, 1
      %p211 = scmp.lt.s32.totalorder %s21, 0
      %s212 = scalar_select %p211, %s21, 0
      %s213 = smul.addr %s210, 4
      %s214 = sadd.s32 %s212, %s213
      %s215 = smul.addr %s214, 4
      %s216 = scalar_lea.vmem %s1, %s215
      %p217 = pneg %p84
      %p218 = pneg %p81
      %p219 = scmp.lt.s32.totalorder %s19, 1
      %s220 = scalar_select %p219, %s19, 1
      %p221 = scmp.lt.s32.totalorder %s21, 0
      %s222 = scalar_select %p221, %s21, 0
      %s223 = smul.addr %s220, 4
      %s224 = sadd.s32 %s222, %s223
      %s225 = smul.addr %s224, 4
      %s226 = scalar_lea.vmem %s2, %s225
      %p227 = pneg %p112
      %p228 = pneg %p109
      %p229 = pneg %p140
      %p230 = pneg %p137
      %p231 = scmp.lt.s32.totalorder %s19, 1
      %s232 = scalar_select %p231, %s19, 1
      %p233 = scmp.lt.s32.totalorder %s20, 0
      %s234 = scalar_select %p233, %s20, 0
      %s235 = smul.addr %s232, 4
      %s236 = sadd.s32 %s234, %s235
      %s237 = smul.addr %s236, 4
      %s238 = scalar_lea.vmem %s3, %s237
      %p239 = scmp.lt.s32.totalorder %s19, 1
      %s240 = scalar_select %p239, %s19, 1
      %p241 = scmp.lt.s32.totalorder %s20, 0
      %s242 = scalar_select %p241, %s20, 0
      %s243 = smul.addr %s240, 4
      %s244 = sadd.s32 %s242, %s243
      %s245 = smul.addr %s244, 4
      %s246 = scalar_lea.vmem %s0, %s245
      %p247 = scmp.lt.s32.totalorder %s19, 1
      %s248 = scalar_select %p247, %s19, 1
      %p249 = scmp.lt.s32.totalorder %s21, 0
      %s250 = scalar_select %p249, %s21, 0
      %s251 = smul.addr %s248, 4
      %s252 = sadd.s32 %s250, %s251
      %s253 = smul.addr %s252, 4
      %s254 = scalar_lea.vmem %s1, %s253
      %p255 = scmp.lt.s32.totalorder %s19, 1
      %s256 = scalar_select %p255, %s19, 1
      %p257 = scmp.lt.s32.totalorder %s21, 0
      %s258 = scalar_select %p257, %s21, 0
      %s259 = smul.addr %s256, 4
      %s260 = sadd.s32 %s258, %s259
      %s261 = smul.addr %s260, 4
      %s262 = scalar_lea.vmem %s2, %s261
      %p263 = scmp.lt.s32.totalorder %s19, 1
      %s264 = scalar_select %p263, %s19, 1
      %p265 = scmp.lt.s32.totalorder %s20, 0
      %s266 = scalar_select %p265, %s20, 0
      %s267 = smul.addr %s264, 4
      %s268 = sadd.s32 %s266, %s267
      %s269 = smul.addr %s268, 4
      %s270 = scalar_lea.vmem %s3, %s269
      %p272 = scmp.eq.s32.totalorder %s21, 0
      // Predicated region
      $region33: #{tomer_layer.4} parent=31 // pred_check
        %p273 = pneg %p272
      $region34: #{tomer_layer.4} parent=31 // pred_check_branch
        %275 = sbr.rel (%p273) target = $region36
      $region35: #{tomer_layer.4} parent=31 // pred_region
        %vm276 = vcmask 7168
        %277 = vst.msk [vmem:[#allocation2] sm:$0xff] %vm276, -inf
        %278 = vst.msk [vmem:[#allocation2 + $0x8] sm:$0xff] %vm276, -inf
        %279 = vst.msk [vmem:[#allocation2 + $0x10] sm:$0xff] %vm276, -inf
        %280 = vst.msk [vmem:[#allocation2 + $0x18] sm:$0xff] %vm276, -inf
        %281 = vst.msk [vmem:[#allocation3] sm:$0xff] %vm276, 0.0
        %282 = vst.msk [vmem:[#allocation3 + $0x8] sm:$0xff] %vm276, 0.0
        %283 = vst.msk [vmem:[#allocation3 + $0x10] sm:$0xff] %vm276, 0.0
        %284 = vst.msk [vmem:[#allocation3 + $0x18] sm:$0xff] %vm276, 0.0
        %vm285 = vcmask 64512
        %286 = vst.msk [vmem:[#allocation4] sm:$0xff] %vm285, 0.0
        %287 = vst.msk [vmem:[#allocation4 + $0x8] sm:$0xff] %vm285, 0.0
        %288 = vst.msk [vmem:[#allocation4 + $0x10] sm:$0xff] %vm285, 0.0
        %289 = vst.msk [vmem:[#allocation4 + $0x18] sm:$0xff] %vm285, 0.0
      $region36: #{tomer_layer.4} parent=31 // pred_fallthru
        _
      %v290 = vld [vmem:[%s246] sm:$0xf]
      %v291 = vld [vmem:[%s246 + $0x4] sm:$0xf]
      %v292 = vld [vmem:[%s246 + $0x8] sm:$0xf]
      %v293 = vld [vmem:[%s246 + $0xc] sm:$0xf]
      %v294 = vld [vmem:[%s254] sm:$0xf]
      %v295 = vld [vmem:[%s254 + $0x4] sm:$0xf]
      %v296 = vld [vmem:[%s254 + $0x8] sm:$0xf]
      %v297 = vld [vmem:[%s254 + $0xc] sm:$0xf]
      %v298 = vld [vmem:[%s262] sm:$0xf]
      %v299 = vld [vmem:[%s262 + $0x4] sm:$0xf]
      %v300 = vld [vmem:[%s262 + $0x8] sm:$0xf]
      %v301 = vld [vmem:[%s262 + $0xc] sm:$0xf]
      %vm302 = vcmask 64512
      %v304 = vsel %vm302, %v290, 0
      %v307 = vsel %vm302, %v294, 0
      %309 = vmatprep.subr.bf16.mxu0 0
      %310 = vmatpush1.bf16.xpose.msra.mxu0 %v307
      %311 = vmatprep.subr.bf16.mxu0 0
      %312 = vmatpush1.bf16.xpose.msra.mxu0 0
      %313 = vmatprep.subr.bf16.mxu0 0
      %314 = vmatpush1.bf16.xpose.msra.mxu0 0
      %315 = vmatprep.subr.bf16.mxu0 0
      %316 = vmatpush1.bf16.xpose.msra.mxu0 0
      %317 = vmatprep.subr.bf16.mxu0 0
      %318 = vmatpush1.bf16.xpose.msra.mxu0 0
      %319 = vmatprep.subr.bf16.mxu0 0
      %320 = vmatpush1.bf16.xpose.msra.mxu0 0
      %321 = vmatprep.subr.bf16.mxu0 0
      %322 = vmatpush1.bf16.xpose.msra.mxu0 0
      %323 = vmatprep.subr.bf16.mxu0 0
      %324 = vmatpush1.bf16.xpose.msra.mxu0 0
      %325 = vmatprep.subr.bf16.mxu0 0
      %326 = vmatpush1.bf16.xpose.msra.mxu0 0
      %327 = vmatprep.subr.bf16.mxu0 0
      %328 = vmatpush1.bf16.xpose.msra.mxu0 0
      %329 = vmatprep.subr.bf16.mxu0 0
      %330 = vmatpush1.bf16.xpose.msra.mxu0 0
      %331 = vmatprep.subr.bf16.mxu0 0
      %332 = vmatpush1.bf16.xpose.msra.mxu0 0
      %333 = vmatprep.subr.bf16.mxu0 0
      %334 = vmatpush1.bf16.xpose.msra.mxu0 0
      %335 = vmatprep.subr.bf16.mxu0 0
      %336 = vmatpush1.bf16.xpose.msra.mxu0 0
      %337 = vmatprep.subr.bf16.mxu0 0
      %338 = vmatpush1.bf16.xpose.msra.mxu0 0
      %339 = vmatprep.subr.bf16.mxu0 0
      %340 = vmatpush1.bf16.xpose.msra.mxu0 0
      %341 = vmatprep.mubr.bf16.mxu0 0
      %342 = vmatmul.mubr.bf16.gmra.mrb[0].mxu0 %v304
      %v343 = vpop.f32.mrb[0].mxu0
      %v344 = vadd.f32 0.0, %v343
      %v345 = vpop.f32.mrb[0].mxu0
      %v346 = vpop.f32.mrb[0].mxu0
      %v347 = vpop.f32.mrb[0].mxu0
      %348 = vdwg.mxu0
      %v350 = vsel %vm302, %v291, 0
      %v353 = vsel %vm302, %v295, 0
      %355 = vmatprep.subr.bf16.mxu0 0
      %356 = vmatpush1.bf16.xpose.msra.mxu0 %v353
      %357 = vmatprep.subr.bf16.mxu0 0
      %358 = vmatpush1.bf16.xpose.msra.mxu0 0
      %359 = vmatprep.subr.bf16.mxu0 0
      %360 = vmatpush1.bf16.xpose.msra.mxu0 0
      %361 = vmatprep.subr.bf16.mxu0 0
      %362 = vmatpush1.bf16.xpose.msra.mxu0 0
      %363 = vmatprep.subr.bf16.mxu0 0
      %364 = vmatpush1.bf16.xpose.msra.mxu0 0
      %365 = vmatprep.subr.bf16.mxu0 0
      %366 = vmatpush1.bf16.xpose.msra.mxu0 0
      %367 = vmatprep.subr.bf16.mxu0 0
      %368 = vmatpush1.bf16.xpose.msra.mxu0 0
      %369 = vmatprep.subr.bf16.mxu0 0
      %370 = vmatpush1.bf16.xpose.msra.mxu0 0
      %371 = vmatprep.subr.bf16.mxu0 0
      %372 = vmatpush1.bf16.xpose.msra.mxu0 0
      %373 = vmatprep.subr.bf16.mxu0 0
      %374 = vmatpush1.bf16.xpose.msra.mxu0 0
      %375 = vmatprep.subr.bf16.mxu0 0
      %376 = vmatpush1.bf16.xpose.msra.mxu0 0
      %377 = vmatprep.subr.bf16.mxu0 0
      %378 = vmatpush1.bf16.xpose.msra.mxu0 0
      %379 = vmatprep.subr.bf16.mxu0 0
      %380 = vmatpush1.bf16.xpose.msra.mxu0 0
      %381 = vmatprep.subr.bf16.mxu0 0
      %382 = vmatpush1.bf16.xpose.msra.mxu0 0
      %383 = vmatprep.subr.bf16.mxu0 0
      %384 = vmatpush1.bf16.xpose.msra.mxu0 0
      %385 = vmatprep.subr.bf16.mxu0 0
      %386 = vmatpush1.bf16.xpose.msra.mxu0 0
      %387 = vmatprep.mubr.bf16.mxu0 0
      %388 = vmatmul.mubr.bf16.gmra.mrb[0].mxu0 %v350
      %v389 = vpop.f32.mrb[0].mxu0
      %v390 = vadd.f32 0.0, %v389
      %v391 = vpop.f32.mrb[0].mxu0
      %v392 = vpop.f32.mrb[0].mxu0
      %v393 = vpop.f32.mrb[0].mxu0
      %394 = vdwg.mxu0
      %v396 = vsel %vm302, %v292, 0
      %v399 = vsel %vm302, %v296, 0
      %401 = vmatprep.subr.bf16.mxu0 0
      %402 = vmatpush1.bf16.xpose.msra.mxu0 %v399
      %403 = vmatprep.subr.bf16.mxu0 0
      %404 = vmatpush1.bf16.xpose.msra.mxu0 0
      %405 = vmatprep.subr.bf16.mxu0 0
      %406 = vmatpush1.bf16.xpose.msra.mxu0 0
      %407 = vmatprep.subr.bf16.mxu0 0
      %408 = vmatpush1.bf16.xpose.msra.mxu0 0
      %409 = vmatprep.subr.bf16.mxu0 0
      %410 = vmatpush1.bf16.xpose.msra.mxu0 0
      %411 = vmatprep.subr.bf16.mxu0 0
      %412 = vmatpush1.bf16.xpose.msra.mxu0 0
      %413 = vmatprep.subr.bf16.mxu0 0
      %414 = vmatpush1.bf16.xpose.msra.mxu0 0
      %415 = vmatprep.subr.bf16.mxu0 0
      %416 = vmatpush1.bf16.xpose.msra.mxu0 0
      %417 = vmatprep.subr.bf16.mxu0 0
      %418 = vmatpush1.bf16.xpose.msra.mxu0 0
      %419 = vmatprep.subr.bf16.mxu0 0
      %420 = vmatpush1.bf16.xpose.msra.mxu0 0
      %421 = vmatprep.subr.bf16.mxu0 0
      %422 = vmatpush1.bf16.xpose.msra.mxu0 0
      %423 = vmatprep.subr.bf16.mxu0 0
      %424 = vmatpush1.bf16.xpose.msra.mxu0 0
      %425 = vmatprep.subr.bf16.mxu0 0
      %426 = vmatpush1.bf16.xpose.msra.mxu0 0
      %427 = vmatprep.subr.bf16.mxu0 0
      %428 = vmatpush1.bf16.xpose.msra.mxu0 0
      %429 = vmatprep.subr.bf16.mxu0 0
      %430 = vmatpush1.bf16.xpose.msra.mxu0 0
      %431 = vmatprep.subr.bf16.mxu0 0
      %432 = vmatpush1.bf16.xpose.msra.mxu0 0
      %433 = vmatprep.mubr.bf16.mxu0 0
      %434 = vmatmul.mubr.bf16.gmra.mrb[0].mxu0 %v396
      %v435 = vpop.f32.mrb[0].mxu0
      %v436 = vadd.f32 0.0, %v435
      %v437 = vpop.f32.mrb[0].mxu0
      %v438 = vpop.f32.mrb[0].mxu0
      %v439 = vpop.f32.mrb[0].mxu0
      %440 = vdwg.mxu0
      %v442 = vsel %vm302, %v293, 0
      %v445 = vsel %vm302, %v297, 0
      %447 = vmatprep.subr.bf16.mxu0 0
      %448 = vmatpush1.bf16.xpose.msra.mxu0 %v445
      %449 = vmatprep.subr.bf16.mxu0 0
      %450 = vmatpush1.bf16.xpose.msra.mxu0 0
      %451 = vmatprep.subr.bf16.mxu0 0
      %452 = vmatpush1.bf16.xpose.msra.mxu0 0
      %453 = vmatprep.subr.bf16.mxu0 0
      %454 = vmatpush1.bf16.xpose.msra.mxu0 0
      %455 = vmatprep.subr.bf16.mxu0 0
      %456 = vmatpush1.bf16.xpose.msra.mxu0 0
      %457 = vmatprep.subr.bf16.mxu0 0
      %458 = vmatpush1.bf16.xpose.msra.mxu0 0
      %459 = vmatprep.subr.bf16.mxu0 0
      %460 = vmatpush1.bf16.xpose.msra.mxu0 0
      %461 = vmatprep.subr.bf16.mxu0 0
      %462 = vmatpush1.bf16.xpose.msra.mxu0 0
      %463 = vmatprep.subr.bf16.mxu0 0
      %464 = vmatpush1.bf16.xpose.msra.mxu0 0
      %465 = vmatprep.subr.bf16.mxu0 0
      %466 = vmatpush1.bf16.xpose.msra.mxu0 0
      %467 = vmatprep.subr.bf16.mxu0 0
      %468 = vmatpush1.bf16.xpose.msra.mxu0 0
      %469 = vmatprep.subr.bf16.mxu0 0
      %470 = vmatpush1.bf16.xpose.msra.mxu0 0
      %471 = vmatprep.subr.bf16.mxu0 0
      %472 = vmatpush1.bf16.xpose.msra.mxu0 0
      %473 = vmatprep.subr.bf16.mxu0 0
      %474 = vmatpush1.bf16.xpose.msra.mxu0 0
      %475 = vmatprep.subr.bf16.mxu0 0
      %476 = vmatpush1.bf16.xpose.msra.mxu0 0
      %477 = vmatprep.subr.bf16.mxu0 0
      %478 = vmatpush1.bf16.xpose.msra.mxu0 0
      %479 = vmatprep.mubr.bf16.mxu0 0
      %480 = vmatmul.mubr.bf16.gmra.mrb[0].mxu0 %v442
      %v481 = vpop.f32.mrb[0].mxu0
      %v482 = vadd.f32 0.0, %v481
      %v483 = vpop.f32.mrb[0].mxu0
      %v484 = vpop.f32.mrb[0].mxu0
      %v485 = vpop.f32.mrb[0].mxu0
      %486 = vdwg.mxu0
      %v487 = vld [vmem:[#allocation2] sm:$0xff]
      %v488 = vld [vmem:[#allocation2 + $0x8] sm:$0xff]
      %v489 = vld [vmem:[#allocation2 + $0x10] sm:$0xff]
      %v490 = vld [vmem:[#allocation2 + $0x18] sm:$0xff]
      %v491 = vsel %vm302, %v344, -inf
      %492 = vmax.xlane.f32.xlu0 %v491
      %v493 = vpop.xlane.xlu0 %492
      %v494 = vsel %vm302, %v390, -inf
      %495 = vmax.xlane.f32.xlu0 %v494
      %v496 = vpop.xlane.xlu0 %495
      %v497 = vsel %vm302, %v436, -inf
      %498 = vmax.xlane.f32.xlu0 %v497
      %v499 = vpop.xlane.xlu0 %498
      %v500 = vsel %vm302, %v482, -inf
      %501 = vmax.xlane.f32.xlu0 %v500
      %v502 = vpop.xlane.xlu0 %501
      %v503 = vmax.f32 %v487, %v493
      %v504 = vmax.f32 %v488, %v496
      %v505 = vmax.f32 %v489, %v499
      %v506 = vmax.f32 %v490, %v502
      %v507 = vsub.f32 %v487, %v503
      %v508 = vsub.f32 %v488, %v504
      %v509 = vsub.f32 %v489, %v505
      %v510 = vsub.f32 %v490, %v506
      %v511 = vmul.f32 %v507, 1.442695
      %v512 = vpow.pop %v511
      %v513 = vmul.f32 %v508, 1.442695
      %v514 = vpow.pop %v513
      %v515 = vmul.f32 %v509, 1.442695
      %v516 = vpow.pop %v515
      %v517 = vmul.f32 %v510, 1.442695
      %v518 = vpow.pop %v517
      %520 = vset.pattern.permute.xlu0 0
      %521 = vperm.xlu0 %520, %v503
      %v522 = vpop.permute.xlu0 %521
      %525 = vset.pattern.permute.xlu0 0
      %526 = vperm.xlu0 %525, %v504
      %v527 = vpop.permute.xlu0 %526
      %530 = vset.pattern.permute.xlu0 0
      %531 = vperm.xlu0 %530, %v505
      %v532 = vpop.permute.xlu0 %531
      %535 = vset.pattern.permute.xlu0 0
      %536 = vperm.xlu0 %535, %v506
      %v537 = vpop.permute.xlu0 %536
      %v539 = vsub.f32 %v344, %v522
      %v540 = vsub.f32 %v390, %v527
      %v541 = vsub.f32 %v436, %v532
      %v542 = vsub.f32 %v482, %v537
      %v543 = vmul.f32 %v539, 1.442695
      %v544 = vpow.pop %v543
      %v545 = vmul.f32 %v540, 1.442695
      %v546 = vpow.pop %v545
      %v547 = vmul.f32 %v541, 1.442695
      %v548 = vpow.pop %v547
      %v549 = vmul.f32 %v542, 1.442695
      %v550 = vpow.pop %v549
      %v551 = vld [vmem:[#allocation3] sm:$0xff]
      %v552 = vld [vmem:[#allocation3 + $0x8] sm:$0xff]
      %v553 = vld [vmem:[#allocation3 + $0x10] sm:$0xff]
      %v554 = vld [vmem:[#allocation3 + $0x18] sm:$0xff]
      %v555 = vmul.f32 %v512, %v551
      %v556 = vmul.f32 %v514, %v552
      %v557 = vmul.f32 %v516, %v553
      %v558 = vmul.f32 %v518, %v554
      %v559 = vsel %vm302, %v544, 0.0
      %560 = vadd.xlane.f32.xlu0 %v559
      %v561 = vpop.xlane.xlu0 %560
      %v562 = vsel %vm302, %v546, 0.0
      %563 = vadd.xlane.f32.xlu0 %v562
      %v564 = vpop.xlane.xlu0 %563
      %v565 = vsel %vm302, %v548, 0.0
      %566 = vadd.xlane.f32.xlu0 %v565
      %v567 = vpop.xlane.xlu0 %566
      %v568 = vsel %vm302, %v550, 0.0
      %569 = vadd.xlane.f32.xlu0 %v568
      %v570 = vpop.xlane.xlu0 %569
      %v571 = vadd.f32 %v555, %v561
      %v572 = vadd.f32 %v556, %v564
      %v573 = vadd.f32 %v557, %v567
      %v574 = vadd.f32 %v558, %v570
      %vm575 = vcmask 7168
      %576 = vst.msk [vmem:[#allocation3] sm:$0xff] %vm575, %v571
      %577 = vst.msk [vmem:[#allocation3 + $0x8] sm:$0xff] %vm575, %v572
      %578 = vst.msk [vmem:[#allocation3 + $0x10] sm:$0xff] %vm575, %v573
      %579 = vst.msk [vmem:[#allocation3 + $0x18] sm:$0xff] %vm575, %v574
      %v580 = vpack.c.bf16 %v544, %v544
      %v581 = vpack.c.bf16 %v546, %v546
      %v582 = vpack.c.bf16 %v548, %v548
      %v583 = vpack.c.bf16 %v550, %v550
      %v585 = vsel %vm302, %v580, 0
      %vm587 = vcmask 1043456
      %v589 = vsel %vm587, %v298, 0
      %591 = vmatprep.subr.bf16.mxu0 0
      %592 = vmatpush1.bf16.msra.mxu0 %v589
      %593 = vmatprep.subr.bf16.mxu0 0
      %594 = vmatpush1.bf16.msra.mxu0 0
      %595 = vmatprep.subr.bf16.mxu0 0
      %596 = vmatpush1.bf16.msra.mxu0 0
      %597 = vmatprep.subr.bf16.mxu0 0
      %598 = vmatpush1.bf16.msra.mxu0 0
      %599 = vmatprep.subr.bf16.mxu0 0
      %600 = vmatpush1.bf16.msra.mxu0 0
      %601 = vmatprep.subr.bf16.mxu0 0
      %602 = vmatpush1.bf16.msra.mxu0 0
      %603 = vmatprep.subr.bf16.mxu0 0
      %604 = vmatpush1.bf16.msra.mxu0 0
      %605 = vmatprep.subr.bf16.mxu0 0
      %606 = vmatpush1.bf16.msra.mxu0 0
      %607 = vmatprep.subr.bf16.mxu0 0
      %608 = vmatpush1.bf16.msra.mxu0 0
      %609 = vmatprep.subr.bf16.mxu0 0
      %610 = vmatpush1.bf16.msra.mxu0 0
      %611 = vmatprep.subr.bf16.mxu0 0
      %612 = vmatpush1.bf16.msra.mxu0 0
      %613 = vmatprep.subr.bf16.mxu0 0
      %614 = vmatpush1.bf16.msra.mxu0 0
      %615 = vmatprep.subr.bf16.mxu0 0
      %616 = vmatpush1.bf16.msra.mxu0 0
      %617 = vmatprep.subr.bf16.mxu0 0
      %618 = vmatpush1.bf16.msra.mxu0 0
      %619 = vmatprep.subr.bf16.mxu0 0
      %620 = vmatpush1.bf16.msra.mxu0 0
      %621 = vmatprep.subr.bf16.mxu0 0
      %622 = vmatpush1.bf16.msra.mxu0 0
      %623 = vmatprep.mubr.bf16.mxu0 0
      %624 = vmatmul.mubr.bf16.gmra.mrb[0].mxu0 %v585
      %v625 = vpop.f32.mrb[0].mxu0
      %v626 = vadd.f32 0.0, %v625
      %v627 = vpop.f32.mrb[0].mxu0
      %v628 = vpop.f32.mrb[0].mxu0
      %v629 = vpop.f32.mrb[0].mxu0
      %630 = vdwg.mxu0
      %v632 = vsel %vm302, %v581, 0
      %v635 = vsel %vm587, %v299, 0
      %637 = vmatprep.subr.bf16.mxu0 0
      %638 = vmatpush1.bf16.msra.mxu0 %v635
      %639 = vmatprep.subr.bf16.mxu0 0
      %640 = vmatpush1.bf16.msra.mxu0 0
      %641 = vmatprep.subr.bf16.mxu0 0
      %642 = vmatpush1.bf16.msra.mxu0 0
      %643 = vmatprep.subr.bf16.mxu0 0
      %644 = vmatpush1.bf16.msra.mxu0 0
      %645 = vmatprep.subr.bf16.mxu0 0
      %646 = vmatpush1.bf16.msra.mxu0 0
      %647 = vmatprep.subr.bf16.mxu0 0
      %648 = vmatpush1.bf16.msra.mxu0 0
      %649 = vmatprep.subr.bf16.mxu0 0
      %650 = vmatpush1.bf16.msra.mxu0 0
      %651 = vmatprep.subr.bf16.mxu0 0
      %652 = vmatpush1.bf16.msra.mxu0 0
      %653 = vmatprep.subr.bf16.mxu0 0
      %654 = vmatpush1.bf16.msra.mxu0 0
      %655 = vmatprep.subr.bf16.mxu0 0
      %656 = vmatpush1.bf16.msra.mxu0 0
      %657 = vmatprep.subr.bf16.mxu0 0
      %658 = vmatpush1.bf16.msra.mxu0 0
      %659 = vmatprep.subr.bf16.mxu0 0
      %660 = vmatpush1.bf16.msra.mxu0 0
      %661 = vmatprep.subr.bf16.mxu0 0
      %662 = vmatpush1.bf16.msra.mxu0 0
      %663 = vmatprep.subr.bf16.mxu0 0
      %664 = vmatpush1.bf16.msra.mxu0 0
      %665 = vmatprep.subr.bf16.mxu0 0
      %666 = vmatpush1.bf16.msra.mxu0 0
      %667 = vmatprep.subr.bf16.mxu0 0
      %668 = vmatpush1.bf16.msra.mxu0 0
      %669 = vmatprep.mubr.bf16.mxu0 0
      %670 = vmatmul.mubr.bf16.gmra.mrb[0].mxu0 %v632
      %v671 = vpop.f32.mrb[0].mxu0
      %v672 = vadd.f32 0.0, %v671
      %v673 = vpop.f32.mrb[0].mxu0
      %v674 = vpop.f32.mrb[0].mxu0
      %v675 = vpop.f32.mrb[0].mxu0
      %676 = vdwg.mxu0
      %v678 = vsel %vm302, %v582, 0
      %v681 = vsel %vm587, %v300, 0
      %683 = vmatprep.subr.bf16.mxu0 0
      %684 = vmatpush1.bf16.msra.mxu0 %v681
      %685 = vmatprep.subr.bf16.mxu0 0
      %686 = vmatpush1.bf16.msra.mxu0 0
      %687 = vmatprep.subr.bf16.mxu0 0
      %688 = vmatpush1.bf16.msra.mxu0 0
      %689 = vmatprep.subr.bf16.mxu0 0
      %690 = vmatpush1.bf16.msra.mxu0 0
      %691 = vmatprep.subr.bf16.mxu0 0
      %692 = vmatpush1.bf16.msra.mxu0 0
      %693 = vmatprep.subr.bf16.mxu0 0
      %694 = vmatpush1.bf16.msra.mxu0 0
      %695 = vmatprep.subr.bf16.mxu0 0
      %696 = vmatpush1.bf16.msra.mxu0 0
      %697 = vmatprep.subr.bf16.mxu0 0
      %698 = vmatpush1.bf16.msra.mxu0 0
      %699 = vmatprep.subr.bf16.mxu0 0
      %700 = vmatpush1.bf16.msra.mxu0 0
      %701 = vmatprep.subr.bf16.mxu0 0
      %702 = vmatpush1.bf16.msra.mxu0 0
      %703 = vmatprep.subr.bf16.mxu0 0
      %704 = vmatpush1.bf16.msra.mxu0 0
      %705 = vmatprep.subr.bf16.mxu0 0
      %706 = vmatpush1.bf16.msra.mxu0 0
      %707 = vmatprep.subr.bf16.mxu0 0
      %708 = vmatpush1.bf16.msra.mxu0 0
      %709 = vmatprep.subr.bf16.mxu0 0
      %710 = vmatpush1.bf16.msra.mxu0 0
      %711 = vmatprep.subr.bf16.mxu0 0
      %712 = vmatpush1.bf16.msra.mxu0 0
      %713 = vmatprep.subr.bf16.mxu0 0
      %714 = vmatpush1.bf16.msra.mxu0 0
      %715 = vmatprep.mubr.bf16.mxu0 0
      %716 = vmatmul.mubr.bf16.gmra.mrb[0].mxu0 %v678
      %v717 = vpop.f32.mrb[0].mxu0
      %v718 = vadd.f32 0.0, %v717
      %v719 = vpop.f32.mrb[0].mxu0
      %v720 = vpop.f32.mrb[0].mxu0
      %v721 = vpop.f32.mrb[0].mxu0
      %722 = vdwg.mxu0
      %v724 = vsel %vm302, %v583, 0
      %v727 = vsel %vm587, %v301, 0
      %729 = vmatprep.subr.bf16.mxu0 0
      %730 = vmatpush1.bf16.msra.mxu0 %v727
      %731 = vmatprep.subr.bf16.mxu0 0
      %732 = vmatpush1.bf16.msra.mxu0 0
      %733 = vmatprep.subr.bf16.mxu0 0
      %734 = vmatpush1.bf16.msra.mxu0 0
      %735 = vmatprep.subr.bf16.mxu0 0
      %736 = vmatpush1.bf16.msra.mxu0 0
      %737 = vmatprep.subr.bf16.mxu0 0
      %738 = vmatpush1.bf16.msra.mxu0 0
      %739 = vmatprep.subr.bf16.mxu0 0
      %740 = vmatpush1.bf16.msra.mxu0 0
      %741 = vmatprep.subr.bf16.mxu0 0
      %742 = vmatpush1.bf16.msra.mxu0 0
      %743 = vmatprep.subr.bf16.mxu0 0
      %744 = vmatpush1.bf16.msra.mxu0 0
      %745 = vmatprep.subr.bf16.mxu0 0
      %746 = vmatpush1.bf16.msra.mxu0 0
      %747 = vmatprep.subr.bf16.mxu0 0
      %748 = vmatpush1.bf16.msra.mxu0 0
      %749 = vmatprep.subr.bf16.mxu0 0
      %750 = vmatpush1.bf16.msra.mxu0 0
      %751 = vmatprep.subr.bf16.mxu0 0
      %752 = vmatpush1.bf16.msra.mxu0 0
      %753 = vmatprep.subr.bf16.mxu0 0
      %754 = vmatpush1.bf16.msra.mxu0 0
      %755 = vmatprep.subr.bf16.mxu0 0
      %756 = vmatpush1.bf16.msra.mxu0 0
      %757 = vmatprep.subr.bf16.mxu0 0
      %758 = vmatpush1.bf16.msra.mxu0 0
      %759 = vmatprep.subr.bf16.mxu0 0
      %760 = vmatpush1.bf16.msra.mxu0 0
      %761 = vmatprep.mubr.bf16.mxu0 0
      %762 = vmatmul.mubr.bf16.gmra.mrb[0].mxu0 %v724
      %v763 = vpop.f32.mrb[0].mxu0
      %v764 = vadd.f32 0.0, %v763
      %v765 = vpop.f32.mrb[0].mxu0
      %v766 = vpop.f32.mrb[0].mxu0
      %v767 = vpop.f32.mrb[0].mxu0
      %768 = vdwg.mxu0
      %v769 = vld [vmem:[#allocation4] sm:$0xff]
      %v770 = vld [vmem:[#allocation4 + $0x8] sm:$0xff]
      %v771 = vld [vmem:[#allocation4 + $0x10] sm:$0xff]
      %v772 = vld [vmem:[#allocation4 + $0x18] sm:$0xff]
      %774 = vset.pattern.permute.xlu0 0
      %775 = vperm.xlu0 %774, %v512
      %v776 = vpop.permute.xlu0 %775
      %779 = vset.pattern.permute.xlu0 0
      %780 = vperm.xlu0 %779, %v514
      %v781 = vpop.permute.xlu0 %780
      %784 = vset.pattern.permute.xlu0 0
      %785 = vperm.xlu0 %784, %v516
      %v786 = vpop.permute.xlu0 %785
      %789 = vset.pattern.permute.xlu0 0
      %790 = vperm.xlu0 %789, %v518
      %v791 = vpop.permute.xlu0 %790
      %v793 = vmul.f32 %v776, %v769
      %v794 = vmul.f32 %v781, %v770
      %v795 = vmul.f32 %v786, %v771
      %v796 = vmul.f32 %v791, %v772
      %v797 = vadd.f32 %v793, %v626
      %v798 = vadd.f32 %v794, %v672
      %v799 = vadd.f32 %v795, %v718
      %v800 = vadd.f32 %v796, %v764
      %801 = vst.msk [vmem:[#allocation4] sm:$0xff] %vm302, %v797
      %802 = vst.msk [vmem:[#allocation4 + $0x8] sm:$0xff] %vm302, %v798
      %803 = vst.msk [vmem:[#allocation4 + $0x10] sm:$0xff] %vm302, %v799
      %804 = vst.msk [vmem:[#allocation4 + $0x18] sm:$0xff] %vm302, %v800
      %805 = vst.msk [vmem:[#allocation2] sm:$0xff] %vm575, %v503
      %806 = vst.msk [vmem:[#allocation2 + $0x8] sm:$0xff] %vm575, %v504
      %807 = vst.msk [vmem:[#allocation2 + $0x10] sm:$0xff] %vm575, %v505
      %808 = vst.msk [vmem:[#allocation2 + $0x18] sm:$0xff] %vm575, %v506
      // Predicated region
      $region37: #{tomer_layer.4} parent=31 // pred_check
        %p809 = pneg %p272
      $region38: #{tomer_layer.4} parent=31 // pred_check_branch
        %811 = sbr.rel (%p809) target = $region40
      $region39: #{tomer_layer.4} parent=31 // pred_region
        %v812 = vld [vmem:[#allocation3] sm:$0xff]
        %v813 = vld [vmem:[#allocation3 + $0x8] sm:$0xff]
        %v814 = vld [vmem:[#allocation3 + $0x10] sm:$0xff]
        %v815 = vld [vmem:[#allocation3 + $0x18] sm:$0xff]
        %v816 = vrcp.pop %v812
        %v817 = vrcp.pop %v813
        %v818 = vrcp.pop %v814
        %v819 = vrcp.pop %v815
        %v820 = vld [vmem:[#allocation4] sm:$0xff]
        %v821 = vld [vmem:[#allocation4 + $0x8] sm:$0xff]
        %v822 = vld [vmem:[#allocation4 + $0x10] sm:$0xff]
        %v823 = vld [vmem:[#allocation4 + $0x18] sm:$0xff]
        %825 = vset.pattern.permute.xlu0 0
        %826 = vperm.xlu0 %825, %v816
        %v827 = vpop.permute.xlu0 %826
        %830 = vset.pattern.permute.xlu0 0
        %831 = vperm.xlu0 %830, %v817
        %v832 = vpop.permute.xlu0 %831
        %835 = vset.pattern.permute.xlu0 0
        %836 = vperm.xlu0 %835, %v818
        %v837 = vpop.permute.xlu0 %836
        %840 = vset.pattern.permute.xlu0 0
        %841 = vperm.xlu0 %840, %v819
        %v842 = vpop.permute.xlu0 %841
        %v844 = vmul.f32 %v820, %v827
        %v845 = vmul.f32 %v821, %v832
        %v846 = vmul.f32 %v822, %v837
        %v847 = vmul.f32 %v823, %v842
        %v848 = vpack.c.bf16 %v844, %v844
        %v849 = vpack.c.bf16 %v845, %v845
        %v850 = vpack.c.bf16 %v846, %v846
        %v851 = vpack.c.bf16 %v847, %v847
        %vm852 = vcmask 60416
        %853 = vst.msk [vmem:[%s270] sm:$0xf] %vm852, %v848
        %854 = vst.msk [vmem:[%s270 + $0x4] sm:$0xf] %vm852, %v849
        %855 = vst.msk [vmem:[%s270 + $0x8] sm:$0xf] %vm852, %v850
        %856 = vst.msk [vmem:[%s270 + $0xc] sm:$0xf] %vm852, %v851
      $region40: #{tomer_layer.4} parent=31 // pred_fallthru
        _
      %p857 = scmp.lt.s32.totalorder %s19, 1
      %s858 = scalar_select %p857, %s19, 1
      %p859 = scmp.lt.s32.totalorder %s20, 0
      %s860 = scalar_select %p859, %s20, 0
      %s861 = smul.addr %s858, 4
      %s862 = sadd.s32 %s860, %s861
      %s863 = smul.addr %s862, 4
      %s864 = scalar_lea.vmem %s3, %s863
      // Predicated region
      $region41: #{tomer_layer.4} parent=31 // pred_check
        %p865 = pneg %p137
      $region42: #{tomer_layer.4} parent=31 // pred_check_branch
        %867 = sbr.rel (%p865) target = $region44
      $region43: #{tomer_layer.4} parent=31 // pred_region
        _
      $region44: #{tomer_layer.4} parent=31 // pred_fallthru
        _
    $region32: #{tomer_layer.4} parent=5 // pred_fallthru
      _
    %p868 = scmp.le.s32.totalorder 2, %s9
    // Predicated region
    $region45: #{tomer_layer.4} parent=5 // pred_check
      %p869 = pneg %p868
    $region46: #{tomer_layer.4} parent=5 // pred_check_branch
      %871 = sbr.rel (%p869) target = $region48
    $region47: #{tomer_layer.4} parent=5 // pred_region
      %s872 = ssub.s32 %s9, 2
      // Predicated region
      $region49: #{tomer_layer.4} parent=47 // pred_check
        %p873 = pneg %p143
      $region50: #{tomer_layer.4} parent=47 // pred_check_branch
        %875 = sbr.rel (%p873) target = $region52
      $region51: #{tomer_layer.4} parent=47 // pred_region
        %p876 = scmp.lt.s32.totalorder %s22, 1
        %s877 = scalar_select %p876, %s22, 1
        %p878 = scmp.lt.s32.totalorder %s23, 0
        %s879 = scalar_select %p878, %s23, 0
        %s880 = smul.addr %s877, 4
        %s881 = sadd.s32 %s879, %s880
        %s882 = smul.addr %s881, 4
        %s883 = scalar_lea.vmem %s3, %s882
      $region52: #{tomer_layer.4} parent=47 // pred_fallthru
        _
    $region48: #{tomer_layer.4} parent=5 // pred_fallthru
      _
  $region6: #{tomer_layer.4} parent=0 // loop_footer
    %s13 = sadd.s32 1, %s9
  $region7: #{tomer_layer.4} parent=0 // loop_footer_branch
    %8 = sbr.rel target = $region3
  $region8: #{tomer_layer.4} parent=0 // loop_exit
    _

// kernel: tomer_layer.5
$region0: #{tomer_layer.5}
  #allocation0 [shape = 'u32[]', space=smem, size = 0x4, offset = 0x4, fixed_abs, tag = 'smem constant byte address 0x4 - core index']
  #allocation1 [shape = 'u32[144,128]{1,0:T(1,128)}', space=vmem, size = 0x12000, scoped, tag = 'internal scratch']
  #allocation2 [shape = 'f32[8,32]{1,0:T(8,128)}', space=vmem, size = 0x1000, scoped, tag = 'scratch operand']
  #allocation3 [shape = 'bf16[8,32]{1,0:T(8,128)(2,1)}', space=vmem, size = 0x800, scoped, tag = 'scratch operand']
  #allocation4 [shape = 'f32[8,32]{1,0:T(8,128)}', space=vmem, size = 0x1000, scoped, tag = 'scratch operand']
  %s0 = inlined_call_operand.vmem [shape: f32[2,8,32], index: 0, kind: input, shape index: {}]
  %s1 = inlined_call_operand.vmem [shape: bf16[2,4,8,8], index: 1, kind: input, shape index: {}]
  %s2 = inlined_call_operand.vmem [shape: bf16[4,8,32], index: 2, kind: input, shape index: {}]
  %s3 = inlined_call_operand.vmem [shape: f32[1,32], index: 3, kind: input, shape index: {}]
  %s4 = inlined_call_operand.vmem [shape: f32[1,32], index: 4, kind: input, shape index: {}]
  %s5 = inlined_call_operand.vmem [shape: f32[1,32], index: 5, kind: input, shape index: {}]
  %s6 = inlined_call_operand.vmem [shape: f32[1,32], index: 6, kind: input, shape index: {}]
  %s7 = inlined_call_operand.vmem [shape: bf16[32,128], index: 7, kind: input, shape index: {}]
  %s8 = inlined_call_operand.vmem [shape: f32[1,128], index: 8, kind: input, shape index: {}]
  %s9 = inlined_call_operand.vmem [shape: bf16[32,128], index: 9, kind: input, shape index: {}]
  %s10 = inlined_call_operand.vmem [shape: f32[1,128], index: 10, kind: input, shape index: {}]
  %s11 = inlined_call_operand.vmem [shape: bf16[128,32], index: 11, kind: input, shape index: {}]
  %s12 = inlined_call_operand.vmem [shape: f32[1,32], index: 12, kind: input, shape index: {}]
  %s13 = inlined_call_operand.vmem [shape: f32[1,32], index: 13, kind: input, shape index: {}]
  %s14 = inlined_call_operand.hbm [shape: f32[2,8,32], index: 14, kind: output, shape index: {}]
  %s15 = sld [smem:[#allocation0]]
  $region97: #{tomer_layer.5} parent=0
    _
  %s17 = ssub.s32 1, %s15
  %s18 = scalar_select 0, %s17, %s15
  $region1: #{tomer_layer.5} parent=0
    #allocation5 [shape = 'u8[8192]{0}', space=vmem, size = 0x2000, scoped, tag = 'output window, operand 0']
    #allocation6 [shape = 's32[2]{0}', space=sflag, size = 0x8, scoped, tag = 'scoped memory for tomer_layer.5']
    %19 = vsyncpa [#allocation6], 0
    %s20 = scalar_lea.sflag [#allocation6], 1
    %21 = vsyncpa %s20, 0
    loop: start=0, step=1, limit=4
    $region2: #{tomer_layer.5} parent=1 // loop_pre_header
      _
    $region3: #{tomer_layer.5} parent=1 // loop_header
      %s23 = sphi 0, %s27
      %p24 = scmp.ge.s32.totalorder %s23, 4
      %s30 = sphi 0, %s49
      %s31 = sphi 0, %s45
      %s32 = sphi 0, %s41
      %s33 = sphi 0, %s30
      %s34 = sphi 0, %s31
      %s35 = sphi 0, %s32
      %s36 = sphi 0, %s33
      %s37 = sphi 0, %s34
      %s38 = sphi 0, %s35
      %s54 = sphi 0, %s56
      %s57 = sphi 0, %s54
      %s58 = sphi 0, %s57
      %s74 = sphi 0, %s58
      %s82 = sphi 0, %s84
      %s85 = sphi 0, %s82
      %s86 = sphi 0, %s85
      %s102 = sphi 0, %s86
      %s106 = sphi 0, %s106
      %s108 = sphi 0, %s106
      %s109 = sphi 0, %s108
      %s123 = sphi 0, %s109
      %s127 = sphi 0, %s127
      %s129 = sphi 0, %s127
      %s130 = sphi 0, %s129
      %s144 = sphi 0, %s130
      %s148 = sphi 0, %s148
      %s150 = sphi 0, %s148
      %s151 = sphi 0, %s150
      %s165 = sphi 0, %s151
      %s169 = sphi 0, %s169
      %s171 = sphi 0, %s169
      %s172 = sphi 0, %s171
      %s186 = sphi 0, %s172
      %s190 = sphi 0, %s190
      %s192 = sphi 0, %s190
      %s193 = sphi 0, %s192
      %s207 = sphi 0, %s193
      %s213 = sphi 0, %s215
      %s216 = sphi 0, %s213
      %s217 = sphi 0, %s216
      %s233 = sphi 0, %s217
      %s239 = sphi 0, %s241
      %s242 = sphi 0, %s239
      %s243 = sphi 0, %s242
      %s259 = sphi 0, %s243
      %s265 = sphi 0, %s267
      %s268 = sphi 0, %s265
      %s269 = sphi 0, %s268
      %s285 = sphi 0, %s269
      %s291 = sphi 0, %s293
      %s294 = sphi 0, %s291
      %s295 = sphi 0, %s294
      %s311 = sphi 0, %s295
      %s317 = sphi 0, %s319
      %s320 = sphi 0, %s317
      %s321 = sphi 0, %s320
      %s337 = sphi 0, %s321
      %s341 = sphi 0, %s341
      %s343 = sphi 0, %s341
      %s344 = sphi 0, %s343
      %s358 = sphi 0, %s344
      %s362 = sphi 0, %s362
      %s364 = sphi 0, %s362
      %s365 = sphi 0, %s364
      %s379 = sphi 0, %s365
      %s387 = sphi 0, %s389
      %s390 = sphi 0, %s387
      %s391 = sphi 0, %s390
      %s407 = sphi 0, %s391
    $region4: #{tomer_layer.5} parent=1 // loop_header_branch
      %26 = sbr.rel (%p24) target = $region8
    $region5: #{tomer_layer.5} parent=1 // loop_body
      %s28 = ssub.s32 %s23, 1
      %s29 = ssub.s32 %s23, 2
      %s39 = sadd.s32 1, %s32
      %p40 = scmp.ge.s32.totalorder %s39, 1
      %s41 = scalar_select %p40, 0, %s39
      %s42 = sadd.s32 1, %s31
      %s43 = scalar_select %p40, %s42, %s31
      %p44 = scmp.ge.s32.totalorder %s43, 1
      %s45 = scalar_select %p44, 0, %s43
      %s46 = sadd.s32 1, %s30
      %s47 = scalar_select %p44, %s46, %s30
      %p48 = scmp.ge.s32.totalorder %s47, 2
      %s49 = scalar_select %p48, 0, %s47
      %s50 = ssub.s32 %s30, %s49
      %s51 = ssub.s32 %s31, %s45
      %s52 = sor.u32 %s50, %s51
      %p53 = scmp.eq.s32.totalorder %s52, 0
      %s55 = sadd.s32 %s54, 1
      %s56 = scalar_select %p53, %s54, %s55
      %p59 = pneg %p53
      %p60 = scmp.eq.s32.totalorder %s23, 1
      %p61 = por %p59, %p60
      %p62 = scmp.ne.s32.totalorder %s54, %s57
      %p63 = scmp.eq.s32.totalorder %s23, 0
      %p64 = por %p62, %p63
      %p65 = scmp.ne.s32.totalorder %s54, %s57
      %p66 = scmp.eq.s32.totalorder %s28, 1
      %p67 = por %p65, %p66
      %p68 = scmp.ne.s32.totalorder %s57, %s58
      %p69 = scmp.eq.s32.totalorder %s28, 0
      %p70 = por %p68, %p69
      %p71 = scmp.ne.s32.totalorder %s57, %s58
      %p72 = scmp.eq.s32.totalorder %s29, 1
      %p73 = por %p71, %p72
      %p75 = scmp.ne.s32.totalorder %s58, %s74
      %p76 = scmp.eq.s32.totalorder %s29, 0
      %p77 = por %p75, %p76
      %s78 = ssub.s32 %s30, %s49
      %s79 = ssub.s32 %s31, %s45
      %s80 = sor.u32 %s78, %s79
      %p81 = scmp.eq.s32.totalorder %s80, 0
      %s83 = sadd.s32 %s82, 1
      %s84 = scalar_select %p81, %s82, %s83
      %p87 = pneg %p81
      %p88 = scmp.eq.s32.totalorder %s23, 1
      %p89 = por %p87, %p88
      %p90 = scmp.ne.s32.totalorder %s82, %s85
      %p91 = scmp.eq.s32.totalorder %s23, 0
      %p92 = por %p90, %p91
      %p93 = scmp.ne.s32.totalorder %s82, %s85
      %p94 = scmp.eq.s32.totalorder %s28, 1
      %p95 = por %p93, %p94
      %p96 = scmp.ne.s32.totalorder %s85, %s86
      %p97 = scmp.eq.s32.totalorder %s28, 0
      %p98 = por %p96, %p97
      %p99 = scmp.ne.s32.totalorder %s85, %s86
      %p100 = scmp.eq.s32.totalorder %s29, 1
      %p101 = por %p99, %p100
      %p103 = scmp.ne.s32.totalorder %s86, %s102
      %p104 = scmp.eq.s32.totalorder %s29, 0
      %p105 = por %p103, %p104
      %s107 = sadd.s32 %s106, 1
      %p110 = scmp.eq.s32.totalorder %s23, 1
      %p111 = scmp.ne.s32.totalorder %s106, %s108
      %p112 = scmp.eq.s32.totalorder %s23, 0
      %p113 = por %p111, %p112
      %p114 = scmp.ne.s32.totalorder %s106, %s108
      %p115 = scmp.eq.s32.totalorder %s28, 1
      %p116 = por %p114, %p115
      %p117 = scmp.ne.s32.totalorder %s108, %s109
      %p118 = scmp.eq.s32.totalorder %s28, 0
      %p119 = por %p117, %p118
      %p120 = scmp.ne.s32.totalorder %s108, %s109
      %p121 = scmp.eq.s32.totalorder %s29, 1
      %p122 = por %p120, %p121
      %p124 = scmp.ne.s32.totalorder %s109, %s123
      %p125 = scmp.eq.s32.totalorder %s29, 0
      %p126 = por %p124, %p125
      %s128 = sadd.s32 %s127, 1
      %p131 = scmp.eq.s32.totalorder %s23, 1
      %p132 = scmp.ne.s32.totalorder %s127, %s129
      %p133 = scmp.eq.s32.totalorder %s23, 0
      %p134 = por %p132, %p133
      %p135 = scmp.ne.s32.totalorder %s127, %s129
      %p136 = scmp.eq.s32.totalorder %s28, 1
      %p137 = por %p135, %p136
      %p138 = scmp.ne.s32.totalorder %s129, %s130
      %p139 = scmp.eq.s32.totalorder %s28, 0
      %p140 = por %p138, %p139
      %p141 = scmp.ne.s32.totalorder %s129, %s130
      %p142 = scmp.eq.s32.totalorder %s29, 1
      %p143 = por %p141, %p142
      %p145 = scmp.ne.s32.totalorder %s130, %s144
      %p146 = scmp.eq.s32.totalorder %s29, 0
      %p147 = por %p145, %p146
      %s149 = sadd.s32 %s148, 1
      %p152 = scmp.eq.s32.totalorder %s23, 1
      %p153 = scmp.ne.s32.totalorder %s148, %s150
      %p154 = scmp.eq.s32.totalorder %s23, 0
      %p155 = por %p153, %p154
      %p156 = scmp.ne.s32.totalorder %s148, %s150
      %p157 = scmp.eq.s32.totalorder %s28, 1
      %p158 = por %p156, %p157
      %p159 = scmp.ne.s32.totalorder %s150, %s151
      %p160 = scmp.eq.s32.totalorder %s28, 0
      %p161 = por %p159, %p160
      %p162 = scmp.ne.s32.totalorder %s150, %s151
      %p163 = scmp.eq.s32.totalorder %s29, 1
      %p164 = por %p162, %p163
      %p166 = scmp.ne.s32.totalorder %s151, %s165
      %p167 = scmp.eq.s32.totalorder %s29, 0
      %p168 = por %p166, %p167
      %s170 = sadd.s32 %s169, 1
      %p173 = scmp.eq.s32.totalorder %s23, 1
      %p174 = scmp.ne.s32.totalorder %s169, %s171
      %p175 = scmp.eq.s32.totalorder %s23, 0
      %p176 = por %p174, %p175
      %p177 = scmp.ne.s32.totalorder %s169, %s171
      %p178 = scmp.eq.s32.totalorder %s28, 1
      %p179 = por %p177, %p178
      %p180 = scmp.ne.s32.totalorder %s171, %s172
      %p181 = scmp.eq.s32.totalorder %s28, 0
      %p182 = por %p180, %p181
      %p183 = scmp.ne.s32.totalorder %s171, %s172
      %p184 = scmp.eq.s32.totalorder %s29, 1
      %p185 = por %p183, %p184
      %p187 = scmp.ne.s32.totalorder %s172, %s186
      %p188 = scmp.eq.s32.totalorder %s29, 0
      %p189 = por %p187, %p188
      %s191 = sadd.s32 %s190, 1
      %p194 = scmp.eq.s32.totalorder %s23, 1
      %p195 = scmp.ne.s32.totalorder %s190, %s192
      %p196 = scmp.eq.s32.totalorder %s23, 0
      %p197 = por %p195, %p196
      %p198 = scmp.ne.s32.totalorder %s190, %s192
      %p199 = scmp.eq.s32.totalorder %s28, 1
      %p200 = por %p198, %p199
      %p201 = scmp.ne.s32.totalorder %s192, %s193
      %p202 = scmp.eq.s32.totalorder %s28, 0
      %p203 = por %p201, %p202
      %p204 = scmp.ne.s32.totalorder %s192, %s193
      %p205 = scmp.eq.s32.totalorder %s29, 1
      %p206 = por %p204, %p205
      %p208 = scmp.ne.s32.totalorder %s193, %s207
      %p209 = scmp.eq.s32.totalorder %s29, 0
      %p210 = por %p208, %p209
      %s211 = ssub.s32 %s32, %s41
      %p212 = scmp.eq.s32.totalorder %s211, 0
      %s214 = sadd.s32 %s213, 1
      %s215 = scalar_select %p212, %s213, %s214
      %p218 = pneg %p212
      %p219 = scmp.eq.s32.totalorder %s23, 1
      %p220 = por %p218, %p219
      %p221 = scmp.ne.s32.totalorder %s213, %s216
      %p222 = scmp.eq.s32.totalorder %s23, 0
      %p223 = por %p221, %p222
      %p224 = scmp.ne.s32.totalorder %s213, %s216
      %p225 = scmp.eq.s32.totalorder %s28, 1
      %p226 = por %p224, %p225
      %p227 = scmp.ne.s32.totalorder %s216, %s217
      %p228 = scmp.eq.s32.totalorder %s28, 0
      %p229 = por %p227, %p228
      %p230 = scmp.ne.s32.totalorder %s216, %s217
      %p231 = scmp.eq.s32.totalorder %s29, 1
      %p232 = por %p230, %p231
      %p234 = scmp.ne.s32.totalorder %s217, %s233
      %p235 = scmp.eq.s32.totalorder %s29, 0
      %p236 = por %p234, %p235
      %s237 = ssub.s32 %s32, %s41
      %p238 = scmp.eq.s32.totalorder %s237, 0
      %s240 = sadd.s32 %s239, 1
      %s241 = scalar_select %p238, %s239, %s240
      %p244 = pneg %p238
      %p245 = scmp.eq.s32.totalorder %s23, 1
      %p246 = por %p244, %p245
      %p247 = scmp.ne.s32.totalorder %s239, %s242
      %p248 = scmp.eq.s32.totalorder %s23, 0
      %p249 = por %p247, %p248
      %p250 = scmp.ne.s32.totalorder %s239, %s242
      %p251 = scmp.eq.s32.totalorder %s28, 1
      %p252 = por %p250, %p251
      %p253 = scmp.ne.s32.totalorder %s242, %s243
      %p254 = scmp.eq.s32.totalorder %s28, 0
      %p255 = por %p253, %p254
      %p256 = scmp.ne.s32.totalorder %s242, %s243
      %p257 = scmp.eq.s32.totalorder %s29, 1
      %p258 = por %p256, %p257
      %p260 = scmp.ne.s32.totalorder %s243, %s259
      %p261 = scmp.eq.s32.totalorder %s29, 0
      %p262 = por %p260, %p261
      %s263 = ssub.s32 %s32, %s41
      %p264 = scmp.eq.s32.totalorder %s263, 0
      %s266 = sadd.s32 %s265, 1
      %s267 = scalar_select %p264, %s265, %s266
      %p270 = pneg %p264
      %p271 = scmp.eq.s32.totalorder %s23, 1
      %p272 = por %p270, %p271
      %p273 = scmp.ne.s32.totalorder %s265, %s268
      %p274 = scmp.eq.s32.totalorder %s23, 0
      %p275 = por %p273, %p274
      %p276 = scmp.ne.s32.totalorder %s265, %s268
      %p277 = scmp.eq.s32.totalorder %s28, 1
      %p278 = por %p276, %p277
      %p279 = scmp.ne.s32.totalorder %s268, %s269
      %p280 = scmp.eq.s32.totalorder %s28, 0
      %p281 = por %p279, %p280
      %p282 = scmp.ne.s32.totalorder %s268, %s269
      %p283 = scmp.eq.s32.totalorder %s29, 1
      %p284 = por %p282, %p283
      %p286 = scmp.ne.s32.totalorder %s269, %s285
      %p287 = scmp.eq.s32.totalorder %s29, 0
      %p288 = por %p286, %p287
      %s289 = ssub.s32 %s32, %s41
      %p290 = scmp.eq.s32.totalorder %s289, 0
      %s292 = sadd.s32 %s291, 1
      %s293 = scalar_select %p290, %s291, %s292
      %p296 = pneg %p290
      %p297 = scmp.eq.s32.totalorder %s23, 1
      %p298 = por %p296, %p297
      %p299 = scmp.ne.s32.totalorder %s291, %s294
      %p300 = scmp.eq.s32.totalorder %s23, 0
      %p301 = por %p299, %p300
      %p302 = scmp.ne.s32.totalorder %s291, %s294
      %p303 = scmp.eq.s32.totalorder %s28, 1
      %p304 = por %p302, %p303
      %p305 = scmp.ne.s32.totalorder %s294, %s295
      %p306 = scmp.eq.s32.totalorder %s28, 0
      %p307 = por %p305, %p306
      %p308 = scmp.ne.s32.totalorder %s294, %s295
      %p309 = scmp.eq.s32.totalorder %s29, 1
      %p310 = por %p308, %p309
      %p312 = scmp.ne.s32.totalorder %s295, %s311
      %p313 = scmp.eq.s32.totalorder %s29, 0
      %p314 = por %p312, %p313
      %s315 = ssub.s32 %s32, %s41
      %p316 = scmp.eq.s32.totalorder %s315, 0
      %s318 = sadd.s32 %s317, 1
      %s319 = scalar_select %p316, %s317, %s318
      %p322 = pneg %p316
      %p323 = scmp.eq.s32.totalorder %s23, 1
      %p324 = por %p322, %p323
      %p325 = scmp.ne.s32.totalorder %s317, %s320
      %p326 = scmp.eq.s32.totalorder %s23, 0
      %p327 = por %p325, %p326
      %p328 = scmp.ne.s32.totalorder %s317, %s320
      %p329 = scmp.eq.s32.totalorder %s28, 1
      %p330 = por %p328, %p329
      %p331 = scmp.ne.s32.totalorder %s320, %s321
      %p332 = scmp.eq.s32.totalorder %s28, 0
      %p333 = por %p331, %p332
      %p334 = scmp.ne.s32.totalorder %s320, %s321
      %p335 = scmp.eq.s32.totalorder %s29, 1
      %p336 = por %p334, %p335
      %p338 = scmp.ne.s32.totalorder %s321, %s337
      %p339 = scmp.eq.s32.totalorder %s29, 0
      %p340 = por %p338, %p339
      %s342 = sadd.s32 %s341, 1
      %p345 = scmp.eq.s32.totalorder %s23, 1
      %p346 = scmp.ne.s32.totalorder %s341, %s343
      %p347 = scmp.eq.s32.totalorder %s23, 0
      %p348 = por %p346, %p347
      %p349 = scmp.ne.s32.totalorder %s341, %s343
      %p350 = scmp.eq.s32.totalorder %s28, 1
      %p351 = por %p349, %p350
      %p352 = scmp.ne.s32.totalorder %s343, %s344
      %p353 = scmp.eq.s32.totalorder %s28, 0
      %p354 = por %p352, %p353
      %p355 = scmp.ne.s32.totalorder %s343, %s344
      %p356 = scmp.eq.s32.totalorder %s29, 1
      %p357 = por %p355, %p356
      %p359 = scmp.ne.s32.totalorder %s344, %s358
      %p360 = scmp.eq.s32.totalorder %s29, 0
      %p361 = por %p359, %p360
      %s363 = sadd.s32 %s362, 1
      %p366 = scmp.eq.s32.totalorder %s23, 1
      %p367 = scmp.ne.s32.totalorder %s362, %s364
      %p368 = scmp.eq.s32.totalorder %s23, 0
      %p369 = por %p367, %p368
      %p370 = scmp.ne.s32.totalorder %s362, %s364
      %p371 = scmp.eq.s32.totalorder %s28, 1
      %p372 = por %p370, %p371
      %p373 = scmp.ne.s32.totalorder %s364, %s365
      %p374 = scmp.eq.s32.totalorder %s28, 0
      %p375 = por %p373, %p374
      %p376 = scmp.ne.s32.totalorder %s364, %s365
      %p377 = scmp.eq.s32.totalorder %s29, 1
      %p378 = por %p376, %p377
      %p380 = scmp.ne.s32.totalorder %s365, %s379
      %p381 = scmp.eq.s32.totalorder %s29, 0
      %p382 = por %p380, %p381
      %s383 = ssub.s32 %s30, %s49
      %s384 = ssub.s32 %s31, %s45
      %s385 = sor.u32 %s383, %s384
      %p386 = scmp.eq.s32.totalorder %s385, 0
      %s388 = sadd.s32 %s387, 1
      %s389 = scalar_select %p386, %s387, %s388
      %p392 = pneg %p386
      %p393 = scmp.eq.s32.totalorder %s23, 1
      %p394 = por %p392, %p393
      %p395 = scmp.ne.s32.totalorder %s387, %s390
      %p396 = scmp.eq.s32.totalorder %s23, 0
      %p397 = por %p395, %p396
      %p398 = scmp.ne.s32.totalorder %s387, %s390
      %p399 = scmp.eq.s32.totalorder %s28, 1
      %p400 = por %p398, %p399
      %p401 = scmp.ne.s32.totalorder %s390, %s391
      %p402 = scmp.eq.s32.totalorder %s28, 0
      %p403 = por %p401, %p402
      %p404 = scmp.ne.s32.totalorder %s390, %s391
      %p405 = scmp.eq.s32.totalorder %s29, 1
      %p406 = por %p404, %p405
      %p408 = scmp.ne.s32.totalorder %s391, %s407
      %p409 = scmp.eq.s32.totalorder %s29, 0
      %p410 = por %p408, %p409
      %p411 = scmp.le.s32.totalorder 1, %s23
      %p412 = scmp.lt.s32.totalorder %s23, 3
      %p413 = pnand %p411, %p412
      %p414 = pneg %p413
      // Predicated region
      $region9: #{tomer_layer.5} parent=5 // pred_check
        _
      $region10: #{tomer_layer.5} parent=5 // pred_check_branch
        %416 = sbr.rel (%p413) target = $region12
      $region11: #{tomer_layer.5} parent=5 // pred_region
        %s417 = ssub.s32 %s23, 1
        // Predicated region
        $region13: #{tomer_layer.5} parent=11 // pred_check
          %p418 = pneg %p119
        $region14: #{tomer_layer.5} parent=11 // pred_check_branch
          %420 = sbr.rel (%p418) target = $region16
        $region15: #{tomer_layer.5} parent=11 // pred_region
          _
        $region16: #{tomer_layer.5} parent=11 // pred_fallthru
          _
        // Predicated region
        $region17: #{tomer_layer.5} parent=11 // pred_check
          %p421 = pneg %p140
        $region18: #{tomer_layer.5} parent=11 // pred_check_branch
          %423 = sbr.rel (%p421) target = $region20
        $region19: #{tomer_layer.5} parent=11 // pred_region
          _
        $region20: #{tomer_layer.5} parent=11 // pred_fallthru
          _
        // Predicated region
        $region21: #{tomer_layer.5} parent=11 // pred_check
          %p424 = pneg %p161
        $region22: #{tomer_layer.5} parent=11 // pred_check_branch
          %426 = sbr.rel (%p424) target = $region24
        $region23: #{tomer_layer.5} parent=11 // pred_region
          _
        $region24: #{tomer_layer.5} parent=11 // pred_fallthru
          _
        // Predicated region
        $region25: #{tomer_layer.5} parent=11 // pred_check
          %p427 = pneg %p182
        $region26: #{tomer_layer.5} parent=11 // pred_check_branch
          %429 = sbr.rel (%p427) target = $region28
        $region27: #{tomer_layer.5} parent=11 // pred_region
          _
        $region28: #{tomer_layer.5} parent=11 // pred_fallthru
          _
        // Predicated region
        $region29: #{tomer_layer.5} parent=11 // pred_check
          %p430 = pneg %p203
        $region30: #{tomer_layer.5} parent=11 // pred_check_branch
          %432 = sbr.rel (%p430) target = $region32
        $region31: #{tomer_layer.5} parent=11 // pred_region
          _
        $region32: #{tomer_layer.5} parent=11 // pred_fallthru
          _
        // Predicated region
        $region33: #{tomer_layer.5} parent=11 // pred_check
          %p433 = pneg %p229
        $region34: #{tomer_layer.5} parent=11 // pred_check_branch
          %435 = sbr.rel (%p433) target = $region36
        $region35: #{tomer_layer.5} parent=11 // pred_region
          %p436 = scmp.lt.s32.totalorder %s35, 0
          %s437 = scalar_select %p436, %s35, 0
          %s438 = smul.addr %s437, 4
          %s439 = scalar_lea.vmem %s7, %s438
        $region36: #{tomer_layer.5} parent=11 // pred_fallthru
          _
        // Predicated region
        $region37: #{tomer_layer.5} parent=11 // pred_check
          %p440 = pneg %p255
        $region38: #{tomer_layer.5} parent=11 // pred_check_branch
          %442 = sbr.rel (%p440) target = $region40
        $region39: #{tomer_layer.5} parent=11 // pred_region
          %p443 = scmp.lt.s32.totalorder %s35, 0
          %s444 = scalar_select %p443, %s35, 0
          %s445 = scalar_lea.vmem %s8, %s444
        $region40: #{tomer_layer.5} parent=11 // pred_fallthru
          _
        // Predicated region
        $region41: #{tomer_layer.5} parent=11 // pred_check
          %p446 = pneg %p281
        $region42: #{tomer_layer.5} parent=11 // pred_check_branch
          %448 = sbr.rel (%p446) target = $region44
        $region43: #{tomer_layer.5} parent=11 // pred_region
          %p449 = scmp.lt.s32.totalorder %s35, 0
          %s450 = scalar_select %p449, %s35, 0
          %s451 = smul.addr %s450, 4
          %s452 = scalar_lea.vmem %s9, %s451
        $region44: #{tomer_layer.5} parent=11 // pred_fallthru
          _
        // Predicated region
        $region45: #{tomer_layer.5} parent=11 // pred_check
          %p453 = pneg %p307
        $region46: #{tomer_layer.5} parent=11 // pred_check_branch
          %455 = sbr.rel (%p453) target = $region48
        $region47: #{tomer_layer.5} parent=11 // pred_region
          %p456 = scmp.lt.s32.totalorder %s35, 0
          %s457 = scalar_select %p456, %s35, 0
          %s458 = scalar_lea.vmem %s10, %s457
        $region48: #{tomer_layer.5} parent=11 // pred_fallthru
          _
        // Predicated region
        $region49: #{tomer_layer.5} parent=11 // pred_check
          %p459 = pneg %p333
        $region50: #{tomer_layer.5} parent=11 // pred_check_branch
          %461 = sbr.rel (%p459) target = $region52
        $region51: #{tomer_layer.5} parent=11 // pred_region
          %s462 = smul.u32 16, %s35
          %p463 = scmp.lt.s32.totalorder %s462, 15
          %s464 = scalar_select %p463, %s462, 15
          %s465 = smul.addr %s464, 4
          %s466 = scalar_lea.vmem %s11, %s465
          %s467 = smul.u32 16, %s35
        $region52: #{tomer_layer.5} parent=11 // pred_fallthru
          _
        // Predicated region
        $region53: #{tomer_layer.5} parent=11 // pred_check
          %p468 = pneg %p354
        $region54: #{tomer_layer.5} parent=11 // pred_check_branch
          %470 = sbr.rel (%p468) target = $region56
        $region55: #{tomer_layer.5} parent=11 // pred_region
          _
        $region56: #{tomer_layer.5} parent=11 // pred_fallthru
          _
        // Predicated region
        $region57: #{tomer_layer.5} parent=11 // pred_check
          %p471 = pneg %p375
        $region58: #{tomer_layer.5} parent=11 // pred_check_branch
          %473 = sbr.rel (%p471) target = $region60
        $region59: #{tomer_layer.5} parent=11 // pred_region
          _
        $region60: #{tomer_layer.5} parent=11 // pred_fallthru
          _
      $region12: #{tomer_layer.5} parent=5 // pred_fallthru
        _
      %p474 = scmp.lt.s32.totalorder %s23, 2
      // Predicated region
      $region61: #{tomer_layer.5} parent=5 // pred_check
        %p475 = pneg %p474
      $region62: #{tomer_layer.5} parent=5 // pred_check_branch
        %477 = sbr.rel (%p475) target = $region64
      $region63: #{tomer_layer.5} parent=5 // pred_region
        // Predicated region
        $region65: #{tomer_layer.5} parent=63 // pred_check
          %p478 = pneg %p64
        $region66: #{tomer_layer.5} parent=63 // pred_check_branch
          %480 = sbr.rel (%p478) target = $region68
        $region67: #{tomer_layer.5} parent=63 // pred_region
          %p481 = scmp.lt.s32.totalorder %s30, 1
          %s482 = scalar_select %p481, %s30, 1
          %p483 = scmp.lt.s32.totalorder %s31, 0
          %s484 = scalar_select %p483, %s31, 0
          %s485 = sadd.s32 %s484, %s482
          %s486 = smul.addr %s485, 8
          %s487 = scalar_lea.vmem %s0, %s486
        $region68: #{tomer_layer.5} parent=63 // pred_fallthru
          _
        // Predicated region
        $region69: #{tomer_layer.5} parent=63 // pred_check
          %p488 = pneg %p92
        $region70: #{tomer_layer.5} parent=63 // pred_check_branch
          %490 = sbr.rel (%p488) target = $region72
        $region71: #{tomer_layer.5} parent=63 // pred_region
          %p491 = scmp.lt.s32.totalorder %s30, 1
          %s492 = scalar_select %p491, %s30, 1
          %p493 = scmp.lt.s32.totalorder %s31, 0
          %s494 = scalar_select %p493, %s31, 0
          %s495 = smul.addr %s492, 4
          %s496 = sadd.s32 %s494, %s495
          %s497 = smul.addr %s496, 4
          %s498 = scalar_lea.vmem %s1, %s497
        $region72: #{tomer_layer.5} parent=63 // pred_fallthru
          _
      $region64: #{tomer_layer.5} parent=5 // pred_fallthru
        _
      %p499 = scmp.le.s32.totalorder 1, %s23
      %p500 = scmp.lt.s32.totalorder %s23, 3
      %p501 = pnand %p499, %p500
      %p502 = pneg %p501
      // Predicated region
      $region73: #{tomer_layer.5} parent=5 // pred_check
        _
      $region74: #{tomer_layer.5} parent=5 // pred_check_branch
        %504 = sbr.rel (%p501) target = $region76
      $region75: #{tomer_layer.5} parent=5 // pred_region
        %s505 = ssub.s32 %s23, 1
        %p506 = scmp.lt.s32.totalorder %s33, 1
        %s507 = scalar_select %p506, %s33, 1
        %p508 = scmp.lt.s32.totalorder %s34, 0
        %s509 = scalar_select %p508, %s34, 0
        %s510 = sadd.s32 %s509, %s507
        %s511 = smul.addr %s510, 8
        %s512 = scalar_lea.vmem %s0, %s511
        %p513 = pneg %p70
        %p514 = pneg %p67
        %p515 = scmp.lt.s32.totalorder %s33, 1
        %s516 = scalar_select %p515, %s33, 1
        %p517 = scmp.lt.s32.totalorder %s34, 0
        %s518 = scalar_select %p517, %s34, 0
        %s519 = smul.addr %s516, 4
        %s520 = sadd.s32 %s518, %s519
        %s521 = smul.addr %s520, 4
        %s522 = scalar_lea.vmem %s1, %s521
        %p523 = pneg %p98
        %p524 = pneg %p95
        %p525 = pneg %p119
        %p526 = pneg %p116
        %p527 = pneg %p140
        %p528 = pneg %p137
        %p529 = pneg %p161
        %p530 = pneg %p158
        %p531 = pneg %p182
        %p532 = pneg %p179
        %p533 = pneg %p203
        %p534 = pneg %p200
        %p535 = scmp.lt.s32.totalorder %s35, 0
        %s536 = scalar_select %p535, %s35, 0
        %s537 = smul.addr %s536, 4
        %s538 = scalar_lea.vmem %s7, %s537
        %p539 = pneg %p229
        %p540 = pneg %p226
        %p541 = scmp.lt.s32.totalorder %s35, 0
        %s542 = scalar_select %p541, %s35, 0
        %s543 = scalar_lea.vmem %s8, %s542
        %p544 = pneg %p255
        %p545 = pneg %p252
        %p546 = scmp.lt.s32.totalorder %s35, 0
        %s547 = scalar_select %p546, %s35, 0
        %s548 = smul.addr %s547, 4
        %s549 = scalar_lea.vmem %s9, %s548
        %p550 = pneg %p281
        %p551 = pneg %p278
        %p552 = scmp.lt.s32.totalorder %s35, 0
        %s553 = scalar_select %p552, %s35, 0
        %s554 = scalar_lea.vmem %s10, %s553
        %p555 = pneg %p307
        %p556 = pneg %p304
        %s557 = smul.u32 16, %s35
        %p558 = scmp.lt.s32.totalorder %s557, 15
        %s559 = scalar_select %p558, %s557, 15
        %s560 = smul.addr %s559, 4
        %s561 = scalar_lea.vmem %s11, %s560
        %p562 = pneg %p333
        %p563 = pneg %p330
        %p564 = pneg %p354
        %p565 = pneg %p351
        %p566 = pneg %p375
        %p567 = pneg %p372
        %p568 = pneg %p403
        %p569 = pneg %p400
        %s570 = sand.u32 %s390, 1
        %s571 = scalar_lea.sflag [#allocation6], %s570
        %s572 = sand.u32 %s390, 1
        %s573 = smul.addr %s572, 8
        %s574 = scalar_lea.vmem [#allocation5], %s573
        %p575 = scmp.lt.s32.totalorder %s33, 1
        %s576 = scalar_select %p575, %s33, 1
        %p577 = scmp.lt.s32.totalorder %s34, 0
        %s578 = scalar_select %p577, %s34, 0
        %s579 = sadd.s32 %s578, %s576
        %s580 = smul.addr %s579, 8
        %s581 = scalar_lea.vmem %s0, %s580
        %p582 = scmp.lt.s32.totalorder %s33, 1
        %s583 = scalar_select %p582, %s33, 1
        %p584 = scmp.lt.s32.totalorder %s34, 0
        %s585 = scalar_select %p584, %s34, 0
        %s586 = smul.addr %s583, 4
        %s587 = sadd.s32 %s585, %s586
        %s588 = smul.addr %s587, 4
        %s589 = scalar_lea.vmem %s1, %s588
        %p590 = scmp.lt.s32.totalorder %s35, 0
        %s591 = scalar_select %p590, %s35, 0
        %s592 = smul.addr %s591, 4
        %s593 = scalar_lea.vmem %s7, %s592
        %p594 = scmp.lt.s32.totalorder %s35, 0
        %s595 = scalar_select %p594, %s35, 0
        %s596 = scalar_lea.vmem %s8, %s595
        %p597 = scmp.lt.s32.totalorder %s35, 0
        %s598 = scalar_select %p597, %s35, 0
        %s599 = smul.addr %s598, 4
        %s600 = scalar_lea.vmem %s9, %s599
        %p601 = scmp.lt.s32.totalorder %s35, 0
        %s602 = scalar_select %p601, %s35, 0
        %s603 = scalar_lea.vmem %s10, %s602
        %s604 = smul.u32 16, %s35
        %p605 = scmp.lt.s32.totalorder %s604, 15
        %s606 = scalar_select %p605, %s604, 15
        %s607 = smul.addr %s606, 4
        %s608 = scalar_lea.vmem %s11, %s607
        %s609 = smul.u32 16, %s35
        %p611 = scmp.eq.s32.totalorder %s35, 0
        // Predicated region
        $region77: #{tomer_layer.5} parent=75 // pred_check
          %p612 = pneg %p611
        $region78: #{tomer_layer.5} parent=75 // pred_check_branch
          %614 = sbr.rel (%p612) target = $region80
        $region79: #{tomer_layer.5} parent=75 // pred_region
          %v615 = vld [vmem:[%s581] sm:$0xff]
          %v616 = vld [vmem:[%s589] sm:$0xf]
          %v617 = vld [vmem:[%s2] sm:$0xf]
          %s618 = scalar_lea.vmem %s589, 4
          %v619 = vld [vmem:[%s618] sm:$0xf]
          %s620 = scalar_lea.vmem %s2, 4
          %v621 = vld [vmem:[%s620] sm:$0xf]
          %vm622 = vcmask 64512
          %v624 = vsel %vm622, %v619, 0
          %vm626 = vcmask 1043456
          %v628 = vsel %vm626, %v621, 0
          %630 = vmatprep.subr.bf16.mxu0 0
          %631 = vmatpush1.bf16.msra.mxu0 %v628
          %632 = vmatprep.subr.bf16.mxu0 0
          %633 = vmatpush1.bf16.msra.mxu0 0
          %634 = vmatprep.subr.bf16.mxu0 0
          %635 = vmatpush1.bf16.msra.mxu0 0
          %636 = vmatprep.subr.bf16.mxu0 0
          %637 = vmatpush1.bf16.msra.mxu0 0
          %638 = vmatprep.subr.bf16.mxu0 0
          %639 = vmatpush1.bf16.msra.mxu0 0
          %640 = vmatprep.subr.bf16.mxu0 0
          %641 = vmatpush1.bf16.msra.mxu0 0
          %642 = vmatprep.subr.bf16.mxu0 0
          %643 = vmatpush1.bf16.msra.mxu0 0
          %644 = vmatprep.subr.bf16.mxu0 0
          %645 = vmatpush1.bf16.msra.mxu0 0
          %646 = vmatprep.subr.bf16.mxu0 0
          %647 = vmatpush1.bf16.msra.mxu0 0
          %648 = vmatprep.subr.bf16.mxu0 0
          %649 = vmatpush1.bf16.msra.mxu0 0
          %650 = vmatprep.subr.bf16.mxu0 0
          %651 = vmatpush1.bf16.msra.mxu0 0
          %652 = vmatprep.subr.bf16.mxu0 0
          %653 = vmatpush1.bf16.msra.mxu0 0
          %654 = vmatprep.subr.bf16.mxu0 0
          %655 = vmatpush1.bf16.msra.mxu0 0
          %656 = vmatprep.subr.bf16.mxu0 0
          %657 = vmatpush1.bf16.msra.mxu0 0
          %658 = vmatprep.subr.bf16.mxu0 0
          %659 = vmatpush1.bf16.msra.mxu0 0
          %660 = vmatprep.subr.bf16.mxu0 0
          %661 = vmatpush1.bf16.msra.mxu0 0
          %662 = vmatprep.mubr.bf16.mxu0 0
          %663 = vmatmul.mubr.bf16.gmra.mrb[0].mxu0 %v624
          %v664 = vpop.f32.mrb[0].mxu0
          %v665 = vadd.f32 0.0, %v664
          %v666 = vpop.f32.mrb[0].mxu0
          %v667 = vpop.f32.mrb[0].mxu0
          %v668 = vpop.f32.mrb[0].mxu0
          %669 = vdwg.mxu0
          %v671 = vsel %vm622, %v616, 0
          %v674 = vsel %vm626, %v617, 0
          %676 = vmatprep.subr.bf16.mxu0 0
          %677 = vmatpush1.bf16.msra.mxu0 %v674
          %678 = vmatprep.subr.bf16.mxu0 0
          %679 = vmatpush1.bf16.msra.mxu0 0
          %680 = vmatprep.subr.bf16.mxu0 0
          %681 = vmatpush1.bf16.msra.mxu0 0
          %682 = vmatprep.subr.bf16.mxu0 0
          %683 = vmatpush1.bf16.msra.mxu0 0
          %684 = vmatprep.subr.bf16.mxu0 0
          %685 = vmatpush1.bf16.msra.mxu0 0
          %686 = vmatprep.subr.bf16.mxu0 0
          %687 = vmatpush1.bf16.msra.mxu0 0
          %688 = vmatprep.subr.bf16.mxu0 0
          %689 = vmatpush1.bf16.msra.mxu0 0
          %690 = vmatprep.subr.bf16.mxu0 0
          %691 = vmatpush1.bf16.msra.mxu0 0
          %692 = vmatprep.subr.bf16.mxu0 0
          %693 = vmatpush1.bf16.msra.mxu0 0
          %694 = vmatprep.subr.bf16.mxu0 0
          %695 = vmatpush1.bf16.msra.mxu0 0
          %696 = vmatprep.subr.bf16.mxu0 0
          %697 = vmatpush1.bf16.msra.mxu0 0
          %698 = vmatprep.subr.bf16.mxu0 0
          %699 = vmatpush1.bf16.msra.mxu0 0
          %700 = vmatprep.subr.bf16.mxu0 0
          %701 = vmatpush1.bf16.msra.mxu0 0
          %702 = vmatprep.subr.bf16.mxu0 0
          %703 = vmatpush1.bf16.msra.mxu0 0
          %704 = vmatprep.subr.bf16.mxu0 0
          %705 = vmatpush1.bf16.msra.mxu0 0
          %706 = vmatprep.subr.bf16.mxu0 0
          %707 = vmatpush1.bf16.msra.mxu0 0
          %708 = vmatprep.mubr.bf16.mxu0 0
          %709 = vmatmul.mubr.bf16.gmra.mrb[0].mxu0 %v671
          %v710 = vpop.f32.mrb[0].mxu0
          %v711 = vadd.f32 %v665, %v710
          %v712 = vpop.f32.mrb[0].mxu0
          %v713 = vpop.f32.mrb[0].mxu0
          %v714 = vpop.f32.mrb[0].mxu0
          %715 = vdwg.mxu0
          %s716 = scalar_lea.vmem %s589, 8
          %v717 = vld [vmem:[%s716] sm:$0xf]
          %s718 = scalar_lea.vmem %s2, 8
          %v719 = vld [vmem:[%s718] sm:$0xf]
          %v721 = vsel %vm622, %v717, 0
          %v724 = vsel %vm626, %v719, 0
          %726 = vmatprep.subr.bf16.mxu0 0
          %727 = vmatpush1.bf16.msra.mxu0 %v724
          %728 = vmatprep.subr.bf16.mxu0 0
          %729 = vmatpush1.bf16.msra.mxu0 0
          %730 = vmatprep.subr.bf16.mxu0 0
          %731 = vmatpush1.bf16.msra.mxu0 0
          %732 = vmatprep.subr.bf16.mxu0 0
          %733 = vmatpush1.bf16.msra.mxu0 0
          %734 = vmatprep.subr.bf16.mxu0 0
          %735 = vmatpush1.bf16.msra.mxu0 0
          %736 = vmatprep.subr.bf16.mxu0 0
          %737 = vmatpush1.bf16.msra.mxu0 0
          %738 = vmatprep.subr.bf16.mxu0 0
          %739 = vmatpush1.bf16.msra.mxu0 0
          %740 = vmatprep.subr.bf16.mxu0 0
          %741 = vmatpush1.bf16.msra.mxu0 0
          %742 = vmatprep.subr.bf16.mxu0 0
          %743 = vmatpush1.bf16.msra.mxu0 0
          %744 = vmatprep.subr.bf16.mxu0 0
          %745 = vmatpush1.bf16.msra.mxu0 0
          %746 = vmatprep.subr.bf16.mxu0 0
          %747 = vmatpush1.bf16.msra.mxu0 0
          %748 = vmatprep.subr.bf16.mxu0 0
          %749 = vmatpush1.bf16.msra.mxu0 0
          %750 = vmatprep.subr.bf16.mxu0 0
          %751 = vmatpush1.bf16.msra.mxu0 0
          %752 = vmatprep.subr.bf16.mxu0 0
          %753 = vmatpush1.bf16.msra.mxu0 0
          %754 = vmatprep.subr.bf16.mxu0 0
          %755 = vmatpush1.bf16.msra.mxu0 0
          %756 = vmatprep.subr.bf16.mxu0 0
          %757 = vmatpush1.bf16.msra.mxu0 0
          %758 = vmatprep.mubr.bf16.mxu0 0
          %759 = vmatmul.mubr.bf16.gmra.mrb[0].mxu0 %v721
          %v760 = vpop.f32.mrb[0].mxu0
          %v761 = vadd.f32 0.0, %v760
          %v762 = vpop.f32.mrb[0].mxu0
          %v763 = vpop.f32.mrb[0].mxu0
          %v764 = vpop.f32.mrb[0].mxu0
          %765 = vdwg.mxu0
          %v766 = vadd.f32 %v711, %v761
          %s767 = scalar_lea.vmem %s589, 12
          %v768 = vld [vmem:[%s767] sm:$0xf]
          %s769 = scalar_lea.vmem %s2, 12
          %v770 = vld [vmem:[%s769] sm:$0xf]
          %v772 = vsel %vm622, %v768, 0
          %v775 = vsel %vm626, %v770, 0
          %777 = vmatprep.subr.bf16.mxu0 0
          %778 = vmatpush1.bf16.msra.mxu0 %v775
          %779 = vmatprep.subr.bf16.mxu0 0
          %780 = vmatpush1.bf16.msra.mxu0 0
          %781 = vmatprep.subr.bf16.mxu0 0
          %782 = vmatpush1.bf16.msra.mxu0 0
          %783 = vmatprep.subr.bf16.mxu0 0
          %784 = vmatpush1.bf16.msra.mxu0 0
          %785 = vmatprep.subr.bf16.mxu0 0
          %786 = vmatpush1.bf16.msra.mxu0 0
          %787 = vmatprep.subr.bf16.mxu0 0
          %788 = vmatpush1.bf16.msra.mxu0 0
          %789 = vmatprep.subr.bf16.mxu0 0
          %790 = vmatpush1.bf16.msra.mxu0 0
          %791 = vmatprep.subr.bf16.mxu0 0
          %792 = vmatpush1.bf16.msra.mxu0 0
          %793 = vmatprep.subr.bf16.mxu0 0
          %794 = vmatpush1.bf16.msra.mxu0 0
          %795 = vmatprep.subr.bf16.mxu0 0
          %796 = vmatpush1.bf16.msra.mxu0 0
          %797 = vmatprep.subr.bf16.mxu0 0
          %798 = vmatpush1.bf16.msra.mxu0 0
          %799 = vmatprep.subr.bf16.mxu0 0
          %800 = vmatpush1.bf16.msra.mxu0 0
          %801 = vmatprep.subr.bf16.mxu0 0
          %802 = vmatpush1.bf16.msra.mxu0 0
          %803 = vmatprep.subr.bf16.mxu0 0
          %804 = vmatpush1.bf16.msra.mxu0 0
          %805 = vmatprep.subr.bf16.mxu0 0
          %806 = vmatpush1.bf16.msra.mxu0 0
          %807 = vmatprep.subr.bf16.mxu0 0
          %808 = vmatpush1.bf16.msra.mxu0 0
          %809 = vmatprep.mubr.bf16.mxu0 0
          %810 = vmatmul.mubr.bf16.gmra.mrb[0].mxu0 %v772
          %v811 = vpop.f32.mrb[0].mxu0
          %v812 = vadd.f32 0.0, %v811
          %v813 = vpop.f32.mrb[0].mxu0
          %v814 = vpop.f32.mrb[0].mxu0
          %v815 = vpop.f32.mrb[0].mxu0
          %816 = vdwg.mxu0
          %v817 = vadd.f32 %v766, %v812
          %v818 = vld [vmem:[%s3] sm:$0x1]
          %v820 = vlaneseq
          %v821 = vshrl.u32 %v820, 7
          %v822 = vsub.s32 0, %v821
          %v823 = vrot.slane %v818, %v822
          %v825 = vadd.f32 %v817, %v823
          %v826 = vld [vmem:[%s4] sm:$0x1]
          %v828 = vlaneseq
          %v829 = vshrl.u32 %v828, 7
          %v830 = vsub.s32 0, %v829
          %v831 = vrot.slane %v826, %v830
          %v833 = vmul.f32 %v831, %v825
          %v834 = vadd.f32 %v615, %v833
          %vm835 = vcmask 261120
          %836 = vst.msk [vmem:[#allocation2] sm:$0xff] %vm835, %v834
          %v837 = vld [vmem:[%s5] sm:$0x1]
          %v838 = vld [vmem:[%s6] sm:$0x1]
          %v839 = vsel %vm835, %v834, 0.0
          %840 = vadd.xlane.f32.xlu0 %v839
          %v841 = vpop.xlane.xlu0 %840
          %v842 = vrcp.pop 32.0
          %v843 = vmul.f32 %v841, %v842
          %v844 = vsub.f32 %v834, %v843
          %v845 = vmul.f32 %v844, %v844
          %v846 = vsel %vm835, %v845, 0.0
          %847 = vadd.xlane.f32.xlu0 %v846
          %v848 = vpop.xlane.xlu0 %847
          %v849 = vmul.f32 %v848, %v842
          %v850 = vadd.f32 %v849, 1e-05
          %v851 = vrsqrt.pop %v850
          %v852 = vmul.f32 %v844, %v851
          %v854 = vlaneseq
          %v855 = vshrl.u32 %v854, 7
          %v856 = vsub.s32 0, %v855
          %v857 = vrot.slane %v837, %v856
          %v859 = vmul.f32 %v852, %v857
          %v861 = vlaneseq
          %v862 = vshrl.u32 %v861, 7
          %v863 = vsub.s32 0, %v862
          %v864 = vrot.slane %v838, %v863
          %v866 = vadd.f32 %v859, %v864
          %v867 = vpack.c.bf16 %v866, %v866
          %vm868 = vcmask 257024
          %869 = vst.msk [vmem:[#allocation3] sm:$0xf] %vm868, %v867
          %870 = vst.msk [vmem:[#allocation4] sm:$0xff] %vm835, 0.0
        $region80: #{tomer_layer.5} parent=75 // pred_fallthru
          _
        %v871 = vld [vmem:[#allocation3] sm:$0xf]
        %v872 = vld [vmem:[%s593] sm:$0xf]
        %v873 = vld [vmem:[%s593 + $0x4] sm:$0xf]
        %v874 = vld [vmem:[%s593 + $0x8] sm:$0xf]
        %v875 = vld [vmem:[%s593 + $0xc] sm:$0xf]
        %v876 = vld [vmem:[%s596] sm:$0x1]
        %v878 = vlaneseq
        %v879 = vshrl.u32 %v878, 7
        %v880 = vsub.s32 0, %v879
        %v881 = vrot.slane %v876, %v880
        %v887 = vunpack.c.l.b16 %v872
        %v888 = vunpack.c.l.b16 %v873
        %v889 = vunpack.c.l.b16 %v874
        %v890 = vunpack.c.l.b16 %v875
        %v891 = vpack.c.b16 %v888, %v887
        %v892 = vpack.c.b16 %v890, %v889
        %vm895 = vcmask 261120
        %v897 = vsel %vm895, %v871, 0
        %899 = vmatprep.subr.bf16.mxu0 0
        %900 = vmatpush1.bf16.msra.mxu0 %v891
        %901 = vmatprep.subr.bf16.mxu0 0
        %902 = vmatpush1.bf16.msra.mxu0 %v892
        %903 = vmatprep.subr.bf16.mxu0 0
        %904 = vmatpush1.bf16.msra.mxu0 0
        %905 = vmatprep.subr.bf16.mxu0 0
        %906 = vmatpush1.bf16.msra.mxu0 0
        %907 = vmatprep.subr.bf16.mxu0 0
        %908 = vmatpush1.bf16.msra.mxu0 0
        %909 = vmatprep.subr.bf16.mxu0 0
        %910 = vmatpush1.bf16.msra.mxu0 0
        %911 = vmatprep.subr.bf16.mxu0 0
        %912 = vmatpush1.bf16.msra.mxu0 0
        %913 = vmatprep.subr.bf16.mxu0 0
        %914 = vmatpush1.bf16.msra.mxu0 0
        %915 = vmatprep.subr.bf16.mxu0 0
        %916 = vmatpush1.bf16.msra.mxu0 0
        %917 = vmatprep.subr.bf16.mxu0 0
        %918 = vmatpush1.bf16.msra.mxu0 0
        %919 = vmatprep.subr.bf16.mxu0 0
        %920 = vmatpush1.bf16.msra.mxu0 0
        %921 = vmatprep.subr.bf16.mxu0 0
        %922 = vmatpush1.bf16.msra.mxu0 0
        %923 = vmatprep.subr.bf16.mxu0 0
        %924 = vmatpush1.bf16.msra.mxu0 0
        %925 = vmatprep.subr.bf16.mxu0 0
        %926 = vmatpush1.bf16.msra.mxu0 0
        %927 = vmatprep.subr.bf16.mxu0 0
        %928 = vmatpush1.bf16.msra.mxu0 0
        %929 = vmatprep.subr.bf16.mxu0 0
        %930 = vmatpush1.bf16.msra.mxu0 0
        %931 = vmatprep.mubr.bf16.mxu0 0
        %932 = vmatmul.mubr.bf16.gmra.mrb[0].mxu0 %v897
        %v933 = vpop.f32.mrb[0].mxu0
        %v934 = vadd.f32 %v881, %v933
        %v935 = vpop.f32.mrb[0].mxu0
        %v936 = vpop.f32.mrb[0].mxu0
        %v937 = vpop.f32.mrb[0].mxu0
        %938 = vdwg.mxu0
        %v939 = vld [vmem:[%s600] sm:$0xf]
        %v940 = vld [vmem:[%s600 + $0x4] sm:$0xf]
        %v941 = vld [vmem:[%s600 + $0x8] sm:$0xf]
        %v942 = vld [vmem:[%s600 + $0xc] sm:$0xf]
        %v943 = vld [vmem:[%s603] sm:$0x1]
        %v945 = vlaneseq
        %v946 = vshrl.u32 %v945, 7
        %v947 = vsub.s32 0, %v946
        %v948 = vrot.slane %v943, %v947
        %v954 = vunpack.c.l.b16 %v939
        %v955 = vunpack.c.l.b16 %v940
        %v956 = vunpack.c.l.b16 %v941
        %v957 = vunpack.c.l.b16 %v942
        %v958 = vpack.c.b16 %v955, %v954
        %v959 = vpack.c.b16 %v957, %v956
        %962 = vmatprep.subr.bf16.mxu0 0
        %963 = vmatpush1.bf16.msra.mxu0 %v958
        %964 = vmatprep.subr.bf16.mxu0 0
        %965 = vmatpush1.bf16.msra.mxu0 %v959
        %966 = vmatprep.subr.bf16.mxu0 0
        %967 = vmatpush1.bf16.msra.mxu0 0
        %968 = vmatprep.subr.bf16.mxu0 0
        %969 = vmatpush1.bf16.msra.mxu0 0
        %970 = vmatprep.subr.bf16.mxu0 0
        %971 = vmatpush1.bf16.msra.mxu0 0
        %972 = vmatprep.subr.bf16.mxu0 0
        %973 = vmatpush1.bf16.msra.mxu0 0
        %974 = vmatprep.subr.bf16.mxu0 0
        %975 = vmatpush1.bf16.msra.mxu0 0
        %976 = vmatprep.subr.bf16.mxu0 0
        %977 = vmatpush1.bf16.msra.mxu0 0
        %978 = vmatprep.subr.bf16.mxu0 0
        %979 = vmatpush1.bf16.msra.mxu0 0
        %980 = vmatprep.subr.bf16.mxu0 0
        %981 = vmatpush1.bf16.msra.mxu0 0
        %982 = vmatprep.subr.bf16.mxu0 0
        %983 = vmatpush1.bf16.msra.mxu0 0
        %984 = vmatprep.subr.bf16.mxu0 0
        %985 = vmatpush1.bf16.msra.mxu0 0
        %986 = vmatprep.subr.bf16.mxu0 0
        %987 = vmatpush1.bf16.msra.mxu0 0
        %988 = vmatprep.subr.bf16.mxu0 0
        %989 = vmatpush1.bf16.msra.mxu0 0
        %990 = vmatprep.subr.bf16.mxu0 0
        %991 = vmatpush1.bf16.msra.mxu0 0
        %992 = vmatprep.subr.bf16.mxu0 0
        %993 = vmatpush1.bf16.msra.mxu0 0
        %994 = vmatprep.mubr.bf16.mxu0 0
        %995 = vmatmul.mubr.bf16.gmra.mrb[0].mxu0 %v897
        %v996 = vpop.f32.mrb[0].mxu0
        %v997 = vadd.f32 %v948, %v996
        %v998 = vpop.f32.mrb[0].mxu0
        %v999 = vpop.f32.mrb[0].mxu0
        %v1000 = vpop.f32.mrb[0].mxu0
        %1001 = vdwg.mxu0
        %v1002 = vxor.u32 %v934, 2147483648
        %v1003 = vmul.f32 %v1002, 1.442695
        %v1004 = vpow.pop %v1003
        %v1005 = vadd.f32 %v1004, 1.0
        %v1006 = vrcp.pop %v1005
        %v1007 = vmul.f32 1.0, %v1006
        %v1008 = vmul.f32 %v934, %v1007
        %v1009 = vmul.f32 %v1008, %v997
        %v1010 = vpack.c.bf16 %v1009, %v1009
        %v1011 = vld [vmem:[#allocation4] sm:$0xff]
        %v1012 = vld [vmem:[%s608] sm:$0xf]
        %v1013 = vld [vmem:[%s608 + $0x4] sm:$0xf]
        %v1014 = vld [vmem:[%s608 + $0x8] sm:$0xf]
        %v1015 = vld [vmem:[%s608 + $0xc] sm:$0xf]
        %v1016 = vld [vmem:[%s608 + $0x10] sm:$0xf]
        %v1017 = vld [vmem:[%s608 + $0x14] sm:$0xf]
        %v1018 = vld [vmem:[%s608 + $0x18] sm:$0xf]
        %v1019 = vld [vmem:[%s608 + $0x1c] sm:$0xf]
        %v1020 = vld [vmem:[%s608 + $0x20] sm:$0xf]
        %v1021 = vld [vmem:[%s608 + $0x24] sm:$0xf]
        %v1022 = vld [vmem:[%s608 + $0x28] sm:$0xf]
        %v1023 = vld [vmem:[%s608 + $0x2c] sm:$0xf]
        %v1024 = vld [vmem:[%s608 + $0x30] sm:$0xf]
        %v1025 = vld [vmem:[%s608 + $0x34] sm:$0xf]
        %v1026 = vld [vmem:[%s608 + $0x38] sm:$0xf]
        %v1027 = vld [vmem:[%s608 + $0x3c] sm:$0xf]
        %v1044 = vunpack.c.l.b16 %v1012
        %v1045 = vunpack.c.l.b16 %v1013
        %v1046 = vunpack.c.l.b16 %v1014
        %v1047 = vunpack.c.l.b16 %v1015
        %v1048 = vunpack.c.l.b16 %v1016
        %v1049 = vunpack.c.l.b16 %v1017
        %v1050 = vunpack.c.l.b16 %v1018
        %v1051 = vunpack.c.l.b16 %v1019
        %v1052 = vunpack.c.l.b16 %v1020
        %v1053 = vunpack.c.l.b16 %v1021
        %v1054 = vunpack.c.l.b16 %v1022
        %v1055 = vunpack.c.l.b16 %v1023
        %v1056 = vunpack.c.l.b16 %v1024
        %v1057 = vunpack.c.l.b16 %v1025
        %v1058 = vunpack.c.l.b16 %v1026
        %v1059 = vunpack.c.l.b16 %v1027
        %v1060 = vpack.c.b16 %v1045, %v1044
        %v1061 = vpack.c.b16 %v1047, %v1046
        %v1062 = vpack.c.b16 %v1049, %v1048
        %v1063 = vpack.c.b16 %v1051, %v1050
        %v1064 = vpack.c.b16 %v1053, %v1052
        %v1065 = vpack.c.b16 %v1055, %v1054
        %v1066 = vpack.c.b16 %v1057, %v1056
        %v1067 = vpack.c.b16 %v1059, %v1058
        %1076 = vmatprep.subr.bf16.mxu0 0
        %1077 = vmatpush1.bf16.msra.mxu0 %v1060
        %1078 = vmatprep.subr.bf16.mxu0 0
        %1079 = vmatpush1.bf16.msra.mxu0 %v1061
        %1080 = vmatprep.subr.bf16.mxu0 0
        %1081 = vmatpush1.bf16.msra.mxu0 %v1062
        %1082 = vmatprep.subr.bf16.mxu0 0
        %1083 = vmatpush1.bf16.msra.mxu0 %v1063
        %1084 = vmatprep.subr.bf16.mxu0 0
        %1085 = vmatpush1.bf16.msra.mxu0 %v1064
        %1086 = vmatprep.subr.bf16.mxu0 0
        %1087 = vmatpush1.bf16.msra.mxu0 %v1065
        %1088 = vmatprep.subr.bf16.mxu0 0
        %1089 = vmatpush1.bf16.msra.mxu0 %v1066
        %1090 = vmatprep.subr.bf16.mxu0 0
        %1091 = vmatpush1.bf16.msra.mxu0 %v1067
        %1092 = vmatprep.subr.bf16.mxu0 0
        %1093 = vmatpush1.bf16.msra.mxu0 0
        %1094 = vmatprep.subr.bf16.mxu0 0
        %1095 = vmatpush1.bf16.msra.mxu0 0
        %1096 = vmatprep.subr.bf16.mxu0 0
        %1097 = vmatpush1.bf16.msra.mxu0 0
        %1098 = vmatprep.subr.bf16.mxu0 0
        %1099 = vmatpush1.bf16.msra.mxu0 0
        %1100 = vmatprep.subr.bf16.mxu0 0
        %1101 = vmatpush1.bf16.msra.mxu0 0
        %1102 = vmatprep.subr.bf16.mxu0 0
        %1103 = vmatpush1.bf16.msra.mxu0 0
        %1104 = vmatprep.subr.bf16.mxu0 0
        %1105 = vmatpush1.bf16.msra.mxu0 0
        %1106 = vmatprep.subr.bf16.mxu0 0
        %1107 = vmatpush1.bf16.msra.mxu0 0
        %1108 = vmatprep.mubr.bf16.mxu0 0
        %1109 = vmatmul.mubr.bf16.gmra.mrb[0].mxu0 %v1010
        %v1110 = vpop.f32.mrb[0].mxu0
        %v1111 = vadd.f32 0.0, %v1110
        %v1112 = vpop.f32.mrb[0].mxu0
        %v1113 = vpop.f32.mrb[0].mxu0
        %v1114 = vpop.f32.mrb[0].mxu0
        %1115 = vdwg.mxu0
        %v1116 = vadd.f32 %v1011, %v1111
        %1117 = vst.msk [vmem:[#allocation4] sm:$0xff] %vm895, %v1116
        // Predicated region
        $region81: #{tomer_layer.5} parent=75 // pred_check
          %p1118 = pneg %p611
        $region82: #{tomer_layer.5} parent=75 // pred_check_branch
          %1120 = sbr.rel (%p1118) target = $region84
        $region83: #{tomer_layer.5} parent=75 // pred_region
          %v1121 = vld [vmem:[#allocation4] sm:$0xff]
          %v1122 = vld [vmem:[%s12] sm:$0x1]
          %v1124 = vlaneseq
          %v1125 = vshrl.u32 %v1124, 7
          %v1126 = vsub.s32 0, %v1125
          %v1127 = vrot.slane %v1122, %v1126
          %v1129 = vadd.f32 %v1121, %v1127
          %v1130 = vld [vmem:[#allocation2] sm:$0xff]
          %v1131 = vld [vmem:[%s13] sm:$0x1]
          %v1133 = vlaneseq
          %v1134 = vshrl.u32 %v1133, 7
          %v1135 = vsub.s32 0, %v1134
          %v1136 = vrot.slane %v1131, %v1135
          %v1138 = vmul.f32 %v1136, %v1129
          %v1139 = vadd.f32 %v1130, %v1138
          %1140 = vst.msk [vmem:[%s574] sm:$0xff] %vm895, %v1139
        $region84: #{tomer_layer.5} parent=75 // pred_fallthru
          _
        %s1141 = sand.u32 %s390, 1
        %s1142 = scalar_lea.sflag [#allocation6], %s1141
        %s1143 = sand.u32 %s390, 1
        %s1144 = smul.addr %s1143, 8
        %s1145 = scalar_lea.vmem [#allocation5], %s1144
        // Predicated region
        $region85: #{tomer_layer.5} parent=75 // pred_check
          %p1146 = pneg %p400
        $region86: #{tomer_layer.5} parent=75 // pred_check_branch
          %1148 = sbr.rel (%p1146) target = $region88
        $region87: #{tomer_layer.5} parent=75 // pred_region
          %s1150 = ssub.s32 128, 128
          %1151 = vsyncadd %s1142, %s1150
          %s1152 = sadd.s32 %s34, %s33
          %s1153 = smul.addr %s1152, 128
          %s1154 = scalar_lea.hbm %s14, %s1153
          %s1156 = sshll.u32 %s1145, 4
          %s1157 = int_to_ptr.vmem [resolvable:$true] %s1156
          %1159 = dma.vmem_to_hbm [thread:$0]  %s1157, 128, %s1154, %s1142
        $region88: #{tomer_layer.5} parent=75 // pred_fallthru
          _
      $region76: #{tomer_layer.5} parent=5 // pred_fallthru
        _
      %p1160 = scmp.le.s32.totalorder 2, %s23
      // Predicated region
      $region89: #{tomer_layer.5} parent=5 // pred_check
        %p1161 = pneg %p1160
      $region90: #{tomer_layer.5} parent=5 // pred_check_branch
        %1163 = sbr.rel (%p1161) target = $region92
      $region91: #{tomer_layer.5} parent=5 // pred_region
        %s1164 = ssub.s32 %s23, 2
        // Predicated region
        $region93: #{tomer_layer.5} parent=91 // pred_check
          %p1165 = pneg %p406
        $region94: #{tomer_layer.5} parent=91 // pred_check_branch
          %1167 = sbr.rel (%p1165) target = $region96
        $region95: #{tomer_layer.5} parent=91 // pred_region
          %s1168 = sand.u32 %s391, 1
          %s1169 = scalar_lea.sflag [#allocation6], %s1168
          %s1170 = sand.u32 %s391, 1
          %s1171 = smul.addr %s1170, 8
          %s1172 = scalar_lea.vmem [#allocation5], %s1171
          %1173 = dma.done %s1169, 128
        $region96: #{tomer_layer.5} parent=91 // pred_fallthru
          _
      $region92: #{tomer_layer.5} parent=5 // pred_fallthru
        _
    $region6: #{tomer_layer.5} parent=1 // loop_footer
      %s27 = sadd.s32 1, %s23
    $region7: #{tomer_layer.5} parent=1 // loop_footer_branch
      %22 = sbr.rel target = $region3
    $region8: #{tomer_layer.5} parent=1 // loop_exit
      _
    %1174 = vsyncpa [#allocation6], 1
    %s1175 = scalar_lea.sflag [#allocation6], 1
    %1176 = vsyncpa %s1175, 1

</llo_original>
